<compile_context>
chip_gen: v7x
topology: tpu7x:2x2x1
jax: 0.10.0
libtpu: 0.0.40
codegen_flags: <defaults>
</compile_context>

<pallas_src>
import jax
import jax.numpy as jnp
from jax.experimental import pallas as pl
from jax.experimental.pallas import tpu as pltpu

# Logical (PyTorch) feature dims.
N_INPUT = 784
N2 = 392
N_BOTTLENECK = 8
N_OUTPUT = 784

# Lane-padded *hidden* dims (multiples of 128). Input (784) and output (784) stay
# unpadded -- their BlockSpecs use the full array dim, so no extra HBM pass is
# needed to pad or slice the activations. Zero padding of the hidden dims keeps
# the real columns bit-exact: padded weight cols/rows and bias cols are 0, so
# padded activation columns are 0 through relu and contribute nothing downstream.
N2_P = 512   # 392 -> 512
NB_P = 128   # 8   -> 128


def _round_up(x, m):
    return (x + m - 1) // m * m


def _choose_tile_b(B, max_tile_b=1024):
    """Batch-tile selection:
       * small batches (<= 256): single block, rounded to 16 rows (bf16 sublane pack),
       * larger batches: tile is a multiple of 256 (MXU M alignment), preferring an
         even block count >= 2 so both v7x TensorCores get work and no tile is pure
         zero-row padding. Capped at max_tile_b (1024 default is safe on v7x's
         64 MiB VMEM; pass 2048 on v5e/v6e's 128 MiB for a bit more amortization)."""
    if B <= 256:
        return _round_up(max(B, 1), 16)
    n = _round_up(B, 256) // 256          # number of 256-row groups
    best = 1
    for g in range(min(n // 2, max(1, max_tile_b // 256)), 0, -1):
        if n % g == 0 and (n // g) % 2 == 0:
            best = g
            break
    return best * 256


def mlp4_kernel(x_ref, w1_ref, b1_ref, w2_ref, b2_ref,
                w3_ref, b3_ref, w4_ref, b4_ref, o_ref):
    # Fully fused 4-layer MLP on one batch tile. Raw f32 activations arrive
    # straight from HBM; the bf16 cast happens here (VPU), so there is no
    # separate pad/convert pass over the activations outside the kernel.
    x = x_ref[...].astype(jnp.bfloat16)                                # (tile_b, 784)

    # fc1 + relu      (K = 784, N = 512)
    h1 = jnp.dot(x, w1_ref[...], preferred_element_type=jnp.float32) + b1_ref[...]
    h1 = jnp.maximum(h1, 0.0)

    # fc2 (bottleneck, linear)   (K = 512, N = 128)
    z = jnp.dot(h1.astype(jnp.bfloat16), w2_ref[...],
                preferred_element_type=jnp.float32) + b2_ref[...]

    # fc3 + relu      (K = 128, N = 512)
    h3 = jnp.dot(z.astype(jnp.bfloat16), w3_ref[...],
                 preferred_element_type=jnp.float32) + b3_ref[...]
    h3 = jnp.maximum(h3, 0.0)

    # fc4 + sigmoid   (K = 512, N = 784). Output width is the real 784, so the
    # store goes straight out (one masked vst on the final partial lane group);
    # no post-kernel 896->784 column slice / extra HBM pass.
    logits = jnp.dot(h3.astype(jnp.bfloat16), w4_ref[...],
                     preferred_element_type=jnp.float32) + b4_ref[...]
    o_ref[...] = jax.nn.sigmoid(logits).astype(o_ref.dtype)


def init_params(key):
    """Deterministic init mimicking torch.nn.Linear (uniform +-1/sqrt(fan_in)).
    Weights stored as (in, out) = torch weight transposed. All float32, unpadded."""
    dims = [(N_INPUT, N2), (N2, N_BOTTLENECK), (N_BOTTLENECK, N2), (N2, N_OUTPUT)]
    params = {}
    keys = jax.random.split(key, 2 * len(dims))
    for idx, (din, dout) in enumerate(dims):
        bound = 1.0 / jnp.sqrt(jnp.float32(din))
        w = jax.random.uniform(keys[2 * idx], (din, dout), jnp.float32, -bound, bound)
        b = jax.random.uniform(keys[2 * idx + 1], (1, dout), jnp.float32, -bound, bound)
        params[f"w{idx + 1}"] = w
        params[f"b{idx + 1}"] = b
    return params


def prepare_params(params):
    """One-time prep: zero-pad the *hidden* dims to lane multiples of 128 and cast
    weights to bf16 (biases stay f32 for the f32-accumulate path). The 784-wide
    input/output dims are left unpadded."""
    def pad_w(w, din_p, dout_p):
        din, dout = w.shape
        return jnp.pad(w, ((0, din_p - din), (0, dout_p - dout))).astype(jnp.bfloat16)

    def pad_b(b, dout_p):
        return jnp.pad(b, ((0, 0), (0, dout_p - b.shape[1]))).astype(jnp.float32)

    return {
        "w1": pad_w(params["w1"], N_INPUT, N2_P),  "b1": pad_b(params["b1"], N2_P),
        "w2": pad_w(params["w2"], N2_P, NB_P),     "b2": pad_b(params["b2"], NB_P),
        "w3": pad_w(params["w3"], NB_P, N2_P),     "b3": pad_b(params["b3"], N2_P),
        "w4": pad_w(params["w4"], N2_P, N_OUTPUT), "b4": pad_b(params["b4"], N_OUTPUT),
    }


def autoencoder_mlp4_forward(x, padded_params, *, max_tile_b=1024,
                             vmem_limit_bytes=48 * 1024 * 1024):
    """x: (B, 784) float32. padded_params: output of prepare_params(). Returns (B, 784)."""
    B, d_in = x.shape
    assert d_in == N_INPUT

    tile_b = _choose_tile_b(B, max_tile_b)
    b_pad = _round_up(B, tile_b)

    # Only row padding when B is not tile-aligned; no column pad / dtype cast of
    # activations outside the kernel.
    xp = x if b_pad == B else jnp.pad(x, ((0, b_pad - B), (0, 0)))

    p = padded_params
    # Weights/biases are grid-invariant (index_map -> (0, 0)); Pallas keeps them
    # resident across grid steps. (pipeline_mode=pl.Buffered(1) would drop their
    # unused second buffer; left at the default for compile safety.)
    full = lambda shape: pl.BlockSpec(shape, lambda i: (0, 0))

    # Advisory cost estimate for the XLA scheduler (padded compute dims).
    mm_terms = N_INPUT * N2_P + N2_P * NB_P + NB_P * N2_P + N2_P * N_OUTPUT
    cost = pl.CostEstimate(
        flops=2 * b_pad * mm_terms,
        transcendentals=b_pad * N_OUTPUT,
        bytes_accessed=(b_pad * N_INPUT * 4 + b_pad * N_OUTPUT * 4
                        + 2 * mm_terms + 4 * (N2_P + NB_P + N2_P + N_OUTPUT)),
    )

    out = pl.pallas_call(
        mlp4_kernel,
        # TODO(synk): if the consumer tolerates bf16, make this dtype jnp.bfloat16
        # to halve output writeback (f32 kept here to match the PyTorch module).
        out_shape=jax.ShapeDtypeStruct((b_pad, N_OUTPUT), x.dtype),
        grid_spec=pltpu.PrefetchScalarGridSpec(
            num_scalar_prefetch=0,
            grid=(b_pad // tile_b,),
            in_specs=[
                pl.BlockSpec((tile_b, N_INPUT), lambda i: (i, 0)),   # x tile (raw f32)
                full((N_INPUT, N2_P)),  full((1, N2_P)),             # fc1
                full((N2_P, NB_P)),     full((1, NB_P)),             # fc2
                full((NB_P, N2_P)),     full((1, N2_P)),             # fc3
                full((N2_P, N_OUTPUT)), full((1, N_OUTPUT)),         # fc4
            ],
            out_specs=pl.BlockSpec((tile_b, N_OUTPUT), lambda i: (i, 0)),
        ),
        compiler_params=pltpu.CompilerParams(
            # Batch axis is embarrassingly parallel -> sharded across TCs on v7x.
            dimension_semantics=("parallel",),
            # Headroom above the 32 MiB default scoped limit; still safe on v7x's
            # 64 MiB physical VMEM.  Raise toward 96 MiB on v5e/v6e if pushing
            # max_tile_b to 2048.
            vmem_limit_bytes=vmem_limit_bytes,
        ),
        cost_estimate=cost,
    )(xp, p["w1"], p["b1"], p["w2"], p["b2"], p["w3"], p["b3"], p["w4"], p["b4"])

    # Output width is already the real 784; only strip batch padding if any.
    return out if b_pad == B else out[:B]


def reference_forward(x, params):
    """Pure-JAX f32 reference (unpadded)."""
    h1 = jnp.maximum(x @ params["w1"] + params["b1"], 0.0)
    z = h1 @ params["w2"] + params["b2"]
    h3 = jnp.maximum(z @ params["w3"] + params["b3"], 0.0)
    return jax.nn.sigmoid(h3 @ params["w4"] + params["b4"])


if __name__ == "__main__":
    key = jax.random.PRNGKey(0)
    k_params, k_x = jax.random.split(key)

    params = init_params(k_params)
    padded_params = prepare_params(params)

    # Small demo: 8 flattened 28x28 images.
    batch = 8
    x = jax.random.uniform(k_x, (batch, N_INPUT), jnp.float32)

    out = autoencoder_mlp4_forward(x, padded_params)
    out = jax.block_until_ready(out)

    ref = reference_forward(x, params)
    assert out.shape == (batch, N_OUTPUT)
    # bf16 matmul operands with f32 accumulation: relax tolerance vs. the f32 reference.
    assert jnp.allclose(out, ref, atol=2e-2, rtol=2e-2), float(jnp.max(jnp.abs(out - ref)))

    print("KERNEL_OK")
</pallas_src>

<mosaic_0001>
module attributes {stable_mosaic.version = 11 : i64} {
  func.func @mlp4_kernel(%arg0: i32, %arg1: memref<16x784xf32, #tpu.memory_space<vmem>>, %arg2: memref<784x512xbf16, #tpu.memory_space<vmem>>, %arg3: memref<1x512xf32, #tpu.memory_space<vmem>>, %arg4: memref<512x128xbf16, #tpu.memory_space<vmem>>, %arg5: memref<1x128xf32, #tpu.memory_space<vmem>>, %arg6: memref<128x512xbf16, #tpu.memory_space<vmem>>, %arg7: memref<1x512xf32, #tpu.memory_space<vmem>>, %arg8: memref<512x784xbf16, #tpu.memory_space<vmem>>, %arg9: memref<1x784xf32, #tpu.memory_space<vmem>>, %arg10: memref<16x784xf32, #tpu.memory_space<vmem>>) attributes {dimension_semantics = [#tpu.dimension_semantics<parallel>], iteration_bounds = array<i64: 1>, scalar_prefetch = 0 : i64, scratch_operands = 0 : i64, tpu.core_type = #tpu.core_type<tc>, window_params = [{transform_indices = @transform_0, window_bounds = array<i64: 16, 784>}, {pipeline_mode = #tpu.pipeline_mode<synchronous>, transform_indices = @transform_1, window_bounds = array<i64: 784, 512>}, {pipeline_mode = #tpu.pipeline_mode<synchronous>, transform_indices = @transform_2, window_bounds = array<i64: 1, 512>}, {pipeline_mode = #tpu.pipeline_mode<synchronous>, transform_indices = @transform_3, window_bounds = array<i64: 512, 128>}, {pipeline_mode = #tpu.pipeline_mode<synchronous>, transform_indices = @transform_4, window_bounds = array<i64: 1, 128>}, {pipeline_mode = #tpu.pipeline_mode<synchronous>, transform_indices = @transform_5, window_bounds = array<i64: 128, 512>}, {pipeline_mode = #tpu.pipeline_mode<synchronous>, transform_indices = @transform_6, window_bounds = array<i64: 1, 512>}, {pipeline_mode = #tpu.pipeline_mode<synchronous>, transform_indices = @transform_7, window_bounds = array<i64: 512, 784>}, {pipeline_mode = #tpu.pipeline_mode<synchronous>, transform_indices = @transform_8, window_bounds = array<i64: 1, 784>}, {transform_indices = @transform_9, window_bounds = array<i64: 16, 784>}]} {
    %c0 = arith.constant 0 : index
    %c0_0 = arith.constant 0 : index
    %0 = vector.load %arg1[%c0, %c0_0] : memref<16x784xf32, #tpu.memory_space<vmem>>, vector<16x784xf32>
    %1 = arith.truncf %0 : vector<16x784xf32> to vector<16x784xbf16>
    %c0_1 = arith.constant 0 : index
    %c0_2 = arith.constant 0 : index
    %2 = vector.load %arg2[%c0_1, %c0_2] : memref<784x512xbf16, #tpu.memory_space<vmem>>, vector<784x512xbf16>
    %cst = arith.constant dense<0.000000e+00> : vector<16x512xf32>
    %3 = tpu.matmul %1, %2, %cst {dimension_numbers = #tpu.dot_dimension_numbers<[1], [0], [0], [1], [0, 0, 1, 1], [], []>} : vector<16x784xbf16>, vector<784x512xbf16>, vector<16x512xf32> -> vector<16x512xf32>
    %c0_3 = arith.constant 0 : index
    %c0_4 = arith.constant 0 : index
    %4 = vector.load %arg3[%c0_3, %c0_4] : memref<1x512xf32, #tpu.memory_space<vmem>>, vector<1x512xf32>
    %5 = vector.broadcast %4 : vector<1x512xf32> to vector<16x512xf32>
    %6 = arith.addf %3, %5 : vector<16x512xf32>
    %cst_5 = arith.constant 0.000000e+00 : f32
    %7 = vector.broadcast %cst_5 : f32 to vector<16x512xf32>
    %8 = arith.maximumf %6, %7 : vector<16x512xf32>
    %9 = arith.truncf %8 : vector<16x512xf32> to vector<16x512xbf16>
    %c0_6 = arith.constant 0 : index
    %c0_7 = arith.constant 0 : index
    %10 = vector.load %arg4[%c0_6, %c0_7] : memref<512x128xbf16, #tpu.memory_space<vmem>>, vector<512x128xbf16>
    %cst_8 = arith.constant dense<0.000000e+00> : vector<16x128xf32>
    %11 = tpu.matmul %9, %10, %cst_8 {dimension_numbers = #tpu.dot_dimension_numbers<[1], [0], [0], [1], [0, 0, 1, 1], [], []>} : vector<16x512xbf16>, vector<512x128xbf16>, vector<16x128xf32> -> vector<16x128xf32>
    %c0_9 = arith.constant 0 : index
    %c0_10 = arith.constant 0 : index
    %12 = vector.load %arg5[%c0_9, %c0_10] : memref<1x128xf32, #tpu.memory_space<vmem>>, vector<1x128xf32>
    %13 = vector.broadcast %12 : vector<1x128xf32> to vector<16x128xf32>
    %14 = arith.addf %11, %13 : vector<16x128xf32>
    %15 = arith.truncf %14 : vector<16x128xf32> to vector<16x128xbf16>
    %c0_11 = arith.constant 0 : index
    %c0_12 = arith.constant 0 : index
    %16 = vector.load %arg6[%c0_11, %c0_12] : memref<128x512xbf16, #tpu.memory_space<vmem>>, vector<128x512xbf16>
    %cst_13 = arith.constant dense<0.000000e+00> : vector<16x512xf32>
    %17 = tpu.matmul %15, %16, %cst_13 {dimension_numbers = #tpu.dot_dimension_numbers<[1], [0], [0], [1], [0, 0, 1, 1], [], []>} : vector<16x128xbf16>, vector<128x512xbf16>, vector<16x512xf32> -> vector<16x512xf32>
    %c0_14 = arith.constant 0 : index
    %c0_15 = arith.constant 0 : index
    %18 = vector.load %arg7[%c0_14, %c0_15] : memref<1x512xf32, #tpu.memory_space<vmem>>, vector<1x512xf32>
    %19 = vector.broadcast %18 : vector<1x512xf32> to vector<16x512xf32>
    %20 = arith.addf %17, %19 : vector<16x512xf32>
    %cst_16 = arith.constant 0.000000e+00 : f32
    %21 = vector.broadcast %cst_16 : f32 to vector<16x512xf32>
    %22 = arith.maximumf %20, %21 : vector<16x512xf32>
    %23 = arith.truncf %22 : vector<16x512xf32> to vector<16x512xbf16>
    %c0_17 = arith.constant 0 : index
    %c0_18 = arith.constant 0 : index
    %24 = vector.load %arg8[%c0_17, %c0_18] : memref<512x784xbf16, #tpu.memory_space<vmem>>, vector<512x784xbf16>
    %cst_19 = arith.constant dense<0.000000e+00> : vector<16x784xf32>
    %25 = tpu.matmul %23, %24, %cst_19 {dimension_numbers = #tpu.dot_dimension_numbers<[1], [0], [0], [1], [0, 0, 1, 1], [], []>} : vector<16x512xbf16>, vector<512x784xbf16>, vector<16x784xf32> -> vector<16x784xf32>
    %c0_20 = arith.constant 0 : index
    %c0_21 = arith.constant 0 : index
    %26 = vector.load %arg9[%c0_20, %c0_21] : memref<1x784xf32, #tpu.memory_space<vmem>>, vector<1x784xf32>
    %27 = vector.broadcast %26 : vector<1x784xf32> to vector<16x784xf32>
    %28 = arith.addf %25, %27 : vector<16x784xf32>
    %29 = arith.negf %28 : vector<16x784xf32>
    %30 = math.exp %29 : vector<16x784xf32>
    %cst_22 = arith.constant 1.000000e+00 : f32
    %31 = vector.broadcast %cst_22 : f32 to vector<16x784xf32>
    %32 = arith.addf %31, %30 : vector<16x784xf32>
    %33 = arith.divf %31, %32 : vector<16x784xf32>
    %c0_23 = arith.constant 0 : index
    %c0_24 = arith.constant 0 : index
    %34 = vector.load %arg10[%c0_23, %c0_24] : memref<16x784xf32, #tpu.memory_space<vmem>>, vector<16x784xf32>
    tpu.vector_store %arg10[%c0_23, %c0_24], %33 {strides = array<i32>} : memref<16x784xf32, #tpu.memory_space<vmem>>, vector<16x784xf32>,
    return
  }
  func.func @transform_0(%arg0: i32) -> (i32, i32) {
    %c0_i32 = arith.constant 0 : i32
    %c0_i32_0 = arith.constant 0 : i32
    return %arg0, %c0_i32 : i32, i32
  }
  func.func @transform_1(%arg0: i32) -> (i32, i32) {
    %c0_i32 = arith.constant 0 : i32
    %c0_i32_0 = arith.constant 0 : i32
    %c0_i32_1 = arith.constant 0 : i32
    return %c0_i32, %c0_i32_0 : i32, i32
  }
  func.func @transform_2(%arg0: i32) -> (i32, i32) {
    %c0_i32 = arith.constant 0 : i32
    %c0_i32_0 = arith.constant 0 : i32
    %c0_i32_1 = arith.constant 0 : i32
    return %c0_i32, %c0_i32_0 : i32, i32
  }
  func.func @transform_3(%arg0: i32) -> (i32, i32) {
    %c0_i32 = arith.constant 0 : i32
    %c0_i32_0 = arith.constant 0 : i32
    %c0_i32_1 = arith.constant 0 : i32
    return %c0_i32, %c0_i32_0 : i32, i32
  }
  func.func @transform_4(%arg0: i32) -> (i32, i32) {
    %c0_i32 = arith.constant 0 : i32
    %c0_i32_0 = arith.constant 0 : i32
    %c0_i32_1 = arith.constant 0 : i32
    return %c0_i32, %c0_i32_0 : i32, i32
  }
  func.func @transform_5(%arg0: i32) -> (i32, i32) {
    %c0_i32 = arith.constant 0 : i32
    %c0_i32_0 = arith.constant 0 : i32
    %c0_i32_1 = arith.constant 0 : i32
    return %c0_i32, %c0_i32_0 : i32, i32
  }
  func.func @transform_6(%arg0: i32) -> (i32, i32) {
    %c0_i32 = arith.constant 0 : i32
    %c0_i32_0 = arith.constant 0 : i32
    %c0_i32_1 = arith.constant 0 : i32
    return %c0_i32, %c0_i32_0 : i32, i32
  }
  func.func @transform_7(%arg0: i32) -> (i32, i32) {
    %c0_i32 = arith.constant 0 : i32
    %c0_i32_0 = arith.constant 0 : i32
    %c0_i32_1 = arith.constant 0 : i32
    return %c0_i32, %c0_i32_0 : i32, i32
  }
  func.func @transform_8(%arg0: i32) -> (i32, i32) {
    %c0_i32 = arith.constant 0 : i32
    %c0_i32_0 = arith.constant 0 : i32
    %c0_i32_1 = arith.constant 0 : i32
    return %c0_i32, %c0_i32_0 : i32, i32
  }
  func.func @transform_9(%arg0: i32) -> (i32, i32) {
    %c0_i32 = arith.constant 0 : i32
    %c0_i32_0 = arith.constant 0 : i32
    return %arg0, %c0_i32 : i32, i32
  }
}

</mosaic_0001>

<llo_original>
// kernel: tpu_custom_call.1
$region0: #{tpu_custom_call.1}
  #allocation0 [shape = 'u32[]', space=smem, size = 0x4, offset = 0x4, fixed_abs, tag = 'smem constant byte address 0x4 - core index']
  #allocation1 [shape = 'u32[144,128]{1,0:T(1,128)}', space=vmem, size = 0x12000, scoped, tag = 'internal scratch']
  %s0 = inlined_call_operand.vmem [shape: f32[16,784], index: 0, kind: input, shape index: {}]
  %s1 = inlined_call_operand.vmem [shape: bf16[784,512], index: 1, kind: input, shape index: {}]
  %s2 = inlined_call_operand.vmem [shape: f32[1,512], index: 2, kind: input, shape index: {}]
  %s3 = inlined_call_operand.vmem [shape: bf16[512,128], index: 3, kind: input, shape index: {}]
  %s4 = inlined_call_operand.vmem [shape: f32[1,128], index: 4, kind: input, shape index: {}]
  %s5 = inlined_call_operand.vmem [shape: bf16[128,512], index: 5, kind: input, shape index: {}]
  %s6 = inlined_call_operand.vmem [shape: f32[1,512], index: 6, kind: input, shape index: {}]
  %s7 = inlined_call_operand.vmem [shape: bf16[512,784], index: 7, kind: input, shape index: {}]
  %s8 = inlined_call_operand.vmem [shape: f32[1,784], index: 8, kind: input, shape index: {}]
  %s9 = inlined_call_operand.hbm [shape: f32[16,784], index: 9, kind: output, shape index: {}]
  %s10 = sld [smem:[#allocation0]]
  $region46: #{tpu_custom_call.1} parent=0
    _
  %s12 = ssub.s32 1, %s10
  %s13 = scalar_select 0, %s12, %s10
  $region1: #{tpu_custom_call.1} parent=0
    #allocation2 [shape = 'u8[57344]{0}', space=vmem, size = 0xe000, scoped, tag = 'output window, operand 0, single buffered']
    #allocation3 [shape = 's32[1]{0}', space=sflag, size = 0x4, scoped, tag = 'scoped memory for tpu_custom_call.1']
    %14 = vsyncpa [#allocation3], 0
    // Predicated region
    $region2: #{tpu_custom_call.1} parent=1 // pred_check
      _
    $region3: #{tpu_custom_call.1} parent=1 // pred_check_branch
      %16 = sbr.rel (0) target = $region5
    $region4: #{tpu_custom_call.1} parent=1 // pred_region
      _
    $region5: #{tpu_custom_call.1} parent=1 // pred_fallthru
      _
    // Predicated region
    $region6: #{tpu_custom_call.1} parent=1 // pred_check
      _
    $region7: #{tpu_custom_call.1} parent=1 // pred_check_branch
      %18 = sbr.rel (0) target = $region9
    $region8: #{tpu_custom_call.1} parent=1 // pred_region
      _
    $region9: #{tpu_custom_call.1} parent=1 // pred_fallthru
      _
    // Predicated region
    $region10: #{tpu_custom_call.1} parent=1 // pred_check
      _
    $region11: #{tpu_custom_call.1} parent=1 // pred_check_branch
      %20 = sbr.rel (0) target = $region13
    $region12: #{tpu_custom_call.1} parent=1 // pred_region
      _
    $region13: #{tpu_custom_call.1} parent=1 // pred_fallthru
      _
    // Predicated region
    $region14: #{tpu_custom_call.1} parent=1 // pred_check
      _
    $region15: #{tpu_custom_call.1} parent=1 // pred_check_branch
      %22 = sbr.rel (0) target = $region17
    $region16: #{tpu_custom_call.1} parent=1 // pred_region
      _
    $region17: #{tpu_custom_call.1} parent=1 // pred_fallthru
      _
    // Predicated region
    $region18: #{tpu_custom_call.1} parent=1 // pred_check
      _
    $region19: #{tpu_custom_call.1} parent=1 // pred_check_branch
      %24 = sbr.rel (0) target = $region21
    $region20: #{tpu_custom_call.1} parent=1 // pred_region
      _
    $region21: #{tpu_custom_call.1} parent=1 // pred_fallthru
      _
    // Predicated region
    $region22: #{tpu_custom_call.1} parent=1 // pred_check
      _
    $region23: #{tpu_custom_call.1} parent=1 // pred_check_branch
      %26 = sbr.rel (0) target = $region25
    $region24: #{tpu_custom_call.1} parent=1 // pred_region
      _
    $region25: #{tpu_custom_call.1} parent=1 // pred_fallthru
      _
    // Predicated region
    $region26: #{tpu_custom_call.1} parent=1 // pred_check
      _
    $region27: #{tpu_custom_call.1} parent=1 // pred_check_branch
      %28 = sbr.rel (0) target = $region29
    $region28: #{tpu_custom_call.1} parent=1 // pred_region
      _
    $region29: #{tpu_custom_call.1} parent=1 // pred_fallthru
      _
    // Predicated region
    $region30: #{tpu_custom_call.1} parent=1 // pred_check
      _
    $region31: #{tpu_custom_call.1} parent=1 // pred_check_branch
      %30 = sbr.rel (0) target = $region33
    $region32: #{tpu_custom_call.1} parent=1 // pred_region
      _
    $region33: #{tpu_custom_call.1} parent=1 // pred_fallthru
      _
    // Predicated region
    $region34: #{tpu_custom_call.1} parent=1 // pred_check
      _
    $region35: #{tpu_custom_call.1} parent=1 // pred_check_branch
      %32 = sbr.rel (0) target = $region37
    $region36: #{tpu_custom_call.1} parent=1 // pred_region
      _
    $region37: #{tpu_custom_call.1} parent=1 // pred_fallthru
      _
    %v34 = vld [vmem:[%s0] sm:$0xff]
    %v35 = vld [vmem:[%s0 + $0x8] sm:$0xff]
    %v36 = vld [vmem:[%s0 + $0x10] sm:$0xff]
    %v37 = vld [vmem:[%s0 + $0x18] sm:$0xff]
    %v38 = vld [vmem:[%s0 + $0x20] sm:$0xff]
    %v39 = vld [vmem:[%s0 + $0x28] sm:$0xff]
    %v40 = vld [vmem:[%s0 + $0x30] sm:$0xff]
    %v41 = vld [vmem:[%s0 + $0x38] sm:$0xff]
    %v42 = vld [vmem:[%s0 + $0x40] sm:$0xff]
    %v43 = vld [vmem:[%s0 + $0x48] sm:$0xff]
    %v44 = vld [vmem:[%s0 + $0x50] sm:$0xff]
    %v45 = vld [vmem:[%s0 + $0x58] sm:$0xff]
    %v46 = vld [vmem:[%s0 + $0x60] sm:$0xff]
    %v47 = vld [vmem:[%s0 + $0x68] sm:$0xff]
    %v48 = vpack.c.bf16 %v41, %v34
    %v49 = vpack.c.bf16 %v42, %v35
    %v50 = vpack.c.bf16 %v43, %v36
    %v51 = vpack.c.bf16 %v44, %v37
    %v52 = vpack.c.bf16 %v45, %v38
    %v53 = vpack.c.bf16 %v46, %v39
    %v54 = vpack.c.bf16 %v47, %v40
    %v55 = vld [vmem:[%s1] sm:$0xff]
    %v56 = vld [vmem:[%s1 + $0x8] sm:$0xff]
    %v57 = vld [vmem:[%s1 + $0x10] sm:$0xff]
    %v58 = vld [vmem:[%s1 + $0x18] sm:$0xff]
    %v59 = vld [vmem:[%s1 + $0x20] sm:$0xff]
    %v60 = vld [vmem:[%s1 + $0x28] sm:$0xff]
    %v61 = vld [vmem:[%s1 + $0x30] sm:$0xff]
    %v62 = vld [vmem:[%s1 + $0x38] sm:$0xff]
    %v63 = vld [vmem:[%s1 + $0x40] sm:$0xff]
    %v64 = vld [vmem:[%s1 + $0x48] sm:$0xff]
    %v65 = vld [vmem:[%s1 + $0x50] sm:$0xff]
    %v66 = vld [vmem:[%s1 + $0x58] sm:$0xff]
    %v67 = vld [vmem:[%s1 + $0x60] sm:$0xff]
    %v68 = vld [vmem:[%s1 + $0x68] sm:$0xff]
    %v69 = vld [vmem:[%s1 + $0x70] sm:$0xff]
    %v70 = vld [vmem:[%s1 + $0x78] sm:$0xff]
    %v71 = vld [vmem:[%s1 + $0x80] sm:$0xff]
    %v72 = vld [vmem:[%s1 + $0x88] sm:$0xff]
    %v73 = vld [vmem:[%s1 + $0x90] sm:$0xff]
    %v74 = vld [vmem:[%s1 + $0x98] sm:$0xff]
    %v75 = vld [vmem:[%s1 + $0xa0] sm:$0xff]
    %v76 = vld [vmem:[%s1 + $0xa8] sm:$0xff]
    %v77 = vld [vmem:[%s1 + $0xb0] sm:$0xff]
    %v78 = vld [vmem:[%s1 + $0xb8] sm:$0xff]
    %v79 = vld [vmem:[%s1 + $0xc0] sm:$0xff]
    %v80 = vld [vmem:[%s1 + $0xc8] sm:$0xff]
    %v81 = vld [vmem:[%s1 + $0xd0] sm:$0xff]
    %v82 = vld [vmem:[%s1 + $0xd8] sm:$0xff]
    %v83 = vld [vmem:[%s1 + $0xe0] sm:$0xff]
    %v84 = vld [vmem:[%s1 + $0xe8] sm:$0xff]
    %v85 = vld [vmem:[%s1 + $0xf0] sm:$0xff]
    %v86 = vld [vmem:[%s1 + $0xf8] sm:$0xff]
    %v87 = vld [vmem:[%s1 + $0x100] sm:$0xff]
    %v88 = vld [vmem:[%s1 + $0x108] sm:$0xff]
    %v89 = vld [vmem:[%s1 + $0x110] sm:$0xff]
    %v90 = vld [vmem:[%s1 + $0x118] sm:$0xff]
    %v91 = vld [vmem:[%s1 + $0x120] sm:$0xff]
    %v92 = vld [vmem:[%s1 + $0x128] sm:$0xff]
    %v93 = vld [vmem:[%s1 + $0x130] sm:$0xff]
    %v94 = vld [vmem:[%s1 + $0x138] sm:$0xff]
    %v95 = vld [vmem:[%s1 + $0x140] sm:$0xff]
    %v96 = vld [vmem:[%s1 + $0x148] sm:$0xff]
    %v97 = vld [vmem:[%s1 + $0x150] sm:$0xff]
    %v98 = vld [vmem:[%s1 + $0x158] sm:$0xff]
    %v99 = vld [vmem:[%s1 + $0x160] sm:$0xff]
    %v100 = vld [vmem:[%s1 + $0x168] sm:$0xff]
    %v101 = vld [vmem:[%s1 + $0x170] sm:$0xff]
    %v102 = vld [vmem:[%s1 + $0x178] sm:$0xff]
    %v103 = vld [vmem:[%s1 + $0x180] sm:$0xff]
    %v104 = vld [vmem:[%s1 + $0x188] sm:$0xff]
    %v105 = vld [vmem:[%s1 + $0x190] sm:$0xff]
    %v106 = vld [vmem:[%s1 + $0x198] sm:$0xff]
    %v107 = vld [vmem:[%s1 + $0x1a0] sm:$0xff]
    %v108 = vld [vmem:[%s1 + $0x1a8] sm:$0xff]
    %v109 = vld [vmem:[%s1 + $0x1b0] sm:$0xff]
    %v110 = vld [vmem:[%s1 + $0x1b8] sm:$0xff]
    %v111 = vld [vmem:[%s1 + $0x1c0] sm:$0xff]
    %v112 = vld [vmem:[%s1 + $0x1c8] sm:$0xff]
    %v113 = vld [vmem:[%s1 + $0x1d0] sm:$0xff]
    %v114 = vld [vmem:[%s1 + $0x1d8] sm:$0xff]
    %v115 = vld [vmem:[%s1 + $0x1e0] sm:$0xff]
    %v116 = vld [vmem:[%s1 + $0x1e8] sm:$0xff]
    %v117 = vld [vmem:[%s1 + $0x1f0] sm:$0xff]
    %v118 = vld [vmem:[%s1 + $0x1f8] sm:$0xff]
    %v119 = vld [vmem:[%s1 + $0x200] sm:$0xff]
    %v120 = vld [vmem:[%s1 + $0x208] sm:$0xff]
    %v121 = vld [vmem:[%s1 + $0x210] sm:$0xff]
    %v122 = vld [vmem:[%s1 + $0x218] sm:$0xff]
    %v123 = vld [vmem:[%s1 + $0x220] sm:$0xff]
    %v124 = vld [vmem:[%s1 + $0x228] sm:$0xff]
    %v125 = vld [vmem:[%s1 + $0x230] sm:$0xff]
    %v126 = vld [vmem:[%s1 + $0x238] sm:$0xff]
    %v127 = vld [vmem:[%s1 + $0x240] sm:$0xff]
    %v128 = vld [vmem:[%s1 + $0x248] sm:$0xff]
    %v129 = vld [vmem:[%s1 + $0x250] sm:$0xff]
    %v130 = vld [vmem:[%s1 + $0x258] sm:$0xff]
    %v131 = vld [vmem:[%s1 + $0x260] sm:$0xff]
    %v132 = vld [vmem:[%s1 + $0x268] sm:$0xff]
    %v133 = vld [vmem:[%s1 + $0x270] sm:$0xff]
    %v134 = vld [vmem:[%s1 + $0x278] sm:$0xff]
    %v135 = vld [vmem:[%s1 + $0x280] sm:$0xff]
    %v136 = vld [vmem:[%s1 + $0x288] sm:$0xff]
    %v137 = vld [vmem:[%s1 + $0x290] sm:$0xff]
    %v138 = vld [vmem:[%s1 + $0x298] sm:$0xff]
    %v139 = vld [vmem:[%s1 + $0x2a0] sm:$0xff]
    %v140 = vld [vmem:[%s1 + $0x2a8] sm:$0xff]
    %v141 = vld [vmem:[%s1 + $0x2b0] sm:$0xff]
    %v142 = vld [vmem:[%s1 + $0x2b8] sm:$0xff]
    %v143 = vld [vmem:[%s1 + $0x2c0] sm:$0xff]
    %v144 = vld [vmem:[%s1 + $0x2c8] sm:$0xff]
    %v145 = vld [vmem:[%s1 + $0x2d0] sm:$0xff]
    %v146 = vld [vmem:[%s1 + $0x2d8] sm:$0xff]
    %v147 = vld [vmem:[%s1 + $0x2e0] sm:$0xff]
    %v148 = vld [vmem:[%s1 + $0x2e8] sm:$0xff]
    %v149 = vld [vmem:[%s1 + $0x2f0] sm:$0xff]
    %v150 = vld [vmem:[%s1 + $0x2f8] sm:$0xff]
    %v151 = vld [vmem:[%s1 + $0x300] sm:$0xff]
    %v152 = vld [vmem:[%s1 + $0x308] sm:$0xff]
    %v153 = vld [vmem:[%s1 + $0x310] sm:$0xff]
    %v154 = vld [vmem:[%s1 + $0x318] sm:$0xff]
    %v155 = vld [vmem:[%s1 + $0x320] sm:$0xff]
    %v156 = vld [vmem:[%s1 + $0x328] sm:$0xff]
    %v157 = vld [vmem:[%s1 + $0x330] sm:$0xff]
    %v158 = vld [vmem:[%s1 + $0x338] sm:$0xff]
    %v159 = vld [vmem:[%s1 + $0x340] sm:$0xff]
    %v160 = vld [vmem:[%s1 + $0x348] sm:$0xff]
    %v161 = vld [vmem:[%s1 + $0x350] sm:$0xff]
    %v162 = vld [vmem:[%s1 + $0x358] sm:$0xff]
    %v163 = vld [vmem:[%s1 + $0x360] sm:$0xff]
    %v164 = vld [vmem:[%s1 + $0x368] sm:$0xff]
    %v165 = vld [vmem:[%s1 + $0x370] sm:$0xff]
    %v166 = vld [vmem:[%s1 + $0x378] sm:$0xff]
    %v167 = vld [vmem:[%s1 + $0x380] sm:$0xff]
    %v168 = vld [vmem:[%s1 + $0x388] sm:$0xff]
    %v169 = vld [vmem:[%s1 + $0x390] sm:$0xff]
    %v170 = vld [vmem:[%s1 + $0x398] sm:$0xff]
    %v171 = vld [vmem:[%s1 + $0x3a0] sm:$0xff]
    %v172 = vld [vmem:[%s1 + $0x3a8] sm:$0xff]
    %v173 = vld [vmem:[%s1 + $0x3b0] sm:$0xff]
    %v174 = vld [vmem:[%s1 + $0x3b8] sm:$0xff]
    %v175 = vld [vmem:[%s1 + $0x3c0] sm:$0xff]
    %v176 = vld [vmem:[%s1 + $0x3c8] sm:$0xff]
    %v177 = vld [vmem:[%s1 + $0x3d0] sm:$0xff]
    %v178 = vld [vmem:[%s1 + $0x3d8] sm:$0xff]
    %v179 = vld [vmem:[%s1 + $0x3e0] sm:$0xff]
    %v180 = vld [vmem:[%s1 + $0x3e8] sm:$0xff]
    %v181 = vld [vmem:[%s1 + $0x3f0] sm:$0xff]
    %v182 = vld [vmem:[%s1 + $0x3f8] sm:$0xff]
    %v183 = vld [vmem:[%s1 + $0x400] sm:$0xff]
    %v184 = vld [vmem:[%s1 + $0x408] sm:$0xff]
    %v185 = vld [vmem:[%s1 + $0x410] sm:$0xff]
    %v186 = vld [vmem:[%s1 + $0x418] sm:$0xff]
    %v187 = vld [vmem:[%s1 + $0x420] sm:$0xff]
    %v188 = vld [vmem:[%s1 + $0x428] sm:$0xff]
    %v189 = vld [vmem:[%s1 + $0x430] sm:$0xff]
    %v190 = vld [vmem:[%s1 + $0x438] sm:$0xff]
    %v191 = vld [vmem:[%s1 + $0x440] sm:$0xff]
    %v192 = vld [vmem:[%s1 + $0x448] sm:$0xff]
    %v193 = vld [vmem:[%s1 + $0x450] sm:$0xff]
    %v194 = vld [vmem:[%s1 + $0x458] sm:$0xff]
    %v195 = vld [vmem:[%s1 + $0x460] sm:$0xff]
    %v196 = vld [vmem:[%s1 + $0x468] sm:$0xff]
    %v197 = vld [vmem:[%s1 + $0x470] sm:$0xff]
    %v198 = vld [vmem:[%s1 + $0x478] sm:$0xff]
    %v199 = vld [vmem:[%s1 + $0x480] sm:$0xff]
    %v200 = vld [vmem:[%s1 + $0x488] sm:$0xff]
    %v201 = vld [vmem:[%s1 + $0x490] sm:$0xff]
    %v202 = vld [vmem:[%s1 + $0x498] sm:$0xff]
    %v203 = vld [vmem:[%s1 + $0x4a0] sm:$0xff]
    %v204 = vld [vmem:[%s1 + $0x4a8] sm:$0xff]
    %v205 = vld [vmem:[%s1 + $0x4b0] sm:$0xff]
    %v206 = vld [vmem:[%s1 + $0x4b8] sm:$0xff]
    %v207 = vld [vmem:[%s1 + $0x4c0] sm:$0xff]
    %v208 = vld [vmem:[%s1 + $0x4c8] sm:$0xff]
    %v209 = vld [vmem:[%s1 + $0x4d0] sm:$0xff]
    %v210 = vld [vmem:[%s1 + $0x4d8] sm:$0xff]
    %v211 = vld [vmem:[%s1 + $0x4e0] sm:$0xff]
    %v212 = vld [vmem:[%s1 + $0x4e8] sm:$0xff]
    %v213 = vld [vmem:[%s1 + $0x4f0] sm:$0xff]
    %v214 = vld [vmem:[%s1 + $0x4f8] sm:$0xff]
    %v215 = vld [vmem:[%s1 + $0x500] sm:$0xff]
    %v216 = vld [vmem:[%s1 + $0x508] sm:$0xff]
    %v217 = vld [vmem:[%s1 + $0x510] sm:$0xff]
    %v218 = vld [vmem:[%s1 + $0x518] sm:$0xff]
    %v219 = vld [vmem:[%s1 + $0x520] sm:$0xff]
    %v220 = vld [vmem:[%s1 + $0x528] sm:$0xff]
    %v221 = vld [vmem:[%s1 + $0x530] sm:$0xff]
    %v222 = vld [vmem:[%s1 + $0x538] sm:$0xff]
    %v223 = vld [vmem:[%s1 + $0x540] sm:$0xff]
    %v224 = vld [vmem:[%s1 + $0x548] sm:$0xff]
    %v225 = vld [vmem:[%s1 + $0x550] sm:$0xff]
    %v226 = vld [vmem:[%s1 + $0x558] sm:$0xff]
    %v227 = vld [vmem:[%s1 + $0x560] sm:$0xff]
    %v228 = vld [vmem:[%s1 + $0x568] sm:$0xff]
    %v229 = vld [vmem:[%s1 + $0x570] sm:$0xff]
    %v230 = vld [vmem:[%s1 + $0x578] sm:$0xff]
    %v231 = vld [vmem:[%s1 + $0x580] sm:$0xff]
    %v232 = vld [vmem:[%s1 + $0x588] sm:$0xff]
    %v233 = vld [vmem:[%s1 + $0x590] sm:$0xff]
    %v234 = vld [vmem:[%s1 + $0x598] sm:$0xff]
    %v235 = vld [vmem:[%s1 + $0x5a0] sm:$0xff]
    %v236 = vld [vmem:[%s1 + $0x5a8] sm:$0xff]
    %v237 = vld [vmem:[%s1 + $0x5b0] sm:$0xff]
    %v238 = vld [vmem:[%s1 + $0x5b8] sm:$0xff]
    %v239 = vld [vmem:[%s1 + $0x5c0] sm:$0xff]
    %v240 = vld [vmem:[%s1 + $0x5c8] sm:$0xff]
    %v241 = vld [vmem:[%s1 + $0x5d0] sm:$0xff]
    %v242 = vld [vmem:[%s1 + $0x5d8] sm:$0xff]
    %v243 = vld [vmem:[%s1 + $0x5e0] sm:$0xff]
    %v244 = vld [vmem:[%s1 + $0x5e8] sm:$0xff]
    %v245 = vld [vmem:[%s1 + $0x5f0] sm:$0xff]
    %v246 = vld [vmem:[%s1 + $0x5f8] sm:$0xff]
    %v247 = vld [vmem:[%s1 + $0x600] sm:$0xff]
    %v248 = vld [vmem:[%s1 + $0x608] sm:$0xff]
    %v249 = vld [vmem:[%s1 + $0x610] sm:$0xff]
    %v250 = vld [vmem:[%s1 + $0x618] sm:$0xff]
    %v251 = vld [vmem:[%s2] sm:$0xf]
    %v253 = vlaneseq
    %v254 = vshrl.u32 %v253, 7
    %v255 = vsub.s32 0, %v254
    %v256 = vrot.slane %v251, %v255
    %v257 = vlaneseq
    %v258 = vshrl.u32 %v257, 7
    %v259 = vsub.s32 1, %v258
    %v260 = vrot.slane %v251, %v259
    %v261 = vlaneseq
    %v262 = vshrl.u32 %v261, 7
    %v263 = vsub.s32 2, %v262
    %v264 = vrot.slane %v251, %v263
    %v265 = vlaneseq
    %v266 = vshrl.u32 %v265, 7
    %v267 = vsub.s32 3, %v266
    %v268 = vrot.slane %v251, %v267
    %v469 = vunpack.c.l.b16 %v55
    %v470 = vunpack.c.h.b16 %v55
    %v471 = vunpack.c.l.b16 %v56
    %v472 = vunpack.c.h.b16 %v56
    %v473 = vunpack.c.l.b16 %v57
    %v474 = vunpack.c.h.b16 %v57
    %v475 = vunpack.c.l.b16 %v58
    %v476 = vunpack.c.h.b16 %v58
    %v477 = vunpack.c.l.b16 %v59
    %v478 = vunpack.c.h.b16 %v59
    %v479 = vunpack.c.l.b16 %v60
    %v480 = vunpack.c.h.b16 %v60
    %v481 = vunpack.c.l.b16 %v61
    %v482 = vunpack.c.h.b16 %v61
    %v483 = vunpack.c.l.b16 %v62
    %v484 = vunpack.c.h.b16 %v62
    %v485 = vunpack.c.l.b16 %v63
    %v486 = vunpack.c.h.b16 %v63
    %v487 = vunpack.c.l.b16 %v64
    %v488 = vunpack.c.h.b16 %v64
    %v489 = vunpack.c.l.b16 %v65
    %v490 = vunpack.c.h.b16 %v65
    %v491 = vunpack.c.l.b16 %v66
    %v492 = vunpack.c.h.b16 %v66
    %v493 = vunpack.c.l.b16 %v67
    %v494 = vunpack.c.h.b16 %v67
    %v495 = vunpack.c.l.b16 %v68
    %v496 = vunpack.c.h.b16 %v68
    %v497 = vunpack.c.l.b16 %v69
    %v498 = vunpack.c.h.b16 %v69
    %v499 = vunpack.c.l.b16 %v70
    %v500 = vunpack.c.h.b16 %v70
    %v501 = vunpack.c.l.b16 %v71
    %v502 = vunpack.c.h.b16 %v71
    %v503 = vunpack.c.l.b16 %v72
    %v504 = vunpack.c.h.b16 %v72
    %v505 = vunpack.c.l.b16 %v73
    %v506 = vunpack.c.h.b16 %v73
    %v507 = vunpack.c.l.b16 %v74
    %v508 = vunpack.c.h.b16 %v74
    %v509 = vunpack.c.l.b16 %v75
    %v510 = vunpack.c.h.b16 %v75
    %v511 = vunpack.c.l.b16 %v76
    %v512 = vunpack.c.h.b16 %v76
    %v513 = vunpack.c.l.b16 %v77
    %v514 = vunpack.c.h.b16 %v77
    %v515 = vunpack.c.l.b16 %v78
    %v516 = vunpack.c.h.b16 %v78
    %v517 = vunpack.c.l.b16 %v79
    %v518 = vunpack.c.h.b16 %v79
    %v519 = vunpack.c.l.b16 %v80
    %v520 = vunpack.c.h.b16 %v80
    %v521 = vunpack.c.l.b16 %v81
    %v522 = vunpack.c.h.b16 %v81
    %v523 = vunpack.c.l.b16 %v82
    %v524 = vunpack.c.h.b16 %v82
    %v525 = vunpack.c.l.b16 %v83
    %v526 = vunpack.c.h.b16 %v83
    %v527 = vunpack.c.l.b16 %v84
    %v528 = vunpack.c.h.b16 %v84
    %v529 = vunpack.c.l.b16 %v85
    %v530 = vunpack.c.h.b16 %v85
    %v531 = vunpack.c.l.b16 %v86
    %v532 = vunpack.c.h.b16 %v86
    %v533 = vunpack.c.l.b16 %v87
    %v534 = vunpack.c.h.b16 %v87
    %v535 = vunpack.c.l.b16 %v88
    %v536 = vunpack.c.h.b16 %v88
    %v537 = vunpack.c.l.b16 %v89
    %v538 = vunpack.c.h.b16 %v89
    %v539 = vunpack.c.l.b16 %v90
    %v540 = vunpack.c.h.b16 %v90
    %v541 = vunpack.c.l.b16 %v91
    %v542 = vunpack.c.h.b16 %v91
    %v543 = vunpack.c.l.b16 %v92
    %v544 = vunpack.c.h.b16 %v92
    %v545 = vunpack.c.l.b16 %v93
    %v546 = vunpack.c.h.b16 %v93
    %v547 = vunpack.c.l.b16 %v94
    %v548 = vunpack.c.h.b16 %v94
    %v549 = vunpack.c.l.b16 %v95
    %v550 = vunpack.c.h.b16 %v95
    %v551 = vunpack.c.l.b16 %v96
    %v552 = vunpack.c.h.b16 %v96
    %v553 = vunpack.c.l.b16 %v97
    %v554 = vunpack.c.h.b16 %v97
    %v555 = vunpack.c.l.b16 %v98
    %v556 = vunpack.c.h.b16 %v98
    %v557 = vunpack.c.l.b16 %v99
    %v558 = vunpack.c.h.b16 %v99
    %v559 = vunpack.c.l.b16 %v100
    %v560 = vunpack.c.h.b16 %v100
    %v561 = vunpack.c.l.b16 %v101
    %v562 = vunpack.c.h.b16 %v101
    %v563 = vunpack.c.l.b16 %v102
    %v564 = vunpack.c.h.b16 %v102
    %v565 = vunpack.c.l.b16 %v103
    %v566 = vunpack.c.h.b16 %v103
    %v567 = vunpack.c.l.b16 %v104
    %v568 = vunpack.c.h.b16 %v104
    %v569 = vunpack.c.l.b16 %v105
    %v570 = vunpack.c.h.b16 %v105
    %v571 = vunpack.c.l.b16 %v106
    %v572 = vunpack.c.h.b16 %v106
    %v573 = vunpack.c.l.b16 %v107
    %v574 = vunpack.c.h.b16 %v107
    %v575 = vunpack.c.l.b16 %v108
    %v576 = vunpack.c.h.b16 %v108
    %v577 = vunpack.c.l.b16 %v109
    %v578 = vunpack.c.h.b16 %v109
    %v579 = vunpack.c.l.b16 %v110
    %v580 = vunpack.c.h.b16 %v110
    %v581 = vunpack.c.l.b16 %v111
    %v582 = vunpack.c.h.b16 %v111
    %v583 = vunpack.c.l.b16 %v112
    %v584 = vunpack.c.h.b16 %v112
    %v585 = vunpack.c.l.b16 %v113
    %v586 = vunpack.c.h.b16 %v113
    %v587 = vunpack.c.l.b16 %v114
    %v588 = vunpack.c.h.b16 %v114
    %v589 = vunpack.c.l.b16 %v115
    %v590 = vunpack.c.h.b16 %v115
    %v591 = vunpack.c.l.b16 %v116
    %v592 = vunpack.c.h.b16 %v116
    %v593 = vunpack.c.l.b16 %v117
    %v594 = vunpack.c.h.b16 %v117
    %v595 = vunpack.c.l.b16 %v118
    %v596 = vunpack.c.h.b16 %v118
    %v597 = vunpack.c.l.b16 %v119
    %v598 = vunpack.c.h.b16 %v119
    %v599 = vunpack.c.l.b16 %v120
    %v600 = vunpack.c.h.b16 %v120
    %v601 = vunpack.c.l.b16 %v121
    %v602 = vunpack.c.h.b16 %v121
    %v603 = vunpack.c.l.b16 %v122
    %v604 = vunpack.c.h.b16 %v122
    %v605 = vunpack.c.l.b16 %v123
    %v606 = vunpack.c.h.b16 %v123
    %v607 = vunpack.c.l.b16 %v124
    %v608 = vunpack.c.h.b16 %v124
    %v609 = vunpack.c.l.b16 %v125
    %v610 = vunpack.c.h.b16 %v125
    %v611 = vunpack.c.l.b16 %v126
    %v612 = vunpack.c.h.b16 %v126
    %v613 = vunpack.c.l.b16 %v127
    %v614 = vunpack.c.h.b16 %v127
    %v615 = vunpack.c.l.b16 %v128
    %v616 = vunpack.c.h.b16 %v128
    %v617 = vunpack.c.l.b16 %v129
    %v618 = vunpack.c.h.b16 %v129
    %v619 = vunpack.c.l.b16 %v130
    %v620 = vunpack.c.h.b16 %v130
    %v621 = vunpack.c.l.b16 %v131
    %v622 = vunpack.c.h.b16 %v131
    %v623 = vunpack.c.l.b16 %v132
    %v624 = vunpack.c.h.b16 %v132
    %v625 = vunpack.c.l.b16 %v133
    %v626 = vunpack.c.h.b16 %v133
    %v627 = vunpack.c.l.b16 %v134
    %v628 = vunpack.c.h.b16 %v134
    %v629 = vunpack.c.l.b16 %v135
    %v630 = vunpack.c.h.b16 %v135
    %v631 = vunpack.c.l.b16 %v136
    %v632 = vunpack.c.h.b16 %v136
    %v633 = vunpack.c.l.b16 %v137
    %v634 = vunpack.c.h.b16 %v137
    %v635 = vunpack.c.l.b16 %v138
    %v636 = vunpack.c.h.b16 %v138
    %v637 = vunpack.c.l.b16 %v139
    %v638 = vunpack.c.h.b16 %v139
    %v639 = vunpack.c.l.b16 %v140
    %v640 = vunpack.c.h.b16 %v140
    %v641 = vunpack.c.l.b16 %v141
    %v642 = vunpack.c.h.b16 %v141
    %v643 = vunpack.c.l.b16 %v142
    %v644 = vunpack.c.h.b16 %v142
    %v645 = vunpack.c.l.b16 %v143
    %v646 = vunpack.c.h.b16 %v143
    %v647 = vunpack.c.l.b16 %v144
    %v648 = vunpack.c.h.b16 %v144
    %v649 = vunpack.c.l.b16 %v145
    %v650 = vunpack.c.h.b16 %v145
    %v651 = vunpack.c.l.b16 %v146
    %v652 = vunpack.c.h.b16 %v146
    %v653 = vunpack.c.l.b16 %v147
    %v654 = vunpack.c.h.b16 %v147
    %v655 = vunpack.c.l.b16 %v148
    %v656 = vunpack.c.h.b16 %v148
    %v657 = vunpack.c.l.b16 %v149
    %v658 = vunpack.c.h.b16 %v149
    %v659 = vunpack.c.l.b16 %v150
    %v660 = vunpack.c.h.b16 %v150
    %v661 = vunpack.c.l.b16 %v151
    %v662 = vunpack.c.h.b16 %v151
    %v663 = vunpack.c.l.b16 %v152
    %v664 = vunpack.c.h.b16 %v152
    %v665 = vunpack.c.l.b16 %v153
    %v666 = vunpack.c.h.b16 %v153
    %v667 = vunpack.c.l.b16 %v154
    %v668 = vunpack.c.h.b16 %v154
    %v669 = vunpack.c.l.b16 %v155
    %v670 = vunpack.c.h.b16 %v155
    %v671 = vunpack.c.l.b16 %v156
    %v672 = vunpack.c.h.b16 %v156
    %v673 = vunpack.c.l.b16 %v157
    %v674 = vunpack.c.h.b16 %v157
    %v675 = vunpack.c.l.b16 %v158
    %v676 = vunpack.c.h.b16 %v158
    %v677 = vunpack.c.l.b16 %v159
    %v678 = vunpack.c.h.b16 %v159
    %v679 = vunpack.c.l.b16 %v160
    %v680 = vunpack.c.h.b16 %v160
    %v681 = vunpack.c.l.b16 %v161
    %v682 = vunpack.c.h.b16 %v161
    %v683 = vunpack.c.l.b16 %v162
    %v684 = vunpack.c.h.b16 %v162
    %v685 = vunpack.c.l.b16 %v163
    %v686 = vunpack.c.h.b16 %v163
    %v687 = vunpack.c.l.b16 %v164
    %v688 = vunpack.c.h.b16 %v164
    %v689 = vunpack.c.l.b16 %v165
    %v690 = vunpack.c.h.b16 %v165
    %v691 = vunpack.c.l.b16 %v166
    %v692 = vunpack.c.h.b16 %v166
    %v693 = vunpack.c.l.b16 %v167
    %v694 = vunpack.c.h.b16 %v167
    %v695 = vunpack.c.l.b16 %v168
    %v696 = vunpack.c.h.b16 %v168
    %v697 = vunpack.c.l.b16 %v169
    %v698 = vunpack.c.h.b16 %v169
    %v699 = vunpack.c.l.b16 %v170
    %v700 = vunpack.c.h.b16 %v170
    %v701 = vunpack.c.l.b16 %v171
    %v702 = vunpack.c.h.b16 %v171
    %v703 = vunpack.c.l.b16 %v172
    %v704 = vunpack.c.h.b16 %v172
    %v705 = vunpack.c.l.b16 %v173
    %v706 = vunpack.c.h.b16 %v173
    %v707 = vunpack.c.l.b16 %v174
    %v708 = vunpack.c.h.b16 %v174
    %v709 = vunpack.c.l.b16 %v175
    %v710 = vunpack.c.h.b16 %v175
    %v711 = vunpack.c.l.b16 %v176
    %v712 = vunpack.c.h.b16 %v176
    %v713 = vunpack.c.l.b16 %v177
    %v714 = vunpack.c.h.b16 %v177
    %v715 = vunpack.c.l.b16 %v178
    %v716 = vunpack.c.h.b16 %v178
    %v717 = vunpack.c.l.b16 %v179
    %v718 = vunpack.c.h.b16 %v179
    %v719 = vunpack.c.l.b16 %v180
    %v720 = vunpack.c.h.b16 %v180
    %v721 = vunpack.c.l.b16 %v181
    %v722 = vunpack.c.h.b16 %v181
    %v723 = vunpack.c.l.b16 %v182
    %v724 = vunpack.c.h.b16 %v182
    %v725 = vunpack.c.l.b16 %v183
    %v726 = vunpack.c.h.b16 %v183
    %v727 = vunpack.c.l.b16 %v184
    %v728 = vunpack.c.h.b16 %v184
    %v729 = vunpack.c.l.b16 %v185
    %v730 = vunpack.c.h.b16 %v185
    %v731 = vunpack.c.l.b16 %v186
    %v732 = vunpack.c.h.b16 %v186
    %v733 = vunpack.c.l.b16 %v187
    %v734 = vunpack.c.h.b16 %v187
    %v735 = vunpack.c.l.b16 %v188
    %v736 = vunpack.c.h.b16 %v188
    %v737 = vunpack.c.l.b16 %v189
    %v738 = vunpack.c.h.b16 %v189
    %v739 = vunpack.c.l.b16 %v190
    %v740 = vunpack.c.h.b16 %v190
    %v741 = vunpack.c.l.b16 %v191
    %v742 = vunpack.c.h.b16 %v191
    %v743 = vunpack.c.l.b16 %v192
    %v744 = vunpack.c.h.b16 %v192
    %v745 = vunpack.c.l.b16 %v193
    %v746 = vunpack.c.h.b16 %v193
    %v747 = vunpack.c.l.b16 %v194
    %v748 = vunpack.c.h.b16 %v194
    %v749 = vunpack.c.l.b16 %v195
    %v750 = vunpack.c.h.b16 %v195
    %v751 = vunpack.c.l.b16 %v196
    %v752 = vunpack.c.h.b16 %v196
    %v753 = vunpack.c.l.b16 %v197
    %v754 = vunpack.c.h.b16 %v197
    %v755 = vunpack.c.l.b16 %v198
    %v756 = vunpack.c.h.b16 %v198
    %v757 = vunpack.c.l.b16 %v199
    %v758 = vunpack.c.h.b16 %v199
    %v759 = vunpack.c.l.b16 %v200
    %v760 = vunpack.c.h.b16 %v200
    %v761 = vunpack.c.l.b16 %v201
    %v762 = vunpack.c.h.b16 %v201
    %v763 = vunpack.c.l.b16 %v202
    %v764 = vunpack.c.h.b16 %v202
    %v765 = vunpack.c.l.b16 %v203
    %v766 = vunpack.c.h.b16 %v203
    %v767 = vunpack.c.l.b16 %v204
    %v768 = vunpack.c.h.b16 %v204
    %v769 = vunpack.c.l.b16 %v205
    %v770 = vunpack.c.h.b16 %v205
    %v771 = vunpack.c.l.b16 %v206
    %v772 = vunpack.c.h.b16 %v206
    %v773 = vunpack.c.l.b16 %v207
    %v774 = vunpack.c.h.b16 %v207
    %v775 = vunpack.c.l.b16 %v208
    %v776 = vunpack.c.h.b16 %v208
    %v777 = vunpack.c.l.b16 %v209
    %v778 = vunpack.c.h.b16 %v209
    %v779 = vunpack.c.l.b16 %v210
    %v780 = vunpack.c.h.b16 %v210
    %v781 = vunpack.c.l.b16 %v211
    %v782 = vunpack.c.h.b16 %v211
    %v783 = vunpack.c.l.b16 %v212
    %v784 = vunpack.c.h.b16 %v212
    %v785 = vunpack.c.l.b16 %v213
    %v786 = vunpack.c.h.b16 %v213
    %v787 = vunpack.c.l.b16 %v214
    %v788 = vunpack.c.h.b16 %v214
    %v789 = vunpack.c.l.b16 %v215
    %v790 = vunpack.c.h.b16 %v215
    %v791 = vunpack.c.l.b16 %v216
    %v792 = vunpack.c.h.b16 %v216
    %v793 = vunpack.c.l.b16 %v217
    %v794 = vunpack.c.h.b16 %v217
    %v795 = vunpack.c.l.b16 %v218
    %v796 = vunpack.c.h.b16 %v218
    %v797 = vunpack.c.l.b16 %v219
    %v798 = vunpack.c.h.b16 %v219
    %v799 = vunpack.c.l.b16 %v220
    %v800 = vunpack.c.h.b16 %v220
    %v801 = vunpack.c.l.b16 %v221
    %v802 = vunpack.c.h.b16 %v221
    %v803 = vunpack.c.l.b16 %v222
    %v804 = vunpack.c.h.b16 %v222
    %v805 = vunpack.c.l.b16 %v223
    %v806 = vunpack.c.h.b16 %v223
    %v807 = vunpack.c.l.b16 %v224
    %v808 = vunpack.c.h.b16 %v224
    %v809 = vunpack.c.l.b16 %v225
    %v810 = vunpack.c.h.b16 %v225
    %v811 = vunpack.c.l.b16 %v226
    %v812 = vunpack.c.h.b16 %v226
    %v813 = vunpack.c.l.b16 %v227
    %v814 = vunpack.c.h.b16 %v227
    %v815 = vunpack.c.l.b16 %v228
    %v816 = vunpack.c.h.b16 %v228
    %v817 = vunpack.c.l.b16 %v229
    %v818 = vunpack.c.h.b16 %v229
    %v819 = vunpack.c.l.b16 %v230
    %v820 = vunpack.c.h.b16 %v230
    %v821 = vunpack.c.l.b16 %v231
    %v822 = vunpack.c.h.b16 %v231
    %v823 = vunpack.c.l.b16 %v232
    %v824 = vunpack.c.h.b16 %v232
    %v825 = vunpack.c.l.b16 %v233
    %v826 = vunpack.c.h.b16 %v233
    %v827 = vunpack.c.l.b16 %v234
    %v828 = vunpack.c.h.b16 %v234
    %v829 = vunpack.c.l.b16 %v235
    %v830 = vunpack.c.h.b16 %v235
    %v831 = vunpack.c.l.b16 %v236
    %v832 = vunpack.c.h.b16 %v236
    %v833 = vunpack.c.l.b16 %v237
    %v834 = vunpack.c.h.b16 %v237
    %v835 = vunpack.c.l.b16 %v238
    %v836 = vunpack.c.h.b16 %v238
    %v837 = vunpack.c.l.b16 %v239
    %v838 = vunpack.c.h.b16 %v239
    %v839 = vunpack.c.l.b16 %v240
    %v840 = vunpack.c.h.b16 %v240
    %v841 = vunpack.c.l.b16 %v241
    %v842 = vunpack.c.h.b16 %v241
    %v843 = vunpack.c.l.b16 %v242
    %v844 = vunpack.c.h.b16 %v242
    %v845 = vunpack.c.l.b16 %v243
    %v846 = vunpack.c.h.b16 %v243
    %v847 = vunpack.c.l.b16 %v244
    %v848 = vunpack.c.h.b16 %v244
    %v849 = vunpack.c.l.b16 %v245
    %v850 = vunpack.c.h.b16 %v245
    %v851 = vunpack.c.l.b16 %v246
    %v852 = vunpack.c.h.b16 %v246
    %v853 = vunpack.c.l.b16 %v247
    %v854 = vunpack.c.h.b16 %v247
    %v855 = vunpack.c.l.b16 %v248
    %v856 = vunpack.c.h.b16 %v248
    %v857 = vunpack.c.l.b16 %v249
    %v858 = vunpack.c.h.b16 %v249
    %v859 = vunpack.c.l.b16 %v250
    %v860 = vunpack.c.h.b16 %v250
    %v861 = vpack.c.b16 %v473, %v469
    %v862 = vpack.c.b16 %v474, %v470
    %v863 = vpack.c.b16 %v475, %v471
    %v864 = vpack.c.b16 %v476, %v472
    %v865 = vpack.c.b16 %v481, %v477
    %v866 = vpack.c.b16 %v482, %v478
    %v867 = vpack.c.b16 %v483, %v479
    %v868 = vpack.c.b16 %v484, %v480
    %v869 = vpack.c.b16 %v489, %v485
    %v870 = vpack.c.b16 %v490, %v486
    %v871 = vpack.c.b16 %v491, %v487
    %v872 = vpack.c.b16 %v492, %v488
    %v873 = vpack.c.b16 %v497, %v493
    %v874 = vpack.c.b16 %v498, %v494
    %v875 = vpack.c.b16 %v499, %v495
    %v876 = vpack.c.b16 %v500, %v496
    %v877 = vpack.c.b16 %v505, %v501
    %v878 = vpack.c.b16 %v506, %v502
    %v879 = vpack.c.b16 %v507, %v503
    %v880 = vpack.c.b16 %v508, %v504
    %v881 = vpack.c.b16 %v513, %v509
    %v882 = vpack.c.b16 %v514, %v510
    %v883 = vpack.c.b16 %v515, %v511
    %v884 = vpack.c.b16 %v516, %v512
    %v885 = vpack.c.b16 %v521, %v517
    %v886 = vpack.c.b16 %v522, %v518
    %v887 = vpack.c.b16 %v523, %v519
    %v888 = vpack.c.b16 %v524, %v520
    %v889 = vpack.c.b16 %v529, %v525
    %v890 = vpack.c.b16 %v530, %v526
    %v891 = vpack.c.b16 %v531, %v527
    %v892 = vpack.c.b16 %v532, %v528
    %v893 = vpack.c.b16 %v537, %v533
    %v894 = vpack.c.b16 %v538, %v534
    %v895 = vpack.c.b16 %v539, %v535
    %v896 = vpack.c.b16 %v540, %v536
    %v897 = vpack.c.b16 %v545, %v541
    %v898 = vpack.c.b16 %v546, %v542
    %v899 = vpack.c.b16 %v547, %v543
    %v900 = vpack.c.b16 %v548, %v544
    %v901 = vpack.c.b16 %v553, %v549
    %v902 = vpack.c.b16 %v554, %v550
    %v903 = vpack.c.b16 %v555, %v551
    %v904 = vpack.c.b16 %v556, %v552
    %v905 = vpack.c.b16 %v561, %v557
    %v906 = vpack.c.b16 %v562, %v558
    %v907 = vpack.c.b16 %v563, %v559
    %v908 = vpack.c.b16 %v564, %v560
    %v909 = vpack.c.b16 %v569, %v565
    %v910 = vpack.c.b16 %v570, %v566
    %v911 = vpack.c.b16 %v571, %v567
    %v912 = vpack.c.b16 %v572, %v568
    %v913 = vpack.c.b16 %v577, %v573
    %v914 = vpack.c.b16 %v578, %v574
    %v915 = vpack.c.b16 %v579, %v575
    %v916 = vpack.c.b16 %v580, %v576
    %v917 = vpack.c.b16 %v585, %v581
    %v918 = vpack.c.b16 %v586, %v582
    %v919 = vpack.c.b16 %v587, %v583
    %v920 = vpack.c.b16 %v588, %v584
    %v921 = vpack.c.b16 %v593, %v589
    %v922 = vpack.c.b16 %v594, %v590
    %v923 = vpack.c.b16 %v595, %v591
    %v924 = vpack.c.b16 %v596, %v592
    %v925 = vpack.c.b16 %v601, %v597
    %v926 = vpack.c.b16 %v602, %v598
    %v927 = vpack.c.b16 %v603, %v599
    %v928 = vpack.c.b16 %v604, %v600
    %v929 = vpack.c.b16 %v609, %v605
    %v930 = vpack.c.b16 %v610, %v606
    %v931 = vpack.c.b16 %v611, %v607
    %v932 = vpack.c.b16 %v612, %v608
    %v933 = vpack.c.b16 %v617, %v613
    %v934 = vpack.c.b16 %v618, %v614
    %v935 = vpack.c.b16 %v619, %v615
    %v936 = vpack.c.b16 %v620, %v616
    %v937 = vpack.c.b16 %v625, %v621
    %v938 = vpack.c.b16 %v626, %v622
    %v939 = vpack.c.b16 %v627, %v623
    %v940 = vpack.c.b16 %v628, %v624
    %v941 = vpack.c.b16 %v633, %v629
    %v942 = vpack.c.b16 %v634, %v630
    %v943 = vpack.c.b16 %v635, %v631
    %v944 = vpack.c.b16 %v636, %v632
    %v945 = vpack.c.b16 %v641, %v637
    %v946 = vpack.c.b16 %v642, %v638
    %v947 = vpack.c.b16 %v643, %v639
    %v948 = vpack.c.b16 %v644, %v640
    %v949 = vpack.c.b16 %v649, %v645
    %v950 = vpack.c.b16 %v650, %v646
    %v951 = vpack.c.b16 %v651, %v647
    %v952 = vpack.c.b16 %v652, %v648
    %v953 = vpack.c.b16 %v657, %v653
    %v954 = vpack.c.b16 %v658, %v654
    %v955 = vpack.c.b16 %v659, %v655
    %v956 = vpack.c.b16 %v660, %v656
    %v957 = vpack.c.b16 %v665, %v661
    %v958 = vpack.c.b16 %v666, %v662
    %v959 = vpack.c.b16 %v667, %v663
    %v960 = vpack.c.b16 %v668, %v664
    %v961 = vpack.c.b16 %v673, %v669
    %v962 = vpack.c.b16 %v674, %v670
    %v963 = vpack.c.b16 %v675, %v671
    %v964 = vpack.c.b16 %v676, %v672
    %v965 = vpack.c.b16 %v681, %v677
    %v966 = vpack.c.b16 %v682, %v678
    %v967 = vpack.c.b16 %v683, %v679
    %v968 = vpack.c.b16 %v684, %v680
    %v969 = vpack.c.b16 %v689, %v685
    %v970 = vpack.c.b16 %v690, %v686
    %v971 = vpack.c.b16 %v691, %v687
    %v972 = vpack.c.b16 %v692, %v688
    %v973 = vpack.c.b16 %v697, %v693
    %v974 = vpack.c.b16 %v698, %v694
    %v975 = vpack.c.b16 %v699, %v695
    %v976 = vpack.c.b16 %v700, %v696
    %v977 = vpack.c.b16 %v705, %v701
    %v978 = vpack.c.b16 %v706, %v702
    %v979 = vpack.c.b16 %v707, %v703
    %v980 = vpack.c.b16 %v708, %v704
    %v981 = vpack.c.b16 %v713, %v709
    %v982 = vpack.c.b16 %v714, %v710
    %v983 = vpack.c.b16 %v715, %v711
    %v984 = vpack.c.b16 %v716, %v712
    %v985 = vpack.c.b16 %v721, %v717
    %v986 = vpack.c.b16 %v722, %v718
    %v987 = vpack.c.b16 %v723, %v719
    %v988 = vpack.c.b16 %v724, %v720
    %v989 = vpack.c.b16 %v729, %v725
    %v990 = vpack.c.b16 %v730, %v726
    %v991 = vpack.c.b16 %v731, %v727
    %v992 = vpack.c.b16 %v732, %v728
    %v993 = vpack.c.b16 %v737, %v733
    %v994 = vpack.c.b16 %v738, %v734
    %v995 = vpack.c.b16 %v739, %v735
    %v996 = vpack.c.b16 %v740, %v736
    %v997 = vpack.c.b16 %v745, %v741
    %v998 = vpack.c.b16 %v746, %v742
    %v999 = vpack.c.b16 %v747, %v743
    %v1000 = vpack.c.b16 %v748, %v744
    %v1001 = vpack.c.b16 %v753, %v749
    %v1002 = vpack.c.b16 %v754, %v750
    %v1003 = vpack.c.b16 %v755, %v751
    %v1004 = vpack.c.b16 %v756, %v752
    %v1005 = vpack.c.b16 %v761, %v757
    %v1006 = vpack.c.b16 %v762, %v758
    %v1007 = vpack.c.b16 %v763, %v759
    %v1008 = vpack.c.b16 %v764, %v760
    %v1009 = vpack.c.b16 %v769, %v765
    %v1010 = vpack.c.b16 %v770, %v766
    %v1011 = vpack.c.b16 %v771, %v767
    %v1012 = vpack.c.b16 %v772, %v768
    %v1013 = vpack.c.b16 %v777, %v773
    %v1014 = vpack.c.b16 %v778, %v774
    %v1015 = vpack.c.b16 %v779, %v775
    %v1016 = vpack.c.b16 %v780, %v776
    %v1017 = vpack.c.b16 %v785, %v781
    %v1018 = vpack.c.b16 %v786, %v782
    %v1019 = vpack.c.b16 %v787, %v783
    %v1020 = vpack.c.b16 %v788, %v784
    %v1021 = vpack.c.b16 %v793, %v789
    %v1022 = vpack.c.b16 %v794, %v790
    %v1023 = vpack.c.b16 %v795, %v791
    %v1024 = vpack.c.b16 %v796, %v792
    %v1025 = vpack.c.b16 %v801, %v797
    %v1026 = vpack.c.b16 %v802, %v798
    %v1027 = vpack.c.b16 %v803, %v799
    %v1028 = vpack.c.b16 %v804, %v800
    %v1029 = vpack.c.b16 %v809, %v805
    %v1030 = vpack.c.b16 %v810, %v806
    %v1031 = vpack.c.b16 %v811, %v807
    %v1032 = vpack.c.b16 %v812, %v808
    %v1033 = vpack.c.b16 %v817, %v813
    %v1034 = vpack.c.b16 %v818, %v814
    %v1035 = vpack.c.b16 %v819, %v815
    %v1036 = vpack.c.b16 %v820, %v816
    %v1037 = vpack.c.b16 %v825, %v821
    %v1038 = vpack.c.b16 %v826, %v822
    %v1039 = vpack.c.b16 %v827, %v823
    %v1040 = vpack.c.b16 %v828, %v824
    %v1041 = vpack.c.b16 %v833, %v829
    %v1042 = vpack.c.b16 %v834, %v830
    %v1043 = vpack.c.b16 %v835, %v831
    %v1044 = vpack.c.b16 %v836, %v832
    %v1045 = vpack.c.b16 %v841, %v837
    %v1046 = vpack.c.b16 %v842, %v838
    %v1047 = vpack.c.b16 %v843, %v839
    %v1048 = vpack.c.b16 %v844, %v840
    %v1049 = vpack.c.b16 %v849, %v845
    %v1050 = vpack.c.b16 %v850, %v846
    %v1051 = vpack.c.b16 %v851, %v847
    %v1052 = vpack.c.b16 %v852, %v848
    %v1053 = vpack.c.b16 %v857, %v853
    %v1054 = vpack.c.b16 %v858, %v854
    %v1055 = vpack.c.b16 %v859, %v855
    %v1056 = vpack.c.b16 %v860, %v856
    %vm1253 = vcmask 130048
    %v1255 = vsel %vm1253, %v54, 0
    %1257 = vmatprep.subr.bf16.mxu0 %v862
    %1258 = vmatpush1.bf16.msra.mxu0 %v861
    %1259 = vmatprep.subr.bf16.mxu0 %v866
    %1260 = vmatpush1.bf16.msra.mxu0 %v865
    %1261 = vmatprep.subr.bf16.mxu0 %v870
    %1262 = vmatpush1.bf16.msra.mxu0 %v869
    %1263 = vmatprep.subr.bf16.mxu0 %v874
    %1264 = vmatpush1.bf16.msra.mxu0 %v873
    %1265 = vmatprep.subr.bf16.mxu0 %v878
    %1266 = vmatpush1.bf16.msra.mxu0 %v877
    %1267 = vmatprep.subr.bf16.mxu0 %v882
    %1268 = vmatpush1.bf16.msra.mxu0 %v881
    %1269 = vmatprep.subr.bf16.mxu0 %v886
    %1270 = vmatpush1.bf16.msra.mxu0 %v885
    %1271 = vmatprep.subr.bf16.mxu0 %v890
    %1272 = vmatpush1.bf16.msra.mxu0 %v889
    %1273 = vmatprep.subr.bf16.mxu0 %v894
    %1274 = vmatpush1.bf16.msra.mxu0 %v893
    %1275 = vmatprep.subr.bf16.mxu0 %v898
    %1276 = vmatpush1.bf16.msra.mxu0 %v897
    %1277 = vmatprep.subr.bf16.mxu0 %v902
    %1278 = vmatpush1.bf16.msra.mxu0 %v901
    %1279 = vmatprep.subr.bf16.mxu0 %v906
    %1280 = vmatpush1.bf16.msra.mxu0 %v905
    %1281 = vmatprep.subr.bf16.mxu0 %v910
    %1282 = vmatpush1.bf16.msra.mxu0 %v909
    %1283 = vmatprep.subr.bf16.mxu0 %v914
    %1284 = vmatpush1.bf16.msra.mxu0 %v913
    %1285 = vmatprep.subr.bf16.mxu0 %v918
    %1286 = vmatpush1.bf16.msra.mxu0 %v917
    %1287 = vmatprep.subr.bf16.mxu0 %v922
    %1288 = vmatpush1.bf16.msra.mxu0 %v921
    %1289 = vmatprep.mubr.bf16.mxu0 %v49
    %1290 = vmatmul.mubr.bf16.gmra.mrb[0].mxu0 %v48
    %v1291 = vpop.f32.mrb[0].mxu0
    %v1292 = vadd.f32 %v256, %v1291
    %v1293 = vpop.f32.mrb[0].mxu0
    %v1294 = vadd.f32 %v260, %v1293
    %v1295 = vpop.f32.mrb[0].mxu0
    %v1296 = vadd.f32 %v256, %v1295
    %v1297 = vpop.f32.mrb[0].mxu0
    %v1298 = vadd.f32 %v260, %v1297
    %1299 = vdwg.mxu0
    %1300 = vmatprep.subr.bf16.mxu0 %v926
    %1301 = vmatpush1.bf16.msra.mxu0 %v925
    %1302 = vmatprep.subr.bf16.mxu0 %v930
    %1303 = vmatpush1.bf16.msra.mxu0 %v929
    %1304 = vmatprep.subr.bf16.mxu0 %v934
    %1305 = vmatpush1.bf16.msra.mxu0 %v933
    %1306 = vmatprep.subr.bf16.mxu0 %v938
    %1307 = vmatpush1.bf16.msra.mxu0 %v937
    %1308 = vmatprep.subr.bf16.mxu0 %v942
    %1309 = vmatpush1.bf16.msra.mxu0 %v941
    %1310 = vmatprep.subr.bf16.mxu0 %v946
    %1311 = vmatpush1.bf16.msra.mxu0 %v945
    %1312 = vmatprep.subr.bf16.mxu0 %v950
    %1313 = vmatpush1.bf16.msra.mxu0 %v949
    %1314 = vmatprep.subr.bf16.mxu0 %v954
    %1315 = vmatpush1.bf16.msra.mxu0 %v953
    %1316 = vmatprep.subr.bf16.mxu0 %v958
    %1317 = vmatpush1.bf16.msra.mxu0 %v957
    %1318 = vmatprep.subr.bf16.mxu0 %v962
    %1319 = vmatpush1.bf16.msra.mxu0 %v961
    %1320 = vmatprep.subr.bf16.mxu0 %v966
    %1321 = vmatpush1.bf16.msra.mxu0 %v965
    %1322 = vmatprep.subr.bf16.mxu0 %v970
    %1323 = vmatpush1.bf16.msra.mxu0 %v969
    %1324 = vmatprep.subr.bf16.mxu0 %v974
    %1325 = vmatpush1.bf16.msra.mxu0 %v973
    %1326 = vmatprep.subr.bf16.mxu0 %v978
    %1327 = vmatpush1.bf16.msra.mxu0 %v977
    %1328 = vmatprep.subr.bf16.mxu0 %v982
    %1329 = vmatpush1.bf16.msra.mxu0 %v981
    %1330 = vmatprep.subr.bf16.mxu0 %v986
    %1331 = vmatpush1.bf16.msra.mxu0 %v985
    %1332 = vmatprep.mubr.bf16.mxu0 %v51
    %1333 = vmatmul.mubr.bf16.gmra.mrb[0].mxu0 %v50
    %v1334 = vpop.f32.mrb[0].mxu0
    %v1335 = vadd.f32 %v1292, %v1334
    %v1336 = vpop.f32.mrb[0].mxu0
    %v1337 = vadd.f32 %v1294, %v1336
    %v1338 = vpop.f32.mrb[0].mxu0
    %v1339 = vadd.f32 %v1296, %v1338
    %v1340 = vpop.f32.mrb[0].mxu0
    %v1341 = vadd.f32 %v1298, %v1340
    %1342 = vdwg.mxu0
    %1343 = vmatprep.subr.bf16.mxu0 %v990
    %1344 = vmatpush1.bf16.msra.mxu0 %v989
    %1345 = vmatprep.subr.bf16.mxu0 %v994
    %1346 = vmatpush1.bf16.msra.mxu0 %v993
    %1347 = vmatprep.subr.bf16.mxu0 %v998
    %1348 = vmatpush1.bf16.msra.mxu0 %v997
    %1349 = vmatprep.subr.bf16.mxu0 %v1002
    %1350 = vmatpush1.bf16.msra.mxu0 %v1001
    %1351 = vmatprep.subr.bf16.mxu0 %v1006
    %1352 = vmatpush1.bf16.msra.mxu0 %v1005
    %1353 = vmatprep.subr.bf16.mxu0 %v1010
    %1354 = vmatpush1.bf16.msra.mxu0 %v1009
    %1355 = vmatprep.subr.bf16.mxu0 %v1014
    %1356 = vmatpush1.bf16.msra.mxu0 %v1013
    %1357 = vmatprep.subr.bf16.mxu0 %v1018
    %1358 = vmatpush1.bf16.msra.mxu0 %v1017
    %1359 = vmatprep.subr.bf16.mxu0 %v1022
    %1360 = vmatpush1.bf16.msra.mxu0 %v1021
    %1361 = vmatprep.subr.bf16.mxu0 %v1026
    %1362 = vmatpush1.bf16.msra.mxu0 %v1025
    %1363 = vmatprep.subr.bf16.mxu0 %v1030
    %1364 = vmatpush1.bf16.msra.mxu0 %v1029
    %1365 = vmatprep.subr.bf16.mxu0 %v1034
    %1366 = vmatpush1.bf16.msra.mxu0 %v1033
    %1367 = vmatprep.subr.bf16.mxu0 %v1038
    %1368 = vmatpush1.bf16.msra.mxu0 %v1037
    %1369 = vmatprep.subr.bf16.mxu0 %v1042
    %1370 = vmatpush1.bf16.msra.mxu0 %v1041
    %1371 = vmatprep.subr.bf16.mxu0 %v1046
    %1372 = vmatpush1.bf16.msra.mxu0 %v1045
    %1373 = vmatprep.subr.bf16.mxu0 %v1050
    %1374 = vmatpush1.bf16.msra.mxu0 %v1049
    %1375 = vmatprep.mubr.bf16.mxu0 %v53
    %1376 = vmatmul.mubr.bf16.gmra.mrb[0].mxu0 %v52
    %v1377 = vpop.f32.mrb[0].mxu0
    %v1378 = vadd.f32 %v1335, %v1377
    %v1379 = vpop.f32.mrb[0].mxu0
    %v1380 = vadd.f32 %v1337, %v1379
    %v1381 = vpop.f32.mrb[0].mxu0
    %v1382 = vadd.f32 %v1339, %v1381
    %v1383 = vpop.f32.mrb[0].mxu0
    %v1384 = vadd.f32 %v1341, %v1383
    %1385 = vdwg.mxu0
    %1386 = vmatprep.subr.bf16.mxu0 %v1054
    %1387 = vmatpush1.bf16.msra.mxu0 %v1053
    %1388 = vmatprep.subr.bf16.mxu0 0
    %1389 = vmatpush1.bf16.msra.mxu0 0
    %1390 = vmatprep.subr.bf16.mxu0 0
    %1391 = vmatpush1.bf16.msra.mxu0 0
    %1392 = vmatprep.subr.bf16.mxu0 0
    %1393 = vmatpush1.bf16.msra.mxu0 0
    %1394 = vmatprep.subr.bf16.mxu0 0
    %1395 = vmatpush1.bf16.msra.mxu0 0
    %1396 = vmatprep.subr.bf16.mxu0 0
    %1397 = vmatpush1.bf16.msra.mxu0 0
    %1398 = vmatprep.subr.bf16.mxu0 0
    %1399 = vmatpush1.bf16.msra.mxu0 0
    %1400 = vmatprep.subr.bf16.mxu0 0
    %1401 = vmatpush1.bf16.msra.mxu0 0
    %1402 = vmatprep.subr.bf16.mxu0 0
    %1403 = vmatpush1.bf16.msra.mxu0 0
    %1404 = vmatprep.subr.bf16.mxu0 0
    %1405 = vmatpush1.bf16.msra.mxu0 0
    %1406 = vmatprep.subr.bf16.mxu0 0
    %1407 = vmatpush1.bf16.msra.mxu0 0
    %1408 = vmatprep.subr.bf16.mxu0 0
    %1409 = vmatpush1.bf16.msra.mxu0 0
    %1410 = vmatprep.subr.bf16.mxu0 0
    %1411 = vmatpush1.bf16.msra.mxu0 0
    %1412 = vmatprep.subr.bf16.mxu0 0
    %1413 = vmatpush1.bf16.msra.mxu0 0
    %1414 = vmatprep.subr.bf16.mxu0 0
    %1415 = vmatpush1.bf16.msra.mxu0 0
    %1416 = vmatprep.subr.bf16.mxu0 0
    %1417 = vmatpush1.bf16.msra.mxu0 0
    %1418 = vmatprep.mubr.bf16.mxu0 0
    %1419 = vmatmul.mubr.bf16.gmra.mrb[0].mxu0 %v1255
    %v1420 = vpop.f32.mrb[0].mxu0
    %v1421 = vadd.f32 %v1378, %v1420
    %v1422 = vpop.f32.mrb[0].mxu0
    %v1423 = vadd.f32 %v1380, %v1422
    %v1424 = vpop.f32.mrb[0].mxu0
    %v1425 = vadd.f32 %v1382, %v1424
    %v1426 = vpop.f32.mrb[0].mxu0
    %v1427 = vadd.f32 %v1384, %v1426
    %1428 = vdwg.mxu0
    %1429 = vmatprep.subr.bf16.mxu0 %v864
    %1430 = vmatpush1.bf16.msra.mxu0 %v863
    %1431 = vmatprep.subr.bf16.mxu0 %v868
    %1432 = vmatpush1.bf16.msra.mxu0 %v867
    %1433 = vmatprep.subr.bf16.mxu0 %v872
    %1434 = vmatpush1.bf16.msra.mxu0 %v871
    %1435 = vmatprep.subr.bf16.mxu0 %v876
    %1436 = vmatpush1.bf16.msra.mxu0 %v875
    %1437 = vmatprep.subr.bf16.mxu0 %v880
    %1438 = vmatpush1.bf16.msra.mxu0 %v879
    %1439 = vmatprep.subr.bf16.mxu0 %v884
    %1440 = vmatpush1.bf16.msra.mxu0 %v883
    %1441 = vmatprep.subr.bf16.mxu0 %v888
    %1442 = vmatpush1.bf16.msra.mxu0 %v887
    %1443 = vmatprep.subr.bf16.mxu0 %v892
    %1444 = vmatpush1.bf16.msra.mxu0 %v891
    %1445 = vmatprep.subr.bf16.mxu0 %v896
    %1446 = vmatpush1.bf16.msra.mxu0 %v895
    %1447 = vmatprep.subr.bf16.mxu0 %v900
    %1448 = vmatpush1.bf16.msra.mxu0 %v899
    %1449 = vmatprep.subr.bf16.mxu0 %v904
    %1450 = vmatpush1.bf16.msra.mxu0 %v903
    %1451 = vmatprep.subr.bf16.mxu0 %v908
    %1452 = vmatpush1.bf16.msra.mxu0 %v907
    %1453 = vmatprep.subr.bf16.mxu0 %v912
    %1454 = vmatpush1.bf16.msra.mxu0 %v911
    %1455 = vmatprep.subr.bf16.mxu0 %v916
    %1456 = vmatpush1.bf16.msra.mxu0 %v915
    %1457 = vmatprep.subr.bf16.mxu0 %v920
    %1458 = vmatpush1.bf16.msra.mxu0 %v919
    %1459 = vmatprep.subr.bf16.mxu0 %v924
    %1460 = vmatpush1.bf16.msra.mxu0 %v923
    %1461 = vmatprep.mubr.bf16.mxu0 %v49
    %1462 = vmatmul.mubr.bf16.gmra.mrb[0].mxu0 %v48
    %v1463 = vpop.f32.mrb[0].mxu0
    %v1464 = vadd.f32 %v264, %v1463
    %v1465 = vpop.f32.mrb[0].mxu0
    %v1466 = vadd.f32 %v268, %v1465
    %v1467 = vpop.f32.mrb[0].mxu0
    %v1468 = vadd.f32 %v264, %v1467
    %v1469 = vpop.f32.mrb[0].mxu0
    %v1470 = vadd.f32 %v268, %v1469
    %1471 = vdwg.mxu0
    %1472 = vmatprep.subr.bf16.mxu0 %v928
    %1473 = vmatpush1.bf16.msra.mxu0 %v927
    %1474 = vmatprep.subr.bf16.mxu0 %v932
    %1475 = vmatpush1.bf16.msra.mxu0 %v931
    %1476 = vmatprep.subr.bf16.mxu0 %v936
    %1477 = vmatpush1.bf16.msra.mxu0 %v935
    %1478 = vmatprep.subr.bf16.mxu0 %v940
    %1479 = vmatpush1.bf16.msra.mxu0 %v939
    %1480 = vmatprep.subr.bf16.mxu0 %v944
    %1481 = vmatpush1.bf16.msra.mxu0 %v943
    %1482 = vmatprep.subr.bf16.mxu0 %v948
    %1483 = vmatpush1.bf16.msra.mxu0 %v947
    %1484 = vmatprep.subr.bf16.mxu0 %v952
    %1485 = vmatpush1.bf16.msra.mxu0 %v951
    %1486 = vmatprep.subr.bf16.mxu0 %v956
    %1487 = vmatpush1.bf16.msra.mxu0 %v955
    %1488 = vmatprep.subr.bf16.mxu0 %v960
    %1489 = vmatpush1.bf16.msra.mxu0 %v959
    %1490 = vmatprep.subr.bf16.mxu0 %v964
    %1491 = vmatpush1.bf16.msra.mxu0 %v963
    %1492 = vmatprep.subr.bf16.mxu0 %v968
    %1493 = vmatpush1.bf16.msra.mxu0 %v967
    %1494 = vmatprep.subr.bf16.mxu0 %v972
    %1495 = vmatpush1.bf16.msra.mxu0 %v971
    %1496 = vmatprep.subr.bf16.mxu0 %v976
    %1497 = vmatpush1.bf16.msra.mxu0 %v975
    %1498 = vmatprep.subr.bf16.mxu0 %v980
    %1499 = vmatpush1.bf16.msra.mxu0 %v979
    %1500 = vmatprep.subr.bf16.mxu0 %v984
    %1501 = vmatpush1.bf16.msra.mxu0 %v983
    %1502 = vmatprep.subr.bf16.mxu0 %v988
    %1503 = vmatpush1.bf16.msra.mxu0 %v987
    %1504 = vmatprep.mubr.bf16.mxu0 %v51
    %1505 = vmatmul.mubr.bf16.gmra.mrb[0].mxu0 %v50
    %v1506 = vpop.f32.mrb[0].mxu0
    %v1507 = vadd.f32 %v1464, %v1506
    %v1508 = vpop.f32.mrb[0].mxu0
    %v1509 = vadd.f32 %v1466, %v1508
    %v1510 = vpop.f32.mrb[0].mxu0
    %v1511 = vadd.f32 %v1468, %v1510
    %v1512 = vpop.f32.mrb[0].mxu0
    %v1513 = vadd.f32 %v1470, %v1512
    %1514 = vdwg.mxu0
    %1515 = vmatprep.subr.bf16.mxu0 %v992
    %1516 = vmatpush1.bf16.msra.mxu0 %v991
    %1517 = vmatprep.subr.bf16.mxu0 %v996
    %1518 = vmatpush1.bf16.msra.mxu0 %v995
    %1519 = vmatprep.subr.bf16.mxu0 %v1000
    %1520 = vmatpush1.bf16.msra.mxu0 %v999
    %1521 = vmatprep.subr.bf16.mxu0 %v1004
    %1522 = vmatpush1.bf16.msra.mxu0 %v1003
    %1523 = vmatprep.subr.bf16.mxu0 %v1008
    %1524 = vmatpush1.bf16.msra.mxu0 %v1007
    %1525 = vmatprep.subr.bf16.mxu0 %v1012
    %1526 = vmatpush1.bf16.msra.mxu0 %v1011
    %1527 = vmatprep.subr.bf16.mxu0 %v1016
    %1528 = vmatpush1.bf16.msra.mxu0 %v1015
    %1529 = vmatprep.subr.bf16.mxu0 %v1020
    %1530 = vmatpush1.bf16.msra.mxu0 %v1019
    %1531 = vmatprep.subr.bf16.mxu0 %v1024
    %1532 = vmatpush1.bf16.msra.mxu0 %v1023
    %1533 = vmatprep.subr.bf16.mxu0 %v1028
    %1534 = vmatpush1.bf16.msra.mxu0 %v1027
    %1535 = vmatprep.subr.bf16.mxu0 %v1032
    %1536 = vmatpush1.bf16.msra.mxu0 %v1031
    %1537 = vmatprep.subr.bf16.mxu0 %v1036
    %1538 = vmatpush1.bf16.msra.mxu0 %v1035
    %1539 = vmatprep.subr.bf16.mxu0 %v1040
    %1540 = vmatpush1.bf16.msra.mxu0 %v1039
    %1541 = vmatprep.subr.bf16.mxu0 %v1044
    %1542 = vmatpush1.bf16.msra.mxu0 %v1043
    %1543 = vmatprep.subr.bf16.mxu0 %v1048
    %1544 = vmatpush1.bf16.msra.mxu0 %v1047
    %1545 = vmatprep.subr.bf16.mxu0 %v1052
    %1546 = vmatpush1.bf16.msra.mxu0 %v1051
    %1547 = vmatprep.mubr.bf16.mxu0 %v53
    %1548 = vmatmul.mubr.bf16.gmra.mrb[0].mxu0 %v52
    %v1549 = vpop.f32.mrb[0].mxu0
    %v1550 = vadd.f32 %v1507, %v1549
    %v1551 = vpop.f32.mrb[0].mxu0
    %v1552 = vadd.f32 %v1509, %v1551
    %v1553 = vpop.f32.mrb[0].mxu0
    %v1554 = vadd.f32 %v1511, %v1553
    %v1555 = vpop.f32.mrb[0].mxu0
    %v1556 = vadd.f32 %v1513, %v1555
    %1557 = vdwg.mxu0
    %1558 = vmatprep.subr.bf16.mxu0 %v1056
    %1559 = vmatpush1.bf16.msra.mxu0 %v1055
    %1560 = vmatprep.subr.bf16.mxu0 0
    %1561 = vmatpush1.bf16.msra.mxu0 0
    %1562 = vmatprep.subr.bf16.mxu0 0
    %1563 = vmatpush1.bf16.msra.mxu0 0
    %1564 = vmatprep.subr.bf16.mxu0 0
    %1565 = vmatpush1.bf16.msra.mxu0 0
    %1566 = vmatprep.subr.bf16.mxu0 0
    %1567 = vmatpush1.bf16.msra.mxu0 0
    %1568 = vmatprep.subr.bf16.mxu0 0
    %1569 = vmatpush1.bf16.msra.mxu0 0
    %1570 = vmatprep.subr.bf16.mxu0 0
    %1571 = vmatpush1.bf16.msra.mxu0 0
    %1572 = vmatprep.subr.bf16.mxu0 0
    %1573 = vmatpush1.bf16.msra.mxu0 0
    %1574 = vmatprep.subr.bf16.mxu0 0
    %1575 = vmatpush1.bf16.msra.mxu0 0
    %1576 = vmatprep.subr.bf16.mxu0 0
    %1577 = vmatpush1.bf16.msra.mxu0 0
    %1578 = vmatprep.subr.bf16.mxu0 0
    %1579 = vmatpush1.bf16.msra.mxu0 0
    %1580 = vmatprep.subr.bf16.mxu0 0
    %1581 = vmatpush1.bf16.msra.mxu0 0
    %1582 = vmatprep.subr.bf16.mxu0 0
    %1583 = vmatpush1.bf16.msra.mxu0 0
    %1584 = vmatprep.subr.bf16.mxu0 0
    %1585 = vmatpush1.bf16.msra.mxu0 0
    %1586 = vmatprep.subr.bf16.mxu0 0
    %1587 = vmatpush1.bf16.msra.mxu0 0
    %1588 = vmatprep.subr.bf16.mxu0 0
    %1589 = vmatpush1.bf16.msra.mxu0 0
    %1590 = vmatprep.mubr.bf16.mxu0 0
    %1591 = vmatmul.mubr.bf16.gmra.mrb[0].mxu0 %v1255
    %v1592 = vpop.f32.mrb[0].mxu0
    %v1593 = vadd.f32 %v1550, %v1592
    %v1594 = vpop.f32.mrb[0].mxu0
    %v1595 = vadd.f32 %v1552, %v1594
    %v1596 = vpop.f32.mrb[0].mxu0
    %v1597 = vadd.f32 %v1554, %v1596
    %v1598 = vpop.f32.mrb[0].mxu0
    %v1599 = vadd.f32 %v1556, %v1598
    %1600 = vdwg.mxu0
    %v1601 = vmax.f32 %v1421, 0.0
    %v1602 = vmax.f32 %v1423, 0.0
    %v1603 = vmax.f32 %v1593, 0.0
    %v1604 = vmax.f32 %v1595, 0.0
    %v1605 = vmax.f32 %v1425, 0.0
    %v1606 = vmax.f32 %v1427, 0.0
    %v1607 = vmax.f32 %v1597, 0.0
    %v1608 = vmax.f32 %v1599, 0.0
    %v1609 = vpack.c.bf16 %v1605, %v1601
    %v1610 = vpack.c.bf16 %v1606, %v1602
    %v1611 = vpack.c.bf16 %v1607, %v1603
    %v1612 = vpack.c.bf16 %v1608, %v1604
    %v1613 = vld [vmem:[%s3] sm:$0xf]
    %v1614 = vld [vmem:[%s3 + $0x4] sm:$0xf]
    %v1615 = vld [vmem:[%s3 + $0x8] sm:$0xf]
    %v1616 = vld [vmem:[%s3 + $0xc] sm:$0xf]
    %v1617 = vld [vmem:[%s3 + $0x10] sm:$0xf]
    %v1618 = vld [vmem:[%s3 + $0x14] sm:$0xf]
    %v1619 = vld [vmem:[%s3 + $0x18] sm:$0xf]
    %v1620 = vld [vmem:[%s3 + $0x1c] sm:$0xf]
    %v1621 = vld [vmem:[%s3 + $0x20] sm:$0xf]
    %v1622 = vld [vmem:[%s3 + $0x24] sm:$0xf]
    %v1623 = vld [vmem:[%s3 + $0x28] sm:$0xf]
    %v1624 = vld [vmem:[%s3 + $0x2c] sm:$0xf]
    %v1625 = vld [vmem:[%s3 + $0x30] sm:$0xf]
    %v1626 = vld [vmem:[%s3 + $0x34] sm:$0xf]
    %v1627 = vld [vmem:[%s3 + $0x38] sm:$0xf]
    %v1628 = vld [vmem:[%s3 + $0x3c] sm:$0xf]
    %v1629 = vld [vmem:[%s3 + $0x40] sm:$0xf]
    %v1630 = vld [vmem:[%s3 + $0x44] sm:$0xf]
    %v1631 = vld [vmem:[%s3 + $0x48] sm:$0xf]
    %v1632 = vld [vmem:[%s3 + $0x4c] sm:$0xf]
    %v1633 = vld [vmem:[%s3 + $0x50] sm:$0xf]
    %v1634 = vld [vmem:[%s3 + $0x54] sm:$0xf]
    %v1635 = vld [vmem:[%s3 + $0x58] sm:$0xf]
    %v1636 = vld [vmem:[%s3 + $0x5c] sm:$0xf]
    %v1637 = vld [vmem:[%s3 + $0x60] sm:$0xf]
    %v1638 = vld [vmem:[%s3 + $0x64] sm:$0xf]
    %v1639 = vld [vmem:[%s3 + $0x68] sm:$0xf]
    %v1640 = vld [vmem:[%s3 + $0x6c] sm:$0xf]
    %v1641 = vld [vmem:[%s3 + $0x70] sm:$0xf]
    %v1642 = vld [vmem:[%s3 + $0x74] sm:$0xf]
    %v1643 = vld [vmem:[%s3 + $0x78] sm:$0xf]
    %v1644 = vld [vmem:[%s3 + $0x7c] sm:$0xf]
    %v1645 = vld [vmem:[%s3 + $0x80] sm:$0xf]
    %v1646 = vld [vmem:[%s3 + $0x84] sm:$0xf]
    %v1647 = vld [vmem:[%s3 + $0x88] sm:$0xf]
    %v1648 = vld [vmem:[%s3 + $0x8c] sm:$0xf]
    %v1649 = vld [vmem:[%s3 + $0x90] sm:$0xf]
    %v1650 = vld [vmem:[%s3 + $0x94] sm:$0xf]
    %v1651 = vld [vmem:[%s3 + $0x98] sm:$0xf]
    %v1652 = vld [vmem:[%s3 + $0x9c] sm:$0xf]
    %v1653 = vld [vmem:[%s3 + $0xa0] sm:$0xf]
    %v1654 = vld [vmem:[%s3 + $0xa4] sm:$0xf]
    %v1655 = vld [vmem:[%s3 + $0xa8] sm:$0xf]
    %v1656 = vld [vmem:[%s3 + $0xac] sm:$0xf]
    %v1657 = vld [vmem:[%s3 + $0xb0] sm:$0xf]
    %v1658 = vld [vmem:[%s3 + $0xb4] sm:$0xf]
    %v1659 = vld [vmem:[%s3 + $0xb8] sm:$0xf]
    %v1660 = vld [vmem:[%s3 + $0xbc] sm:$0xf]
    %v1661 = vld [vmem:[%s3 + $0xc0] sm:$0xf]
    %v1662 = vld [vmem:[%s3 + $0xc4] sm:$0xf]
    %v1663 = vld [vmem:[%s3 + $0xc8] sm:$0xf]
    %v1664 = vld [vmem:[%s3 + $0xcc] sm:$0xf]
    %v1665 = vld [vmem:[%s3 + $0xd0] sm:$0xf]
    %v1666 = vld [vmem:[%s3 + $0xd4] sm:$0xf]
    %v1667 = vld [vmem:[%s3 + $0xd8] sm:$0xf]
    %v1668 = vld [vmem:[%s3 + $0xdc] sm:$0xf]
    %v1669 = vld [vmem:[%s3 + $0xe0] sm:$0xf]
    %v1670 = vld [vmem:[%s3 + $0xe4] sm:$0xf]
    %v1671 = vld [vmem:[%s3 + $0xe8] sm:$0xf]
    %v1672 = vld [vmem:[%s3 + $0xec] sm:$0xf]
    %v1673 = vld [vmem:[%s3 + $0xf0] sm:$0xf]
    %v1674 = vld [vmem:[%s3 + $0xf4] sm:$0xf]
    %v1675 = vld [vmem:[%s3 + $0xf8] sm:$0xf]
    %v1676 = vld [vmem:[%s3 + $0xfc] sm:$0xf]
    %v1677 = vld [vmem:[%s4] sm:$0x1]
    %v1679 = vlaneseq
    %v1680 = vshrl.u32 %v1679, 7
    %v1681 = vsub.s32 0, %v1680
    %v1682 = vrot.slane %v1677, %v1681
    %v1748 = vunpack.c.l.b16 %v1613
    %v1749 = vunpack.c.l.b16 %v1614
    %v1750 = vunpack.c.l.b16 %v1615
    %v1751 = vunpack.c.l.b16 %v1616
    %v1752 = vunpack.c.l.b16 %v1617
    %v1753 = vunpack.c.l.b16 %v1618
    %v1754 = vunpack.c.l.b16 %v1619
    %v1755 = vunpack.c.l.b16 %v1620
    %v1756 = vunpack.c.l.b16 %v1621
    %v1757 = vunpack.c.l.b16 %v1622
    %v1758 = vunpack.c.l.b16 %v1623
    %v1759 = vunpack.c.l.b16 %v1624
    %v1760 = vunpack.c.l.b16 %v1625
    %v1761 = vunpack.c.l.b16 %v1626
    %v1762 = vunpack.c.l.b16 %v1627
    %v1763 = vunpack.c.l.b16 %v1628
    %v1764 = vunpack.c.l.b16 %v1629
    %v1765 = vunpack.c.l.b16 %v1630
    %v1766 = vunpack.c.l.b16 %v1631
    %v1767 = vunpack.c.l.b16 %v1632
    %v1768 = vunpack.c.l.b16 %v1633
    %v1769 = vunpack.c.l.b16 %v1634
    %v1770 = vunpack.c.l.b16 %v1635
    %v1771 = vunpack.c.l.b16 %v1636
    %v1772 = vunpack.c.l.b16 %v1637
    %v1773 = vunpack.c.l.b16 %v1638
    %v1774 = vunpack.c.l.b16 %v1639
    %v1775 = vunpack.c.l.b16 %v1640
    %v1776 = vunpack.c.l.b16 %v1641
    %v1777 = vunpack.c.l.b16 %v1642
    %v1778 = vunpack.c.l.b16 %v1643
    %v1779 = vunpack.c.l.b16 %v1644
    %v1780 = vunpack.c.l.b16 %v1645
    %v1781 = vunpack.c.l.b16 %v1646
    %v1782 = vunpack.c.l.b16 %v1647
    %v1783 = vunpack.c.l.b16 %v1648
    %v1784 = vunpack.c.l.b16 %v1649
    %v1785 = vunpack.c.l.b16 %v1650
    %v1786 = vunpack.c.l.b16 %v1651
    %v1787 = vunpack.c.l.b16 %v1652
    %v1788 = vunpack.c.l.b16 %v1653
    %v1789 = vunpack.c.l.b16 %v1654
    %v1790 = vunpack.c.l.b16 %v1655
    %v1791 = vunpack.c.l.b16 %v1656
    %v1792 = vunpack.c.l.b16 %v1657
    %v1793 = vunpack.c.l.b16 %v1658
    %v1794 = vunpack.c.l.b16 %v1659
    %v1795 = vunpack.c.l.b16 %v1660
    %v1796 = vunpack.c.l.b16 %v1661
    %v1797 = vunpack.c.l.b16 %v1662
    %v1798 = vunpack.c.l.b16 %v1663
    %v1799 = vunpack.c.l.b16 %v1664
    %v1800 = vunpack.c.l.b16 %v1665
    %v1801 = vunpack.c.l.b16 %v1666
    %v1802 = vunpack.c.l.b16 %v1667
    %v1803 = vunpack.c.l.b16 %v1668
    %v1804 = vunpack.c.l.b16 %v1669
    %v1805 = vunpack.c.l.b16 %v1670
    %v1806 = vunpack.c.l.b16 %v1671
    %v1807 = vunpack.c.l.b16 %v1672
    %v1808 = vunpack.c.l.b16 %v1673
    %v1809 = vunpack.c.l.b16 %v1674
    %v1810 = vunpack.c.l.b16 %v1675
    %v1811 = vunpack.c.l.b16 %v1676
    %v1812 = vpack.c.b16 %v1749, %v1748
    %v1813 = vpack.c.b16 %v1751, %v1750
    %v1814 = vpack.c.b16 %v1753, %v1752
    %v1815 = vpack.c.b16 %v1755, %v1754
    %v1816 = vpack.c.b16 %v1757, %v1756
    %v1817 = vpack.c.b16 %v1759, %v1758
    %v1818 = vpack.c.b16 %v1761, %v1760
    %v1819 = vpack.c.b16 %v1763, %v1762
    %v1820 = vpack.c.b16 %v1765, %v1764
    %v1821 = vpack.c.b16 %v1767, %v1766
    %v1822 = vpack.c.b16 %v1769, %v1768
    %v1823 = vpack.c.b16 %v1771, %v1770
    %v1824 = vpack.c.b16 %v1773, %v1772
    %v1825 = vpack.c.b16 %v1775, %v1774
    %v1826 = vpack.c.b16 %v1777, %v1776
    %v1827 = vpack.c.b16 %v1779, %v1778
    %v1828 = vpack.c.b16 %v1781, %v1780
    %v1829 = vpack.c.b16 %v1783, %v1782
    %v1830 = vpack.c.b16 %v1785, %v1784
    %v1831 = vpack.c.b16 %v1787, %v1786
    %v1832 = vpack.c.b16 %v1789, %v1788
    %v1833 = vpack.c.b16 %v1791, %v1790
    %v1834 = vpack.c.b16 %v1793, %v1792
    %v1835 = vpack.c.b16 %v1795, %v1794
    %v1836 = vpack.c.b16 %v1797, %v1796
    %v1837 = vpack.c.b16 %v1799, %v1798
    %v1838 = vpack.c.b16 %v1801, %v1800
    %v1839 = vpack.c.b16 %v1803, %v1802
    %v1840 = vpack.c.b16 %v1805, %v1804
    %v1841 = vpack.c.b16 %v1807, %v1806
    %v1842 = vpack.c.b16 %v1809, %v1808
    %v1843 = vpack.c.b16 %v1811, %v1810
    %1876 = vmatprep.subr.bf16.mxu0 0
    %1877 = vmatpush1.bf16.msra.mxu0 %v1812
    %1878 = vmatprep.subr.bf16.mxu0 0
    %1879 = vmatpush1.bf16.msra.mxu0 %v1813
    %1880 = vmatprep.subr.bf16.mxu0 0
    %1881 = vmatpush1.bf16.msra.mxu0 %v1814
    %1882 = vmatprep.subr.bf16.mxu0 0
    %1883 = vmatpush1.bf16.msra.mxu0 %v1815
    %1884 = vmatprep.subr.bf16.mxu0 0
    %1885 = vmatpush1.bf16.msra.mxu0 %v1816
    %1886 = vmatprep.subr.bf16.mxu0 0
    %1887 = vmatpush1.bf16.msra.mxu0 %v1817
    %1888 = vmatprep.subr.bf16.mxu0 0
    %1889 = vmatpush1.bf16.msra.mxu0 %v1818
    %1890 = vmatprep.subr.bf16.mxu0 0
    %1891 = vmatpush1.bf16.msra.mxu0 %v1819
    %1892 = vmatprep.subr.bf16.mxu0 0
    %1893 = vmatpush1.bf16.msra.mxu0 %v1820
    %1894 = vmatprep.subr.bf16.mxu0 0
    %1895 = vmatpush1.bf16.msra.mxu0 %v1821
    %1896 = vmatprep.subr.bf16.mxu0 0
    %1897 = vmatpush1.bf16.msra.mxu0 %v1822
    %1898 = vmatprep.subr.bf16.mxu0 0
    %1899 = vmatpush1.bf16.msra.mxu0 %v1823
    %1900 = vmatprep.subr.bf16.mxu0 0
    %1901 = vmatpush1.bf16.msra.mxu0 %v1824
    %1902 = vmatprep.subr.bf16.mxu0 0
    %1903 = vmatpush1.bf16.msra.mxu0 %v1825
    %1904 = vmatprep.subr.bf16.mxu0 0
    %1905 = vmatpush1.bf16.msra.mxu0 %v1826
    %1906 = vmatprep.subr.bf16.mxu0 0
    %1907 = vmatpush1.bf16.msra.mxu0 %v1827
    %1908 = vmatprep.mubr.bf16.mxu0 %v1610
    %1909 = vmatmul.mubr.bf16.gmra.mrb[0].mxu0 %v1609
    %v1910 = vpop.f32.mrb[0].mxu0
    %v1911 = vadd.f32 %v1682, %v1910
    %v1912 = vpop.f32.mrb[0].mxu0
    %v1913 = vpop.f32.mrb[0].mxu0
    %v1914 = vadd.f32 %v1682, %v1913
    %v1915 = vpop.f32.mrb[0].mxu0
    %1916 = vdwg.mxu0
    %1917 = vmatprep.subr.bf16.mxu0 0
    %1918 = vmatpush1.bf16.msra.mxu0 %v1828
    %1919 = vmatprep.subr.bf16.mxu0 0
    %1920 = vmatpush1.bf16.msra.mxu0 %v1829
    %1921 = vmatprep.subr.bf16.mxu0 0
    %1922 = vmatpush1.bf16.msra.mxu0 %v1830
    %1923 = vmatprep.subr.bf16.mxu0 0
    %1924 = vmatpush1.bf16.msra.mxu0 %v1831
    %1925 = vmatprep.subr.bf16.mxu0 0
    %1926 = vmatpush1.bf16.msra.mxu0 %v1832
    %1927 = vmatprep.subr.bf16.mxu0 0
    %1928 = vmatpush1.bf16.msra.mxu0 %v1833
    %1929 = vmatprep.subr.bf16.mxu0 0
    %1930 = vmatpush1.bf16.msra.mxu0 %v1834
    %1931 = vmatprep.subr.bf16.mxu0 0
    %1932 = vmatpush1.bf16.msra.mxu0 %v1835
    %1933 = vmatprep.subr.bf16.mxu0 0
    %1934 = vmatpush1.bf16.msra.mxu0 %v1836
    %1935 = vmatprep.subr.bf16.mxu0 0
    %1936 = vmatpush1.bf16.msra.mxu0 %v1837
    %1937 = vmatprep.subr.bf16.mxu0 0
    %1938 = vmatpush1.bf16.msra.mxu0 %v1838
    %1939 = vmatprep.subr.bf16.mxu0 0
    %1940 = vmatpush1.bf16.msra.mxu0 %v1839
    %1941 = vmatprep.subr.bf16.mxu0 0
    %1942 = vmatpush1.bf16.msra.mxu0 %v1840
    %1943 = vmatprep.subr.bf16.mxu0 0
    %1944 = vmatpush1.bf16.msra.mxu0 %v1841
    %1945 = vmatprep.subr.bf16.mxu0 0
    %1946 = vmatpush1.bf16.msra.mxu0 %v1842
    %1947 = vmatprep.subr.bf16.mxu0 0
    %1948 = vmatpush1.bf16.msra.mxu0 %v1843
    %1949 = vmatprep.mubr.bf16.mxu0 %v1612
    %1950 = vmatmul.mubr.bf16.gmra.mrb[0].mxu0 %v1611
    %v1951 = vpop.f32.mrb[0].mxu0
    %v1952 = vadd.f32 %v1911, %v1951
    %v1953 = vpop.f32.mrb[0].mxu0
    %v1954 = vpop.f32.mrb[0].mxu0
    %v1955 = vadd.f32 %v1914, %v1954
    %v1956 = vpop.f32.mrb[0].mxu0
    %1957 = vdwg.mxu0
    %v1958 = vpack.c.bf16 %v1955, %v1952
    %v1959 = vld [vmem:[%s5] sm:$0xff]
    %v1960 = vld [vmem:[%s5 + $0x8] sm:$0xff]
    %v1961 = vld [vmem:[%s5 + $0x10] sm:$0xff]
    %v1962 = vld [vmem:[%s5 + $0x18] sm:$0xff]
    %v1963 = vld [vmem:[%s5 + $0x20] sm:$0xff]
    %v1964 = vld [vmem:[%s5 + $0x28] sm:$0xff]
    %v1965 = vld [vmem:[%s5 + $0x30] sm:$0xff]
    %v1966 = vld [vmem:[%s5 + $0x38] sm:$0xff]
    %v1967 = vld [vmem:[%s5 + $0x40] sm:$0xff]
    %v1968 = vld [vmem:[%s5 + $0x48] sm:$0xff]
    %v1969 = vld [vmem:[%s5 + $0x50] sm:$0xff]
    %v1970 = vld [vmem:[%s5 + $0x58] sm:$0xff]
    %v1971 = vld [vmem:[%s5 + $0x60] sm:$0xff]
    %v1972 = vld [vmem:[%s5 + $0x68] sm:$0xff]
    %v1973 = vld [vmem:[%s5 + $0x70] sm:$0xff]
    %v1974 = vld [vmem:[%s5 + $0x78] sm:$0xff]
    %v1975 = vld [vmem:[%s5 + $0x80] sm:$0xff]
    %v1976 = vld [vmem:[%s5 + $0x88] sm:$0xff]
    %v1977 = vld [vmem:[%s5 + $0x90] sm:$0xff]
    %v1978 = vld [vmem:[%s5 + $0x98] sm:$0xff]
    %v1979 = vld [vmem:[%s5 + $0xa0] sm:$0xff]
    %v1980 = vld [vmem:[%s5 + $0xa8] sm:$0xff]
    %v1981 = vld [vmem:[%s5 + $0xb0] sm:$0xff]
    %v1982 = vld [vmem:[%s5 + $0xb8] sm:$0xff]
    %v1983 = vld [vmem:[%s5 + $0xc0] sm:$0xff]
    %v1984 = vld [vmem:[%s5 + $0xc8] sm:$0xff]
    %v1985 = vld [vmem:[%s5 + $0xd0] sm:$0xff]
    %v1986 = vld [vmem:[%s5 + $0xd8] sm:$0xff]
    %v1987 = vld [vmem:[%s5 + $0xe0] sm:$0xff]
    %v1988 = vld [vmem:[%s5 + $0xe8] sm:$0xff]
    %v1989 = vld [vmem:[%s5 + $0xf0] sm:$0xff]
    %v1990 = vld [vmem:[%s5 + $0xf8] sm:$0xff]
    %v1991 = vld [vmem:[%s6] sm:$0xf]
    %v1993 = vlaneseq
    %v1994 = vshrl.u32 %v1993, 7
    %v1995 = vsub.s32 0, %v1994
    %v1996 = vrot.slane %v1991, %v1995
    %v1997 = vlaneseq
    %v1998 = vshrl.u32 %v1997, 7
    %v1999 = vsub.s32 1, %v1998
    %v2000 = vrot.slane %v1991, %v1999
    %v2001 = vlaneseq
    %v2002 = vshrl.u32 %v2001, 7
    %v2003 = vsub.s32 2, %v2002
    %v2004 = vrot.slane %v1991, %v2003
    %v2005 = vlaneseq
    %v2006 = vshrl.u32 %v2005, 7
    %v2007 = vsub.s32 3, %v2006
    %v2008 = vrot.slane %v1991, %v2007
    %v2045 = vunpack.c.l.b16 %v1959
    %v2046 = vunpack.c.h.b16 %v1959
    %v2047 = vunpack.c.l.b16 %v1960
    %v2048 = vunpack.c.h.b16 %v1960
    %v2049 = vunpack.c.l.b16 %v1961
    %v2050 = vunpack.c.h.b16 %v1961
    %v2051 = vunpack.c.l.b16 %v1962
    %v2052 = vunpack.c.h.b16 %v1962
    %v2053 = vunpack.c.l.b16 %v1963
    %v2054 = vunpack.c.h.b16 %v1963
    %v2055 = vunpack.c.l.b16 %v1964
    %v2056 = vunpack.c.h.b16 %v1964
    %v2057 = vunpack.c.l.b16 %v1965
    %v2058 = vunpack.c.h.b16 %v1965
    %v2059 = vunpack.c.l.b16 %v1966
    %v2060 = vunpack.c.h.b16 %v1966
    %v2061 = vunpack.c.l.b16 %v1967
    %v2062 = vunpack.c.h.b16 %v1967
    %v2063 = vunpack.c.l.b16 %v1968
    %v2064 = vunpack.c.h.b16 %v1968
    %v2065 = vunpack.c.l.b16 %v1969
    %v2066 = vunpack.c.h.b16 %v1969
    %v2067 = vunpack.c.l.b16 %v1970
    %v2068 = vunpack.c.h.b16 %v1970
    %v2069 = vunpack.c.l.b16 %v1971
    %v2070 = vunpack.c.h.b16 %v1971
    %v2071 = vunpack.c.l.b16 %v1972
    %v2072 = vunpack.c.h.b16 %v1972
    %v2073 = vunpack.c.l.b16 %v1973
    %v2074 = vunpack.c.h.b16 %v1973
    %v2075 = vunpack.c.l.b16 %v1974
    %v2076 = vunpack.c.h.b16 %v1974
    %v2077 = vunpack.c.l.b16 %v1975
    %v2078 = vunpack.c.h.b16 %v1975
    %v2079 = vunpack.c.l.b16 %v1976
    %v2080 = vunpack.c.h.b16 %v1976
    %v2081 = vunpack.c.l.b16 %v1977
    %v2082 = vunpack.c.h.b16 %v1977
    %v2083 = vunpack.c.l.b16 %v1978
    %v2084 = vunpack.c.h.b16 %v1978
    %v2085 = vunpack.c.l.b16 %v1979
    %v2086 = vunpack.c.h.b16 %v1979
    %v2087 = vunpack.c.l.b16 %v1980
    %v2088 = vunpack.c.h.b16 %v1980
    %v2089 = vunpack.c.l.b16 %v1981
    %v2090 = vunpack.c.h.b16 %v1981
    %v2091 = vunpack.c.l.b16 %v1982
    %v2092 = vunpack.c.h.b16 %v1982
    %v2093 = vunpack.c.l.b16 %v1983
    %v2094 = vunpack.c.h.b16 %v1983
    %v2095 = vunpack.c.l.b16 %v1984
    %v2096 = vunpack.c.h.b16 %v1984
    %v2097 = vunpack.c.l.b16 %v1985
    %v2098 = vunpack.c.h.b16 %v1985
    %v2099 = vunpack.c.l.b16 %v1986
    %v2100 = vunpack.c.h.b16 %v1986
    %v2101 = vunpack.c.l.b16 %v1987
    %v2102 = vunpack.c.h.b16 %v1987
    %v2103 = vunpack.c.l.b16 %v1988
    %v2104 = vunpack.c.h.b16 %v1988
    %v2105 = vunpack.c.l.b16 %v1989
    %v2106 = vunpack.c.h.b16 %v1989
    %v2107 = vunpack.c.l.b16 %v1990
    %v2108 = vunpack.c.h.b16 %v1990
    %v2109 = vpack.c.b16 %v2049, %v2045
    %v2110 = vpack.c.b16 %v2050, %v2046
    %v2111 = vpack.c.b16 %v2051, %v2047
    %v2112 = vpack.c.b16 %v2052, %v2048
    %v2113 = vpack.c.b16 %v2057, %v2053
    %v2114 = vpack.c.b16 %v2058, %v2054
    %v2115 = vpack.c.b16 %v2059, %v2055
    %v2116 = vpack.c.b16 %v2060, %v2056
    %v2117 = vpack.c.b16 %v2065, %v2061
    %v2118 = vpack.c.b16 %v2066, %v2062
    %v2119 = vpack.c.b16 %v2067, %v2063
    %v2120 = vpack.c.b16 %v2068, %v2064
    %v2121 = vpack.c.b16 %v2073, %v2069
    %v2122 = vpack.c.b16 %v2074, %v2070
    %v2123 = vpack.c.b16 %v2075, %v2071
    %v2124 = vpack.c.b16 %v2076, %v2072
    %v2125 = vpack.c.b16 %v2081, %v2077
    %v2126 = vpack.c.b16 %v2082, %v2078
    %v2127 = vpack.c.b16 %v2083, %v2079
    %v2128 = vpack.c.b16 %v2084, %v2080
    %v2129 = vpack.c.b16 %v2089, %v2085
    %v2130 = vpack.c.b16 %v2090, %v2086
    %v2131 = vpack.c.b16 %v2091, %v2087
    %v2132 = vpack.c.b16 %v2092, %v2088
    %v2133 = vpack.c.b16 %v2097, %v2093
    %v2134 = vpack.c.b16 %v2098, %v2094
    %v2135 = vpack.c.b16 %v2099, %v2095
    %v2136 = vpack.c.b16 %v2100, %v2096
    %v2137 = vpack.c.b16 %v2105, %v2101
    %v2138 = vpack.c.b16 %v2106, %v2102
    %v2139 = vpack.c.b16 %v2107, %v2103
    %v2140 = vpack.c.b16 %v2108, %v2104
    %2173 = vmatprep.subr.bf16.mxu0 %v2110
    %2174 = vmatpush1.bf16.msra.mxu0 %v2109
    %2175 = vmatprep.subr.bf16.mxu0 %v2114
    %2176 = vmatpush1.bf16.msra.mxu0 %v2113
    %2177 = vmatprep.subr.bf16.mxu0 %v2118
    %2178 = vmatpush1.bf16.msra.mxu0 %v2117
    %2179 = vmatprep.subr.bf16.mxu0 %v2122
    %2180 = vmatpush1.bf16.msra.mxu0 %v2121
    %2181 = vmatprep.subr.bf16.mxu0 %v2126
    %2182 = vmatpush1.bf16.msra.mxu0 %v2125
    %2183 = vmatprep.subr.bf16.mxu0 %v2130
    %2184 = vmatpush1.bf16.msra.mxu0 %v2129
    %2185 = vmatprep.subr.bf16.mxu0 %v2134
    %2186 = vmatpush1.bf16.msra.mxu0 %v2133
    %2187 = vmatprep.subr.bf16.mxu0 %v2138
    %2188 = vmatpush1.bf16.msra.mxu0 %v2137
    %2189 = vmatprep.subr.bf16.mxu0 0
    %2190 = vmatpush1.bf16.msra.mxu0 0
    %2191 = vmatprep.subr.bf16.mxu0 0
    %2192 = vmatpush1.bf16.msra.mxu0 0
    %2193 = vmatprep.subr.bf16.mxu0 0
    %2194 = vmatpush1.bf16.msra.mxu0 0
    %2195 = vmatprep.subr.bf16.mxu0 0
    %2196 = vmatpush1.bf16.msra.mxu0 0
    %2197 = vmatprep.subr.bf16.mxu0 0
    %2198 = vmatpush1.bf16.msra.mxu0 0
    %2199 = vmatprep.subr.bf16.mxu0 0
    %2200 = vmatpush1.bf16.msra.mxu0 0
    %2201 = vmatprep.subr.bf16.mxu0 0
    %2202 = vmatpush1.bf16.msra.mxu0 0
    %2203 = vmatprep.subr.bf16.mxu0 0
    %2204 = vmatpush1.bf16.msra.mxu0 0
    %2205 = vmatprep.mubr.bf16.mxu0 0
    %2206 = vmatmul.mubr.bf16.gmra.mrb[0].mxu0 %v1958
    %v2207 = vpop.f32.mrb[0].mxu0
    %v2208 = vadd.f32 %v1996, %v2207
    %v2209 = vpop.f32.mrb[0].mxu0
    %v2210 = vadd.f32 %v2000, %v2209
    %v2211 = vpop.f32.mrb[0].mxu0
    %v2212 = vadd.f32 %v1996, %v2211
    %v2213 = vpop.f32.mrb[0].mxu0
    %v2214 = vadd.f32 %v2000, %v2213
    %2215 = vdwg.mxu0
    %2216 = vmatprep.subr.bf16.mxu0 %v2112
    %2217 = vmatpush1.bf16.msra.mxu0 %v2111
    %2218 = vmatprep.subr.bf16.mxu0 %v2116
    %2219 = vmatpush1.bf16.msra.mxu0 %v2115
    %2220 = vmatprep.subr.bf16.mxu0 %v2120
    %2221 = vmatpush1.bf16.msra.mxu0 %v2119
    %2222 = vmatprep.subr.bf16.mxu0 %v2124
    %2223 = vmatpush1.bf16.msra.mxu0 %v2123
    %2224 = vmatprep.subr.bf16.mxu0 %v2128
    %2225 = vmatpush1.bf16.msra.mxu0 %v2127
    %2226 = vmatprep.subr.bf16.mxu0 %v2132
    %2227 = vmatpush1.bf16.msra.mxu0 %v2131
    %2228 = vmatprep.subr.bf16.mxu0 %v2136
    %2229 = vmatpush1.bf16.msra.mxu0 %v2135
    %2230 = vmatprep.subr.bf16.mxu0 %v2140
    %2231 = vmatpush1.bf16.msra.mxu0 %v2139
    %2232 = vmatprep.subr.bf16.mxu0 0
    %2233 = vmatpush1.bf16.msra.mxu0 0
    %2234 = vmatprep.subr.bf16.mxu0 0
    %2235 = vmatpush1.bf16.msra.mxu0 0
    %2236 = vmatprep.subr.bf16.mxu0 0
    %2237 = vmatpush1.bf16.msra.mxu0 0
    %2238 = vmatprep.subr.bf16.mxu0 0
    %2239 = vmatpush1.bf16.msra.mxu0 0
    %2240 = vmatprep.subr.bf16.mxu0 0
    %2241 = vmatpush1.bf16.msra.mxu0 0
    %2242 = vmatprep.subr.bf16.mxu0 0
    %2243 = vmatpush1.bf16.msra.mxu0 0
    %2244 = vmatprep.subr.bf16.mxu0 0
    %2245 = vmatpush1.bf16.msra.mxu0 0
    %2246 = vmatprep.subr.bf16.mxu0 0
    %2247 = vmatpush1.bf16.msra.mxu0 0
    %2248 = vmatprep.mubr.bf16.mxu0 0
    %2249 = vmatmul.mubr.bf16.gmra.mrb[0].mxu0 %v1958
    %v2250 = vpop.f32.mrb[0].mxu0
    %v2251 = vadd.f32 %v2004, %v2250
    %v2252 = vpop.f32.mrb[0].mxu0
    %v2253 = vadd.f32 %v2008, %v2252
    %v2254 = vpop.f32.mrb[0].mxu0
    %v2255 = vadd.f32 %v2004, %v2254
    %v2256 = vpop.f32.mrb[0].mxu0
    %v2257 = vadd.f32 %v2008, %v2256
    %2258 = vdwg.mxu0
    %v2259 = vmax.f32 %v2208, 0.0
    %v2260 = vmax.f32 %v2210, 0.0
    %v2261 = vmax.f32 %v2251, 0.0
    %v2262 = vmax.f32 %v2253, 0.0
    %v2263 = vmax.f32 %v2212, 0.0
    %v2264 = vmax.f32 %v2214, 0.0
    %v2265 = vmax.f32 %v2255, 0.0
    %v2266 = vmax.f32 %v2257, 0.0
    %v2267 = vpack.c.bf16 %v2263, %v2259
    %v2268 = vpack.c.bf16 %v2264, %v2260
    %v2269 = vpack.c.bf16 %v2265, %v2261
    %v2270 = vpack.c.bf16 %v2266, %v2262
    %v2271 = vld [vmem:[%s7] sm:$0xff]
    %v2272 = vld [vmem:[%s7 + $0x8] sm:$0xff]
    %v2273 = vld [vmem:[%s7 + $0x10] sm:$0xff]
    %v2274 = vld [vmem:[%s7 + $0x18] sm:$0xf]
    %v2275 = vld [vmem:[%s7 + $0x1c] sm:$0xff]
    %v2276 = vld [vmem:[%s7 + $0x24] sm:$0xff]
    %v2277 = vld [vmem:[%s7 + $0x2c] sm:$0xff]
    %v2278 = vld [vmem:[%s7 + $0x34] sm:$0xf]
    %v2279 = vld [vmem:[%s7 + $0x38] sm:$0xff]
    %v2280 = vld [vmem:[%s7 + $0x40] sm:$0xff]
    %v2281 = vld [vmem:[%s7 + $0x48] sm:$0xff]
    %v2282 = vld [vmem:[%s7 + $0x50] sm:$0xf]
    %v2283 = vld [vmem:[%s7 + $0x54] sm:$0xff]
    %v2284 = vld [vmem:[%s7 + $0x5c] sm:$0xff]
    %v2285 = vld [vmem:[%s7 + $0x64] sm:$0xff]
    %v2286 = vld [vmem:[%s7 + $0x6c] sm:$0xf]
    %v2287 = vld [vmem:[%s7 + $0x70] sm:$0xff]
    %v2288 = vld [vmem:[%s7 + $0x78] sm:$0xff]
    %v2289 = vld [vmem:[%s7 + $0x80] sm:$0xff]
    %v2290 = vld [vmem:[%s7 + $0x88] sm:$0xf]
    %v2291 = vld [vmem:[%s7 + $0x8c] sm:$0xff]
    %v2292 = vld [vmem:[%s7 + $0x94] sm:$0xff]
    %v2293 = vld [vmem:[%s7 + $0x9c] sm:$0xff]
    %v2294 = vld [vmem:[%s7 + $0xa4] sm:$0xf]
    %v2295 = vld [vmem:[%s7 + $0xa8] sm:$0xff]
    %v2296 = vld [vmem:[%s7 + $0xb0] sm:$0xff]
    %v2297 = vld [vmem:[%s7 + $0xb8] sm:$0xff]
    %v2298 = vld [vmem:[%s7 + $0xc0] sm:$0xf]
    %v2299 = vld [vmem:[%s7 + $0xc4] sm:$0xff]
    %v2300 = vld [vmem:[%s7 + $0xcc] sm:$0xff]
    %v2301 = vld [vmem:[%s7 + $0xd4] sm:$0xff]
    %v2302 = vld [vmem:[%s7 + $0xdc] sm:$0xf]
    %v2303 = vld [vmem:[%s7 + $0xe0] sm:$0xff]
    %v2304 = vld [vmem:[%s7 + $0xe8] sm:$0xff]
    %v2305 = vld [vmem:[%s7 + $0xf0] sm:$0xff]
    %v2306 = vld [vmem:[%s7 + $0xf8] sm:$0xf]
    %v2307 = vld [vmem:[%s7 + $0xfc] sm:$0xff]
    %v2308 = vld [vmem:[%s7 + $0x104] sm:$0xff]
    %v2309 = vld [vmem:[%s7 + $0x10c] sm:$0xff]
    %v2310 = vld [vmem:[%s7 + $0x114] sm:$0xf]
    %v2311 = vld [vmem:[%s7 + $0x118] sm:$0xff]
    %v2312 = vld [vmem:[%s7 + $0x120] sm:$0xff]
    %v2313 = vld [vmem:[%s7 + $0x128] sm:$0xff]
    %v2314 = vld [vmem:[%s7 + $0x130] sm:$0xf]
    %v2315 = vld [vmem:[%s7 + $0x134] sm:$0xff]
    %v2316 = vld [vmem:[%s7 + $0x13c] sm:$0xff]
    %v2317 = vld [vmem:[%s7 + $0x144] sm:$0xff]
    %v2318 = vld [vmem:[%s7 + $0x14c] sm:$0xf]
    %v2319 = vld [vmem:[%s7 + $0x150] sm:$0xff]
    %v2320 = vld [vmem:[%s7 + $0x158] sm:$0xff]
    %v2321 = vld [vmem:[%s7 + $0x160] sm:$0xff]
    %v2322 = vld [vmem:[%s7 + $0x168] sm:$0xf]
    %v2323 = vld [vmem:[%s7 + $0x16c] sm:$0xff]
    %v2324 = vld [vmem:[%s7 + $0x174] sm:$0xff]
    %v2325 = vld [vmem:[%s7 + $0x17c] sm:$0xff]
    %v2326 = vld [vmem:[%s7 + $0x184] sm:$0xf]
    %v2327 = vld [vmem:[%s7 + $0x188] sm:$0xff]
    %v2328 = vld [vmem:[%s7 + $0x190] sm:$0xff]
    %v2329 = vld [vmem:[%s7 + $0x198] sm:$0xff]
    %v2330 = vld [vmem:[%s7 + $0x1a0] sm:$0xf]
    %v2331 = vld [vmem:[%s7 + $0x1a4] sm:$0xff]
    %v2332 = vld [vmem:[%s7 + $0x1ac] sm:$0xff]
    %v2333 = vld [vmem:[%s7 + $0x1b4] sm:$0xff]
    %v2334 = vld [vmem:[%s7 + $0x1bc] sm:$0xf]
    %v2335 = vld [vmem:[%s7 + $0x1c0] sm:$0xff]
    %v2336 = vld [vmem:[%s7 + $0x1c8] sm:$0xff]
    %v2337 = vld [vmem:[%s7 + $0x1d0] sm:$0xff]
    %v2338 = vld [vmem:[%s7 + $0x1d8] sm:$0xf]
    %v2339 = vld [vmem:[%s7 + $0x1dc] sm:$0xff]
    %v2340 = vld [vmem:[%s7 + $0x1e4] sm:$0xff]
    %v2341 = vld [vmem:[%s7 + $0x1ec] sm:$0xff]
    %v2342 = vld [vmem:[%s7 + $0x1f4] sm:$0xf]
    %v2343 = vld [vmem:[%s7 + $0x1f8] sm:$0xff]
    %v2344 = vld [vmem:[%s7 + $0x200] sm:$0xff]
    %v2345 = vld [vmem:[%s7 + $0x208] sm:$0xff]
    %v2346 = vld [vmem:[%s7 + $0x210] sm:$0xf]
    %v2347 = vld [vmem:[%s7 + $0x214] sm:$0xff]
    %v2348 = vld [vmem:[%s7 + $0x21c] sm:$0xff]
    %v2349 = vld [vmem:[%s7 + $0x224] sm:$0xff]
    %v2350 = vld [vmem:[%s7 + $0x22c] sm:$0xf]
    %v2351 = vld [vmem:[%s7 + $0x230] sm:$0xff]
    %v2352 = vld [vmem:[%s7 + $0x238] sm:$0xff]
    %v2353 = vld [vmem:[%s7 + $0x240] sm:$0xff]
    %v2354 = vld [vmem:[%s7 + $0x248] sm:$0xf]
    %v2355 = vld [vmem:[%s7 + $0x24c] sm:$0xff]
    %v2356 = vld [vmem:[%s7 + $0x254] sm:$0xff]
    %v2357 = vld [vmem:[%s7 + $0x25c] sm:$0xff]
    %v2358 = vld [vmem:[%s7 + $0x264] sm:$0xf]
    %v2359 = vld [vmem:[%s7 + $0x268] sm:$0xff]
    %v2360 = vld [vmem:[%s7 + $0x270] sm:$0xff]
    %v2361 = vld [vmem:[%s7 + $0x278] sm:$0xff]
    %v2362 = vld [vmem:[%s7 + $0x280] sm:$0xf]
    %v2363 = vld [vmem:[%s7 + $0x284] sm:$0xff]
    %v2364 = vld [vmem:[%s7 + $0x28c] sm:$0xff]
    %v2365 = vld [vmem:[%s7 + $0x294] sm:$0xff]
    %v2366 = vld [vmem:[%s7 + $0x29c] sm:$0xf]
    %v2367 = vld [vmem:[%s7 + $0x2a0] sm:$0xff]
    %v2368 = vld [vmem:[%s7 + $0x2a8] sm:$0xff]
    %v2369 = vld [vmem:[%s7 + $0x2b0] sm:$0xff]
    %v2370 = vld [vmem:[%s7 + $0x2b8] sm:$0xf]
    %v2371 = vld [vmem:[%s7 + $0x2bc] sm:$0xff]
    %v2372 = vld [vmem:[%s7 + $0x2c4] sm:$0xff]
    %v2373 = vld [vmem:[%s7 + $0x2cc] sm:$0xff]
    %v2374 = vld [vmem:[%s7 + $0x2d4] sm:$0xf]
    %v2375 = vld [vmem:[%s7 + $0x2d8] sm:$0xff]
    %v2376 = vld [vmem:[%s7 + $0x2e0] sm:$0xff]
    %v2377 = vld [vmem:[%s7 + $0x2e8] sm:$0xff]
    %v2378 = vld [vmem:[%s7 + $0x2f0] sm:$0xf]
    %v2379 = vld [vmem:[%s7 + $0x2f4] sm:$0xff]
    %v2380 = vld [vmem:[%s7 + $0x2fc] sm:$0xff]
    %v2381 = vld [vmem:[%s7 + $0x304] sm:$0xff]
    %v2382 = vld [vmem:[%s7 + $0x30c] sm:$0xf]
    %v2383 = vld [vmem:[%s7 + $0x310] sm:$0xff]
    %v2384 = vld [vmem:[%s7 + $0x318] sm:$0xff]
    %v2385 = vld [vmem:[%s7 + $0x320] sm:$0xff]
    %v2386 = vld [vmem:[%s7 + $0x328] sm:$0xf]
    %v2387 = vld [vmem:[%s7 + $0x32c] sm:$0xff]
    %v2388 = vld [vmem:[%s7 + $0x334] sm:$0xff]
    %v2389 = vld [vmem:[%s7 + $0x33c] sm:$0xff]
    %v2390 = vld [vmem:[%s7 + $0x344] sm:$0xf]
    %v2391 = vld [vmem:[%s7 + $0x348] sm:$0xff]
    %v2392 = vld [vmem:[%s7 + $0x350] sm:$0xff]
    %v2393 = vld [vmem:[%s7 + $0x358] sm:$0xff]
    %v2394 = vld [vmem:[%s7 + $0x360] sm:$0xf]
    %v2395 = vld [vmem:[%s7 + $0x364] sm:$0xff]
    %v2396 = vld [vmem:[%s7 + $0x36c] sm:$0xff]
    %v2397 = vld [vmem:[%s7 + $0x374] sm:$0xff]
    %v2398 = vld [vmem:[%s7 + $0x37c] sm:$0xf]
    %v2399 = vld [vmem:[%s7 + $0x380] sm:$0xff]
    %v2400 = vld [vmem:[%s7 + $0x388] sm:$0xff]
    %v2401 = vld [vmem:[%s7 + $0x390] sm:$0xff]
    %v2402 = vld [vmem:[%s7 + $0x398] sm:$0xf]
    %v2403 = vld [vmem:[%s7 + $0x39c] sm:$0xff]
    %v2404 = vld [vmem:[%s7 + $0x3a4] sm:$0xff]
    %v2405 = vld [vmem:[%s7 + $0x3ac] sm:$0xff]
    %v2406 = vld [vmem:[%s7 + $0x3b4] sm:$0xf]
    %v2407 = vld [vmem:[%s7 + $0x3b8] sm:$0xff]
    %v2408 = vld [vmem:[%s7 + $0x3c0] sm:$0xff]
    %v2409 = vld [vmem:[%s7 + $0x3c8] sm:$0xff]
    %v2410 = vld [vmem:[%s7 + $0x3d0] sm:$0xf]
    %v2411 = vld [vmem:[%s7 + $0x3d4] sm:$0xff]
    %v2412 = vld [vmem:[%s7 + $0x3dc] sm:$0xff]
    %v2413 = vld [vmem:[%s7 + $0x3e4] sm:$0xff]
    %v2414 = vld [vmem:[%s7 + $0x3ec] sm:$0xf]
    %v2415 = vld [vmem:[%s7 + $0x3f0] sm:$0xff]
    %v2416 = vld [vmem:[%s7 + $0x3f8] sm:$0xff]
    %v2417 = vld [vmem:[%s7 + $0x400] sm:$0xff]
    %v2418 = vld [vmem:[%s7 + $0x408] sm:$0xf]
    %v2419 = vld [vmem:[%s7 + $0x40c] sm:$0xff]
    %v2420 = vld [vmem:[%s7 + $0x414] sm:$0xff]
    %v2421 = vld [vmem:[%s7 + $0x41c] sm:$0xff]
    %v2422 = vld [vmem:[%s7 + $0x424] sm:$0xf]
    %v2423 = vld [vmem:[%s7 + $0x428] sm:$0xff]
    %v2424 = vld [vmem:[%s7 + $0x430] sm:$0xff]
    %v2425 = vld [vmem:[%s7 + $0x438] sm:$0xff]
    %v2426 = vld [vmem:[%s7 + $0x440] sm:$0xf]
    %v2427 = vld [vmem:[%s7 + $0x444] sm:$0xff]
    %v2428 = vld [vmem:[%s7 + $0x44c] sm:$0xff]
    %v2429 = vld [vmem:[%s7 + $0x454] sm:$0xff]
    %v2430 = vld [vmem:[%s7 + $0x45c] sm:$0xf]
    %v2431 = vld [vmem:[%s7 + $0x460] sm:$0xff]
    %v2432 = vld [vmem:[%s7 + $0x468] sm:$0xff]
    %v2433 = vld [vmem:[%s7 + $0x470] sm:$0xff]
    %v2434 = vld [vmem:[%s7 + $0x478] sm:$0xf]
    %v2435 = vld [vmem:[%s7 + $0x47c] sm:$0xff]
    %v2436 = vld [vmem:[%s7 + $0x484] sm:$0xff]
    %v2437 = vld [vmem:[%s7 + $0x48c] sm:$0xff]
    %v2438 = vld [vmem:[%s7 + $0x494] sm:$0xf]
    %v2439 = vld [vmem:[%s7 + $0x498] sm:$0xff]
    %v2440 = vld [vmem:[%s7 + $0x4a0] sm:$0xff]
    %v2441 = vld [vmem:[%s7 + $0x4a8] sm:$0xff]
    %v2442 = vld [vmem:[%s7 + $0x4b0] sm:$0xf]
    %v2443 = vld [vmem:[%s7 + $0x4b4] sm:$0xff]
    %v2444 = vld [vmem:[%s7 + $0x4bc] sm:$0xff]
    %v2445 = vld [vmem:[%s7 + $0x4c4] sm:$0xff]
    %v2446 = vld [vmem:[%s7 + $0x4cc] sm:$0xf]
    %v2447 = vld [vmem:[%s7 + $0x4d0] sm:$0xff]
    %v2448 = vld [vmem:[%s7 + $0x4d8] sm:$0xff]
    %v2449 = vld [vmem:[%s7 + $0x4e0] sm:$0xff]
    %v2450 = vld [vmem:[%s7 + $0x4e8] sm:$0xf]
    %v2451 = vld [vmem:[%s7 + $0x4ec] sm:$0xff]
    %v2452 = vld [vmem:[%s7 + $0x4f4] sm:$0xff]
    %v2453 = vld [vmem:[%s7 + $0x4fc] sm:$0xff]
    %v2454 = vld [vmem:[%s7 + $0x504] sm:$0xf]
    %v2455 = vld [vmem:[%s7 + $0x508] sm:$0xff]
    %v2456 = vld [vmem:[%s7 + $0x510] sm:$0xff]
    %v2457 = vld [vmem:[%s7 + $0x518] sm:$0xff]
    %v2458 = vld [vmem:[%s7 + $0x520] sm:$0xf]
    %v2459 = vld [vmem:[%s7 + $0x524] sm:$0xff]
    %v2460 = vld [vmem:[%s7 + $0x52c] sm:$0xff]
    %v2461 = vld [vmem:[%s7 + $0x534] sm:$0xff]
    %v2462 = vld [vmem:[%s7 + $0x53c] sm:$0xf]
    %v2463 = vld [vmem:[%s7 + $0x540] sm:$0xff]
    %v2464 = vld [vmem:[%s7 + $0x548] sm:$0xff]
    %v2465 = vld [vmem:[%s7 + $0x550] sm:$0xff]
    %v2466 = vld [vmem:[%s7 + $0x558] sm:$0xf]
    %v2467 = vld [vmem:[%s7 + $0x55c] sm:$0xff]
    %v2468 = vld [vmem:[%s7 + $0x564] sm:$0xff]
    %v2469 = vld [vmem:[%s7 + $0x56c] sm:$0xff]
    %v2470 = vld [vmem:[%s7 + $0x574] sm:$0xf]
    %v2471 = vld [vmem:[%s7 + $0x578] sm:$0xff]
    %v2472 = vld [vmem:[%s7 + $0x580] sm:$0xff]
    %v2473 = vld [vmem:[%s7 + $0x588] sm:$0xff]
    %v2474 = vld [vmem:[%s7 + $0x590] sm:$0xf]
    %v2475 = vld [vmem:[%s7 + $0x594] sm:$0xff]
    %v2476 = vld [vmem:[%s7 + $0x59c] sm:$0xff]
    %v2477 = vld [vmem:[%s7 + $0x5a4] sm:$0xff]
    %v2478 = vld [vmem:[%s7 + $0x5ac] sm:$0xf]
    %v2479 = vld [vmem:[%s7 + $0x5b0] sm:$0xff]
    %v2480 = vld [vmem:[%s7 + $0x5b8] sm:$0xff]
    %v2481 = vld [vmem:[%s7 + $0x5c0] sm:$0xff]
    %v2482 = vld [vmem:[%s7 + $0x5c8] sm:$0xf]
    %v2483 = vld [vmem:[%s7 + $0x5cc] sm:$0xff]
    %v2484 = vld [vmem:[%s7 + $0x5d4] sm:$0xff]
    %v2485 = vld [vmem:[%s7 + $0x5dc] sm:$0xff]
    %v2486 = vld [vmem:[%s7 + $0x5e4] sm:$0xf]
    %v2487 = vld [vmem:[%s7 + $0x5e8] sm:$0xff]
    %v2488 = vld [vmem:[%s7 + $0x5f0] sm:$0xff]
    %v2489 = vld [vmem:[%s7 + $0x5f8] sm:$0xff]
    %v2490 = vld [vmem:[%s7 + $0x600] sm:$0xf]
    %v2491 = vld [vmem:[%s7 + $0x604] sm:$0xff]
    %v2492 = vld [vmem:[%s7 + $0x60c] sm:$0xff]
    %v2493 = vld [vmem:[%s7 + $0x614] sm:$0xff]
    %v2494 = vld [vmem:[%s7 + $0x61c] sm:$0xf]
    %v2495 = vld [vmem:[%s7 + $0x620] sm:$0xff]
    %v2496 = vld [vmem:[%s7 + $0x628] sm:$0xff]
    %v2497 = vld [vmem:[%s7 + $0x630] sm:$0xff]
    %v2498 = vld [vmem:[%s7 + $0x638] sm:$0xf]
    %v2499 = vld [vmem:[%s7 + $0x63c] sm:$0xff]
    %v2500 = vld [vmem:[%s7 + $0x644] sm:$0xff]
    %v2501 = vld [vmem:[%s7 + $0x64c] sm:$0xff]
    %v2502 = vld [vmem:[%s7 + $0x654] sm:$0xf]
    %v2503 = vld [vmem:[%s7 + $0x658] sm:$0xff]
    %v2504 = vld [vmem:[%s7 + $0x660] sm:$0xff]
    %v2505 = vld [vmem:[%s7 + $0x668] sm:$0xff]
    %v2506 = vld [vmem:[%s7 + $0x670] sm:$0xf]
    %v2507 = vld [vmem:[%s7 + $0x674] sm:$0xff]
    %v2508 = vld [vmem:[%s7 + $0x67c] sm:$0xff]
    %v2509 = vld [vmem:[%s7 + $0x684] sm:$0xff]
    %v2510 = vld [vmem:[%s7 + $0x68c] sm:$0xf]
    %v2511 = vld [vmem:[%s7 + $0x690] sm:$0xff]
    %v2512 = vld [vmem:[%s7 + $0x698] sm:$0xff]
    %v2513 = vld [vmem:[%s7 + $0x6a0] sm:$0xff]
    %v2514 = vld [vmem:[%s7 + $0x6a8] sm:$0xf]
    %v2515 = vld [vmem:[%s7 + $0x6ac] sm:$0xff]
    %v2516 = vld [vmem:[%s7 + $0x6b4] sm:$0xff]
    %v2517 = vld [vmem:[%s7 + $0x6bc] sm:$0xff]
    %v2518 = vld [vmem:[%s7 + $0x6c4] sm:$0xf]
    %v2519 = vld [vmem:[%s7 + $0x6c8] sm:$0xff]
    %v2520 = vld [vmem:[%s7 + $0x6d0] sm:$0xff]
    %v2521 = vld [vmem:[%s7 + $0x6d8] sm:$0xff]
    %v2522 = vld [vmem:[%s7 + $0x6e0] sm:$0xf]
    %v2523 = vld [vmem:[%s7 + $0x6e4] sm:$0xff]
    %v2524 = vld [vmem:[%s7 + $0x6ec] sm:$0xff]
    %v2525 = vld [vmem:[%s7 + $0x6f4] sm:$0xff]
    %v2526 = vld [vmem:[%s7 + $0x6fc] sm:$0xf]
    %v2527 = vld [vmem:[%s8] sm:$0x7f]
    %v2529 = vlaneseq
    %v2530 = vshrl.u32 %v2529, 7
    %v2531 = vsub.s32 0, %v2530
    %v2532 = vrot.slane %v2527, %v2531
    %v2533 = vlaneseq
    %v2534 = vshrl.u32 %v2533, 7
    %v2535 = vsub.s32 1, %v2534
    %v2536 = vrot.slane %v2527, %v2535
    %v2537 = vlaneseq
    %v2538 = vshrl.u32 %v2537, 7
    %v2539 = vsub.s32 2, %v2538
    %v2540 = vrot.slane %v2527, %v2539
    %v2541 = vlaneseq
    %v2542 = vshrl.u32 %v2541, 7
    %v2543 = vsub.s32 3, %v2542
    %v2544 = vrot.slane %v2527, %v2543
    %v2545 = vlaneseq
    %v2546 = vshrl.u32 %v2545, 7
    %v2547 = vsub.s32 4, %v2546
    %v2548 = vrot.slane %v2527, %v2547
    %v2549 = vlaneseq
    %v2550 = vshrl.u32 %v2549, 7
    %v2551 = vsub.s32 5, %v2550
    %v2552 = vrot.slane %v2527, %v2551
    %v2553 = vlaneseq
    %v2554 = vshrl.u32 %v2553, 7
    %v2555 = vsub.s32 6, %v2554
    %v2556 = vrot.slane %v2527, %v2555
    %v2820 = vunpack.c.l.b16 %v2271
    %v2821 = vunpack.c.h.b16 %v2271
    %v2822 = vunpack.c.l.b16 %v2272
    %v2823 = vunpack.c.h.b16 %v2272
    %v2824 = vunpack.c.l.b16 %v2273
    %v2825 = vunpack.c.h.b16 %v2273
    %v2826 = vunpack.c.l.b16 %v2274
    %v2827 = vunpack.c.l.b16 %v2275
    %v2828 = vunpack.c.h.b16 %v2275
    %v2829 = vunpack.c.l.b16 %v2276
    %v2830 = vunpack.c.h.b16 %v2276
    %v2831 = vunpack.c.l.b16 %v2277
    %v2832 = vunpack.c.h.b16 %v2277
    %v2833 = vunpack.c.l.b16 %v2278
    %v2834 = vunpack.c.l.b16 %v2279
    %v2835 = vunpack.c.h.b16 %v2279
    %v2836 = vunpack.c.l.b16 %v2280
    %v2837 = vunpack.c.h.b16 %v2280
    %v2838 = vunpack.c.l.b16 %v2281
    %v2839 = vunpack.c.h.b16 %v2281
    %v2840 = vunpack.c.l.b16 %v2282
    %v2841 = vunpack.c.l.b16 %v2283
    %v2842 = vunpack.c.h.b16 %v2283
    %v2843 = vunpack.c.l.b16 %v2284
    %v2844 = vunpack.c.h.b16 %v2284
    %v2845 = vunpack.c.l.b16 %v2285
    %v2846 = vunpack.c.h.b16 %v2285
    %v2847 = vunpack.c.l.b16 %v2286
    %v2848 = vunpack.c.l.b16 %v2287
    %v2849 = vunpack.c.h.b16 %v2287
    %v2850 = vunpack.c.l.b16 %v2288
    %v2851 = vunpack.c.h.b16 %v2288
    %v2852 = vunpack.c.l.b16 %v2289
    %v2853 = vunpack.c.h.b16 %v2289
    %v2854 = vunpack.c.l.b16 %v2290
    %v2855 = vunpack.c.l.b16 %v2291
    %v2856 = vunpack.c.h.b16 %v2291
    %v2857 = vunpack.c.l.b16 %v2292
    %v2858 = vunpack.c.h.b16 %v2292
    %v2859 = vunpack.c.l.b16 %v2293
    %v2860 = vunpack.c.h.b16 %v2293
    %v2861 = vunpack.c.l.b16 %v2294
    %v2862 = vunpack.c.l.b16 %v2295
    %v2863 = vunpack.c.h.b16 %v2295
    %v2864 = vunpack.c.l.b16 %v2296
    %v2865 = vunpack.c.h.b16 %v2296
    %v2866 = vunpack.c.l.b16 %v2297
    %v2867 = vunpack.c.h.b16 %v2297
    %v2868 = vunpack.c.l.b16 %v2298
    %v2869 = vunpack.c.l.b16 %v2299
    %v2870 = vunpack.c.h.b16 %v2299
    %v2871 = vunpack.c.l.b16 %v2300
    %v2872 = vunpack.c.h.b16 %v2300
    %v2873 = vunpack.c.l.b16 %v2301
    %v2874 = vunpack.c.h.b16 %v2301
    %v2875 = vunpack.c.l.b16 %v2302
    %v2876 = vunpack.c.l.b16 %v2303
    %v2877 = vunpack.c.h.b16 %v2303
    %v2878 = vunpack.c.l.b16 %v2304
    %v2879 = vunpack.c.h.b16 %v2304
    %v2880 = vunpack.c.l.b16 %v2305
    %v2881 = vunpack.c.h.b16 %v2305
    %v2882 = vunpack.c.l.b16 %v2306
    %v2883 = vunpack.c.l.b16 %v2307
    %v2884 = vunpack.c.h.b16 %v2307
    %v2885 = vunpack.c.l.b16 %v2308
    %v2886 = vunpack.c.h.b16 %v2308
    %v2887 = vunpack.c.l.b16 %v2309
    %v2888 = vunpack.c.h.b16 %v2309
    %v2889 = vunpack.c.l.b16 %v2310
    %v2890 = vunpack.c.l.b16 %v2311
    %v2891 = vunpack.c.h.b16 %v2311
    %v2892 = vunpack.c.l.b16 %v2312
    %v2893 = vunpack.c.h.b16 %v2312
    %v2894 = vunpack.c.l.b16 %v2313
    %v2895 = vunpack.c.h.b16 %v2313
    %v2896 = vunpack.c.l.b16 %v2314
    %v2897 = vunpack.c.l.b16 %v2315
    %v2898 = vunpack.c.h.b16 %v2315
    %v2899 = vunpack.c.l.b16 %v2316
    %v2900 = vunpack.c.h.b16 %v2316
    %v2901 = vunpack.c.l.b16 %v2317
    %v2902 = vunpack.c.h.b16 %v2317
    %v2903 = vunpack.c.l.b16 %v2318
    %v2904 = vunpack.c.l.b16 %v2319
    %v2905 = vunpack.c.h.b16 %v2319
    %v2906 = vunpack.c.l.b16 %v2320
    %v2907 = vunpack.c.h.b16 %v2320
    %v2908 = vunpack.c.l.b16 %v2321
    %v2909 = vunpack.c.h.b16 %v2321
    %v2910 = vunpack.c.l.b16 %v2322
    %v2911 = vunpack.c.l.b16 %v2323
    %v2912 = vunpack.c.h.b16 %v2323
    %v2913 = vunpack.c.l.b16 %v2324
    %v2914 = vunpack.c.h.b16 %v2324
    %v2915 = vunpack.c.l.b16 %v2325
    %v2916 = vunpack.c.h.b16 %v2325
    %v2917 = vunpack.c.l.b16 %v2326
    %v2918 = vunpack.c.l.b16 %v2327
    %v2919 = vunpack.c.h.b16 %v2327
    %v2920 = vunpack.c.l.b16 %v2328
    %v2921 = vunpack.c.h.b16 %v2328
    %v2922 = vunpack.c.l.b16 %v2329
    %v2923 = vunpack.c.h.b16 %v2329
    %v2924 = vunpack.c.l.b16 %v2330
    %v2925 = vunpack.c.l.b16 %v2331
    %v2926 = vunpack.c.h.b16 %v2331
    %v2927 = vunpack.c.l.b16 %v2332
    %v2928 = vunpack.c.h.b16 %v2332
    %v2929 = vunpack.c.l.b16 %v2333
    %v2930 = vunpack.c.h.b16 %v2333
    %v2931 = vunpack.c.l.b16 %v2334
    %v2932 = vunpack.c.l.b16 %v2335
    %v2933 = vunpack.c.h.b16 %v2335
    %v2934 = vunpack.c.l.b16 %v2336
    %v2935 = vunpack.c.h.b16 %v2336
    %v2936 = vunpack.c.l.b16 %v2337
    %v2937 = vunpack.c.h.b16 %v2337
    %v2938 = vunpack.c.l.b16 %v2338
    %v2939 = vunpack.c.l.b16 %v2339
    %v2940 = vunpack.c.h.b16 %v2339
    %v2941 = vunpack.c.l.b16 %v2340
    %v2942 = vunpack.c.h.b16 %v2340
    %v2943 = vunpack.c.l.b16 %v2341
    %v2944 = vunpack.c.h.b16 %v2341
    %v2945 = vunpack.c.l.b16 %v2342
    %v2946 = vunpack.c.l.b16 %v2343
    %v2947 = vunpack.c.h.b16 %v2343
    %v2948 = vunpack.c.l.b16 %v2344
    %v2949 = vunpack.c.h.b16 %v2344
    %v2950 = vunpack.c.l.b16 %v2345
    %v2951 = vunpack.c.h.b16 %v2345
    %v2952 = vunpack.c.l.b16 %v2346
    %v2953 = vunpack.c.l.b16 %v2347
    %v2954 = vunpack.c.h.b16 %v2347
    %v2955 = vunpack.c.l.b16 %v2348
    %v2956 = vunpack.c.h.b16 %v2348
    %v2957 = vunpack.c.l.b16 %v2349
    %v2958 = vunpack.c.h.b16 %v2349
    %v2959 = vunpack.c.l.b16 %v2350
    %v2960 = vunpack.c.l.b16 %v2351
    %v2961 = vunpack.c.h.b16 %v2351
    %v2962 = vunpack.c.l.b16 %v2352
    %v2963 = vunpack.c.h.b16 %v2352
    %v2964 = vunpack.c.l.b16 %v2353
    %v2965 = vunpack.c.h.b16 %v2353
    %v2966 = vunpack.c.l.b16 %v2354
    %v2967 = vunpack.c.l.b16 %v2355
    %v2968 = vunpack.c.h.b16 %v2355
    %v2969 = vunpack.c.l.b16 %v2356
    %v2970 = vunpack.c.h.b16 %v2356
    %v2971 = vunpack.c.l.b16 %v2357
    %v2972 = vunpack.c.h.b16 %v2357
    %v2973 = vunpack.c.l.b16 %v2358
    %v2974 = vunpack.c.l.b16 %v2359
    %v2975 = vunpack.c.h.b16 %v2359
    %v2976 = vunpack.c.l.b16 %v2360
    %v2977 = vunpack.c.h.b16 %v2360
    %v2978 = vunpack.c.l.b16 %v2361
    %v2979 = vunpack.c.h.b16 %v2361
    %v2980 = vunpack.c.l.b16 %v2362
    %v2981 = vunpack.c.l.b16 %v2363
    %v2982 = vunpack.c.h.b16 %v2363
    %v2983 = vunpack.c.l.b16 %v2364
    %v2984 = vunpack.c.h.b16 %v2364
    %v2985 = vunpack.c.l.b16 %v2365
    %v2986 = vunpack.c.h.b16 %v2365
    %v2987 = vunpack.c.l.b16 %v2366
    %v2988 = vunpack.c.l.b16 %v2367
    %v2989 = vunpack.c.h.b16 %v2367
    %v2990 = vunpack.c.l.b16 %v2368
    %v2991 = vunpack.c.h.b16 %v2368
    %v2992 = vunpack.c.l.b16 %v2369
    %v2993 = vunpack.c.h.b16 %v2369
    %v2994 = vunpack.c.l.b16 %v2370
    %v2995 = vunpack.c.l.b16 %v2371
    %v2996 = vunpack.c.h.b16 %v2371
    %v2997 = vunpack.c.l.b16 %v2372
    %v2998 = vunpack.c.h.b16 %v2372
    %v2999 = vunpack.c.l.b16 %v2373
    %v3000 = vunpack.c.h.b16 %v2373
    %v3001 = vunpack.c.l.b16 %v2374
    %v3002 = vunpack.c.l.b16 %v2375
    %v3003 = vunpack.c.h.b16 %v2375
    %v3004 = vunpack.c.l.b16 %v2376
    %v3005 = vunpack.c.h.b16 %v2376
    %v3006 = vunpack.c.l.b16 %v2377
    %v3007 = vunpack.c.h.b16 %v2377
    %v3008 = vunpack.c.l.b16 %v2378
    %v3009 = vunpack.c.l.b16 %v2379
    %v3010 = vunpack.c.h.b16 %v2379
    %v3011 = vunpack.c.l.b16 %v2380
    %v3012 = vunpack.c.h.b16 %v2380
    %v3013 = vunpack.c.l.b16 %v2381
    %v3014 = vunpack.c.h.b16 %v2381
    %v3015 = vunpack.c.l.b16 %v2382
    %v3016 = vunpack.c.l.b16 %v2383
    %v3017 = vunpack.c.h.b16 %v2383
    %v3018 = vunpack.c.l.b16 %v2384
    %v3019 = vunpack.c.h.b16 %v2384
    %v3020 = vunpack.c.l.b16 %v2385
    %v3021 = vunpack.c.h.b16 %v2385
    %v3022 = vunpack.c.l.b16 %v2386
    %v3023 = vunpack.c.l.b16 %v2387
    %v3024 = vunpack.c.h.b16 %v2387
    %v3025 = vunpack.c.l.b16 %v2388
    %v3026 = vunpack.c.h.b16 %v2388
    %v3027 = vunpack.c.l.b16 %v2389
    %v3028 = vunpack.c.h.b16 %v2389
    %v3029 = vunpack.c.l.b16 %v2390
    %v3030 = vunpack.c.l.b16 %v2391
    %v3031 = vunpack.c.h.b16 %v2391
    %v3032 = vunpack.c.l.b16 %v2392
    %v3033 = vunpack.c.h.b16 %v2392
    %v3034 = vunpack.c.l.b16 %v2393
    %v3035 = vunpack.c.h.b16 %v2393
    %v3036 = vunpack.c.l.b16 %v2394
    %v3037 = vunpack.c.l.b16 %v2395
    %v3038 = vunpack.c.h.b16 %v2395
    %v3039 = vunpack.c.l.b16 %v2396
    %v3040 = vunpack.c.h.b16 %v2396
    %v3041 = vunpack.c.l.b16 %v2397
    %v3042 = vunpack.c.h.b16 %v2397
    %v3043 = vunpack.c.l.b16 %v2398
    %v3044 = vunpack.c.l.b16 %v2399
    %v3045 = vunpack.c.h.b16 %v2399
    %v3046 = vunpack.c.l.b16 %v2400
    %v3047 = vunpack.c.h.b16 %v2400
    %v3048 = vunpack.c.l.b16 %v2401
    %v3049 = vunpack.c.h.b16 %v2401
    %v3050 = vunpack.c.l.b16 %v2402
    %v3051 = vunpack.c.l.b16 %v2403
    %v3052 = vunpack.c.h.b16 %v2403
    %v3053 = vunpack.c.l.b16 %v2404
    %v3054 = vunpack.c.h.b16 %v2404
    %v3055 = vunpack.c.l.b16 %v2405
    %v3056 = vunpack.c.h.b16 %v2405
    %v3057 = vunpack.c.l.b16 %v2406
    %v3058 = vunpack.c.l.b16 %v2407
    %v3059 = vunpack.c.h.b16 %v2407
    %v3060 = vunpack.c.l.b16 %v2408
    %v3061 = vunpack.c.h.b16 %v2408
    %v3062 = vunpack.c.l.b16 %v2409
    %v3063 = vunpack.c.h.b16 %v2409
    %v3064 = vunpack.c.l.b16 %v2410
    %v3065 = vunpack.c.l.b16 %v2411
    %v3066 = vunpack.c.h.b16 %v2411
    %v3067 = vunpack.c.l.b16 %v2412
    %v3068 = vunpack.c.h.b16 %v2412
    %v3069 = vunpack.c.l.b16 %v2413
    %v3070 = vunpack.c.h.b16 %v2413
    %v3071 = vunpack.c.l.b16 %v2414
    %v3072 = vunpack.c.l.b16 %v2415
    %v3073 = vunpack.c.h.b16 %v2415
    %v3074 = vunpack.c.l.b16 %v2416
    %v3075 = vunpack.c.h.b16 %v2416
    %v3076 = vunpack.c.l.b16 %v2417
    %v3077 = vunpack.c.h.b16 %v2417
    %v3078 = vunpack.c.l.b16 %v2418
    %v3079 = vunpack.c.l.b16 %v2419
    %v3080 = vunpack.c.h.b16 %v2419
    %v3081 = vunpack.c.l.b16 %v2420
    %v3082 = vunpack.c.h.b16 %v2420
    %v3083 = vunpack.c.l.b16 %v2421
    %v3084 = vunpack.c.h.b16 %v2421
    %v3085 = vunpack.c.l.b16 %v2422
    %v3086 = vunpack.c.l.b16 %v2423
    %v3087 = vunpack.c.h.b16 %v2423
    %v3088 = vunpack.c.l.b16 %v2424
    %v3089 = vunpack.c.h.b16 %v2424
    %v3090 = vunpack.c.l.b16 %v2425
    %v3091 = vunpack.c.h.b16 %v2425
    %v3092 = vunpack.c.l.b16 %v2426
    %v3093 = vunpack.c.l.b16 %v2427
    %v3094 = vunpack.c.h.b16 %v2427
    %v3095 = vunpack.c.l.b16 %v2428
    %v3096 = vunpack.c.h.b16 %v2428
    %v3097 = vunpack.c.l.b16 %v2429
    %v3098 = vunpack.c.h.b16 %v2429
    %v3099 = vunpack.c.l.b16 %v2430
    %v3100 = vunpack.c.l.b16 %v2431
    %v3101 = vunpack.c.h.b16 %v2431
    %v3102 = vunpack.c.l.b16 %v2432
    %v3103 = vunpack.c.h.b16 %v2432
    %v3104 = vunpack.c.l.b16 %v2433
    %v3105 = vunpack.c.h.b16 %v2433
    %v3106 = vunpack.c.l.b16 %v2434
    %v3107 = vunpack.c.l.b16 %v2435
    %v3108 = vunpack.c.h.b16 %v2435
    %v3109 = vunpack.c.l.b16 %v2436
    %v3110 = vunpack.c.h.b16 %v2436
    %v3111 = vunpack.c.l.b16 %v2437
    %v3112 = vunpack.c.h.b16 %v2437
    %v3113 = vunpack.c.l.b16 %v2438
    %v3114 = vunpack.c.l.b16 %v2439
    %v3115 = vunpack.c.h.b16 %v2439
    %v3116 = vunpack.c.l.b16 %v2440
    %v3117 = vunpack.c.h.b16 %v2440
    %v3118 = vunpack.c.l.b16 %v2441
    %v3119 = vunpack.c.h.b16 %v2441
    %v3120 = vunpack.c.l.b16 %v2442
    %v3121 = vunpack.c.l.b16 %v2443
    %v3122 = vunpack.c.h.b16 %v2443
    %v3123 = vunpack.c.l.b16 %v2444
    %v3124 = vunpack.c.h.b16 %v2444
    %v3125 = vunpack.c.l.b16 %v2445
    %v3126 = vunpack.c.h.b16 %v2445
    %v3127 = vunpack.c.l.b16 %v2446
    %v3128 = vunpack.c.l.b16 %v2447
    %v3129 = vunpack.c.h.b16 %v2447
    %v3130 = vunpack.c.l.b16 %v2448
    %v3131 = vunpack.c.h.b16 %v2448
    %v3132 = vunpack.c.l.b16 %v2449
    %v3133 = vunpack.c.h.b16 %v2449
    %v3134 = vunpack.c.l.b16 %v2450
    %v3135 = vunpack.c.l.b16 %v2451
    %v3136 = vunpack.c.h.b16 %v2451
    %v3137 = vunpack.c.l.b16 %v2452
    %v3138 = vunpack.c.h.b16 %v2452
    %v3139 = vunpack.c.l.b16 %v2453
    %v3140 = vunpack.c.h.b16 %v2453
    %v3141 = vunpack.c.l.b16 %v2454
    %v3142 = vunpack.c.l.b16 %v2455
    %v3143 = vunpack.c.h.b16 %v2455
    %v3144 = vunpack.c.l.b16 %v2456
    %v3145 = vunpack.c.h.b16 %v2456
    %v3146 = vunpack.c.l.b16 %v2457
    %v3147 = vunpack.c.h.b16 %v2457
    %v3148 = vunpack.c.l.b16 %v2458
    %v3149 = vunpack.c.l.b16 %v2459
    %v3150 = vunpack.c.h.b16 %v2459
    %v3151 = vunpack.c.l.b16 %v2460
    %v3152 = vunpack.c.h.b16 %v2460
    %v3153 = vunpack.c.l.b16 %v2461
    %v3154 = vunpack.c.h.b16 %v2461
    %v3155 = vunpack.c.l.b16 %v2462
    %v3156 = vunpack.c.l.b16 %v2463
    %v3157 = vunpack.c.h.b16 %v2463
    %v3158 = vunpack.c.l.b16 %v2464
    %v3159 = vunpack.c.h.b16 %v2464
    %v3160 = vunpack.c.l.b16 %v2465
    %v3161 = vunpack.c.h.b16 %v2465
    %v3162 = vunpack.c.l.b16 %v2466
    %v3163 = vunpack.c.l.b16 %v2467
    %v3164 = vunpack.c.h.b16 %v2467
    %v3165 = vunpack.c.l.b16 %v2468
    %v3166 = vunpack.c.h.b16 %v2468
    %v3167 = vunpack.c.l.b16 %v2469
    %v3168 = vunpack.c.h.b16 %v2469
    %v3169 = vunpack.c.l.b16 %v2470
    %v3170 = vunpack.c.l.b16 %v2471
    %v3171 = vunpack.c.h.b16 %v2471
    %v3172 = vunpack.c.l.b16 %v2472
    %v3173 = vunpack.c.h.b16 %v2472
    %v3174 = vunpack.c.l.b16 %v2473
    %v3175 = vunpack.c.h.b16 %v2473
    %v3176 = vunpack.c.l.b16 %v2474
    %v3177 = vunpack.c.l.b16 %v2475
    %v3178 = vunpack.c.h.b16 %v2475
    %v3179 = vunpack.c.l.b16 %v2476
    %v3180 = vunpack.c.h.b16 %v2476
    %v3181 = vunpack.c.l.b16 %v2477
    %v3182 = vunpack.c.h.b16 %v2477
    %v3183 = vunpack.c.l.b16 %v2478
    %v3184 = vunpack.c.l.b16 %v2479
    %v3185 = vunpack.c.h.b16 %v2479
    %v3186 = vunpack.c.l.b16 %v2480
    %v3187 = vunpack.c.h.b16 %v2480
    %v3188 = vunpack.c.l.b16 %v2481
    %v3189 = vunpack.c.h.b16 %v2481
    %v3190 = vunpack.c.l.b16 %v2482
    %v3191 = vunpack.c.l.b16 %v2483
    %v3192 = vunpack.c.h.b16 %v2483
    %v3193 = vunpack.c.l.b16 %v2484
    %v3194 = vunpack.c.h.b16 %v2484
    %v3195 = vunpack.c.l.b16 %v2485
    %v3196 = vunpack.c.h.b16 %v2485
    %v3197 = vunpack.c.l.b16 %v2486
    %v3198 = vunpack.c.l.b16 %v2487
    %v3199 = vunpack.c.h.b16 %v2487
    %v3200 = vunpack.c.l.b16 %v2488
    %v3201 = vunpack.c.h.b16 %v2488
    %v3202 = vunpack.c.l.b16 %v2489
    %v3203 = vunpack.c.h.b16 %v2489
    %v3204 = vunpack.c.l.b16 %v2490
    %v3205 = vunpack.c.l.b16 %v2491
    %v3206 = vunpack.c.h.b16 %v2491
    %v3207 = vunpack.c.l.b16 %v2492
    %v3208 = vunpack.c.h.b16 %v2492
    %v3209 = vunpack.c.l.b16 %v2493
    %v3210 = vunpack.c.h.b16 %v2493
    %v3211 = vunpack.c.l.b16 %v2494
    %v3212 = vunpack.c.l.b16 %v2495
    %v3213 = vunpack.c.h.b16 %v2495
    %v3214 = vunpack.c.l.b16 %v2496
    %v3215 = vunpack.c.h.b16 %v2496
    %v3216 = vunpack.c.l.b16 %v2497
    %v3217 = vunpack.c.h.b16 %v2497
    %v3218 = vunpack.c.l.b16 %v2498
    %v3219 = vunpack.c.l.b16 %v2499
    %v3220 = vunpack.c.h.b16 %v2499
    %v3221 = vunpack.c.l.b16 %v2500
    %v3222 = vunpack.c.h.b16 %v2500
    %v3223 = vunpack.c.l.b16 %v2501
    %v3224 = vunpack.c.h.b16 %v2501
    %v3225 = vunpack.c.l.b16 %v2502
    %v3226 = vunpack.c.l.b16 %v2503
    %v3227 = vunpack.c.h.b16 %v2503
    %v3228 = vunpack.c.l.b16 %v2504
    %v3229 = vunpack.c.h.b16 %v2504
    %v3230 = vunpack.c.l.b16 %v2505
    %v3231 = vunpack.c.h.b16 %v2505
    %v3232 = vunpack.c.l.b16 %v2506
    %v3233 = vunpack.c.l.b16 %v2507
    %v3234 = vunpack.c.h.b16 %v2507
    %v3235 = vunpack.c.l.b16 %v2508
    %v3236 = vunpack.c.h.b16 %v2508
    %v3237 = vunpack.c.l.b16 %v2509
    %v3238 = vunpack.c.h.b16 %v2509
    %v3239 = vunpack.c.l.b16 %v2510
    %v3240 = vunpack.c.l.b16 %v2511
    %v3241 = vunpack.c.h.b16 %v2511
    %v3242 = vunpack.c.l.b16 %v2512
    %v3243 = vunpack.c.h.b16 %v2512
    %v3244 = vunpack.c.l.b16 %v2513
    %v3245 = vunpack.c.h.b16 %v2513
    %v3246 = vunpack.c.l.b16 %v2514
    %v3247 = vunpack.c.l.b16 %v2515
    %v3248 = vunpack.c.h.b16 %v2515
    %v3249 = vunpack.c.l.b16 %v2516
    %v3250 = vunpack.c.h.b16 %v2516
    %v3251 = vunpack.c.l.b16 %v2517
    %v3252 = vunpack.c.h.b16 %v2517
    %v3253 = vunpack.c.l.b16 %v2518
    %v3254 = vunpack.c.l.b16 %v2519
    %v3255 = vunpack.c.h.b16 %v2519
    %v3256 = vunpack.c.l.b16 %v2520
    %v3257 = vunpack.c.h.b16 %v2520
    %v3258 = vunpack.c.l.b16 %v2521
    %v3259 = vunpack.c.h.b16 %v2521
    %v3260 = vunpack.c.l.b16 %v2522
    %v3261 = vunpack.c.l.b16 %v2523
    %v3262 = vunpack.c.h.b16 %v2523
    %v3263 = vunpack.c.l.b16 %v2524
    %v3264 = vunpack.c.h.b16 %v2524
    %v3265 = vunpack.c.l.b16 %v2525
    %v3266 = vunpack.c.h.b16 %v2525
    %v3267 = vunpack.c.l.b16 %v2526
    %v3268 = vpack.c.b16 %v2827, %v2820
    %v3269 = vpack.c.b16 %v2828, %v2821
    %v3270 = vpack.c.b16 %v2829, %v2822
    %v3271 = vpack.c.b16 %v2830, %v2823
    %v3272 = vpack.c.b16 %v2831, %v2824
    %v3273 = vpack.c.b16 %v2832, %v2825
    %v3274 = vpack.c.b16 %v2833, %v2826
    %v3275 = vpack.c.b16 %v2841, %v2834
    %v3276 = vpack.c.b16 %v2842, %v2835
    %v3277 = vpack.c.b16 %v2843, %v2836
    %v3278 = vpack.c.b16 %v2844, %v2837
    %v3279 = vpack.c.b16 %v2845, %v2838
    %v3280 = vpack.c.b16 %v2846, %v2839
    %v3281 = vpack.c.b16 %v2847, %v2840
    %v3282 = vpack.c.b16 %v2855, %v2848
    %v3283 = vpack.c.b16 %v2856, %v2849
    %v3284 = vpack.c.b16 %v2857, %v2850
    %v3285 = vpack.c.b16 %v2858, %v2851
    %v3286 = vpack.c.b16 %v2859, %v2852
    %v3287 = vpack.c.b16 %v2860, %v2853
    %v3288 = vpack.c.b16 %v2861, %v2854
    %v3289 = vpack.c.b16 %v2869, %v2862
    %v3290 = vpack.c.b16 %v2870, %v2863
    %v3291 = vpack.c.b16 %v2871, %v2864
    %v3292 = vpack.c.b16 %v2872, %v2865
    %v3293 = vpack.c.b16 %v2873, %v2866
    %v3294 = vpack.c.b16 %v2874, %v2867
    %v3295 = vpack.c.b16 %v2875, %v2868
    %v3296 = vpack.c.b16 %v2883, %v2876
    %v3297 = vpack.c.b16 %v2884, %v2877
    %v3298 = vpack.c.b16 %v2885, %v2878
    %v3299 = vpack.c.b16 %v2886, %v2879
    %v3300 = vpack.c.b16 %v2887, %v2880
    %v3301 = vpack.c.b16 %v2888, %v2881
    %v3302 = vpack.c.b16 %v2889, %v2882
    %v3303 = vpack.c.b16 %v2897, %v2890
    %v3304 = vpack.c.b16 %v2898, %v2891
    %v3305 = vpack.c.b16 %v2899, %v2892
    %v3306 = vpack.c.b16 %v2900, %v2893
    %v3307 = vpack.c.b16 %v2901, %v2894
    %v3308 = vpack.c.b16 %v2902, %v2895
    %v3309 = vpack.c.b16 %v2903, %v2896
    %v3310 = vpack.c.b16 %v2911, %v2904
    %v3311 = vpack.c.b16 %v2912, %v2905
    %v3312 = vpack.c.b16 %v2913, %v2906
    %v3313 = vpack.c.b16 %v2914, %v2907
    %v3314 = vpack.c.b16 %v2915, %v2908
    %v3315 = vpack.c.b16 %v2916, %v2909
    %v3316 = vpack.c.b16 %v2917, %v2910
    %v3317 = vpack.c.b16 %v2925, %v2918
    %v3318 = vpack.c.b16 %v2926, %v2919
    %v3319 = vpack.c.b16 %v2927, %v2920
    %v3320 = vpack.c.b16 %v2928, %v2921
    %v3321 = vpack.c.b16 %v2929, %v2922
    %v3322 = vpack.c.b16 %v2930, %v2923
    %v3323 = vpack.c.b16 %v2931, %v2924
    %v3324 = vpack.c.b16 %v2939, %v2932
    %v3325 = vpack.c.b16 %v2940, %v2933
    %v3326 = vpack.c.b16 %v2941, %v2934
    %v3327 = vpack.c.b16 %v2942, %v2935
    %v3328 = vpack.c.b16 %v2943, %v2936
    %v3329 = vpack.c.b16 %v2944, %v2937
    %v3330 = vpack.c.b16 %v2945, %v2938
    %v3331 = vpack.c.b16 %v2953, %v2946
    %v3332 = vpack.c.b16 %v2954, %v2947
    %v3333 = vpack.c.b16 %v2955, %v2948
    %v3334 = vpack.c.b16 %v2956, %v2949
    %v3335 = vpack.c.b16 %v2957, %v2950
    %v3336 = vpack.c.b16 %v2958, %v2951
    %v3337 = vpack.c.b16 %v2959, %v2952
    %v3338 = vpack.c.b16 %v2967, %v2960
    %v3339 = vpack.c.b16 %v2968, %v2961
    %v3340 = vpack.c.b16 %v2969, %v2962
    %v3341 = vpack.c.b16 %v2970, %v2963
    %v3342 = vpack.c.b16 %v2971, %v2964
    %v3343 = vpack.c.b16 %v2972, %v2965
    %v3344 = vpack.c.b16 %v2973, %v2966
    %v3345 = vpack.c.b16 %v2981, %v2974
    %v3346 = vpack.c.b16 %v2982, %v2975
    %v3347 = vpack.c.b16 %v2983, %v2976
    %v3348 = vpack.c.b16 %v2984, %v2977
    %v3349 = vpack.c.b16 %v2985, %v2978
    %v3350 = vpack.c.b16 %v2986, %v2979
    %v3351 = vpack.c.b16 %v2987, %v2980
    %v3352 = vpack.c.b16 %v2995, %v2988
    %v3353 = vpack.c.b16 %v2996, %v2989
    %v3354 = vpack.c.b16 %v2997, %v2990
    %v3355 = vpack.c.b16 %v2998, %v2991
    %v3356 = vpack.c.b16 %v2999, %v2992
    %v3357 = vpack.c.b16 %v3000, %v2993
    %v3358 = vpack.c.b16 %v3001, %v2994
    %v3359 = vpack.c.b16 %v3009, %v3002
    %v3360 = vpack.c.b16 %v3010, %v3003
    %v3361 = vpack.c.b16 %v3011, %v3004
    %v3362 = vpack.c.b16 %v3012, %v3005
    %v3363 = vpack.c.b16 %v3013, %v3006
    %v3364 = vpack.c.b16 %v3014, %v3007
    %v3365 = vpack.c.b16 %v3015, %v3008
    %v3366 = vpack.c.b16 %v3023, %v3016
    %v3367 = vpack.c.b16 %v3024, %v3017
    %v3368 = vpack.c.b16 %v3025, %v3018
    %v3369 = vpack.c.b16 %v3026, %v3019
    %v3370 = vpack.c.b16 %v3027, %v3020
    %v3371 = vpack.c.b16 %v3028, %v3021
    %v3372 = vpack.c.b16 %v3029, %v3022
    %v3373 = vpack.c.b16 %v3037, %v3030
    %v3374 = vpack.c.b16 %v3038, %v3031
    %v3375 = vpack.c.b16 %v3039, %v3032
    %v3376 = vpack.c.b16 %v3040, %v3033
    %v3377 = vpack.c.b16 %v3041, %v3034
    %v3378 = vpack.c.b16 %v3042, %v3035
    %v3379 = vpack.c.b16 %v3043, %v3036
    %v3380 = vpack.c.b16 %v3051, %v3044
    %v3381 = vpack.c.b16 %v3052, %v3045
    %v3382 = vpack.c.b16 %v3053, %v3046
    %v3383 = vpack.c.b16 %v3054, %v3047
    %v3384 = vpack.c.b16 %v3055, %v3048
    %v3385 = vpack.c.b16 %v3056, %v3049
    %v3386 = vpack.c.b16 %v3057, %v3050
    %v3387 = vpack.c.b16 %v3065, %v3058
    %v3388 = vpack.c.b16 %v3066, %v3059
    %v3389 = vpack.c.b16 %v3067, %v3060
    %v3390 = vpack.c.b16 %v3068, %v3061
    %v3391 = vpack.c.b16 %v3069, %v3062
    %v3392 = vpack.c.b16 %v3070, %v3063
    %v3393 = vpack.c.b16 %v3071, %v3064
    %v3394 = vpack.c.b16 %v3079, %v3072
    %v3395 = vpack.c.b16 %v3080, %v3073
    %v3396 = vpack.c.b16 %v3081, %v3074
    %v3397 = vpack.c.b16 %v3082, %v3075
    %v3398 = vpack.c.b16 %v3083, %v3076
    %v3399 = vpack.c.b16 %v3084, %v3077
    %v3400 = vpack.c.b16 %v3085, %v3078
    %v3401 = vpack.c.b16 %v3093, %v3086
    %v3402 = vpack.c.b16 %v3094, %v3087
    %v3403 = vpack.c.b16 %v3095, %v3088
    %v3404 = vpack.c.b16 %v3096, %v3089
    %v3405 = vpack.c.b16 %v3097, %v3090
    %v3406 = vpack.c.b16 %v3098, %v3091
    %v3407 = vpack.c.b16 %v3099, %v3092
    %v3408 = vpack.c.b16 %v3107, %v3100
    %v3409 = vpack.c.b16 %v3108, %v3101
    %v3410 = vpack.c.b16 %v3109, %v3102
    %v3411 = vpack.c.b16 %v3110, %v3103
    %v3412 = vpack.c.b16 %v3111, %v3104
    %v3413 = vpack.c.b16 %v3112, %v3105
    %v3414 = vpack.c.b16 %v3113, %v3106
    %v3415 = vpack.c.b16 %v3121, %v3114
    %v3416 = vpack.c.b16 %v3122, %v3115
    %v3417 = vpack.c.b16 %v3123, %v3116
    %v3418 = vpack.c.b16 %v3124, %v3117
    %v3419 = vpack.c.b16 %v3125, %v3118
    %v3420 = vpack.c.b16 %v3126, %v3119
    %v3421 = vpack.c.b16 %v3127, %v3120
    %v3422 = vpack.c.b16 %v3135, %v3128
    %v3423 = vpack.c.b16 %v3136, %v3129
    %v3424 = vpack.c.b16 %v3137, %v3130
    %v3425 = vpack.c.b16 %v3138, %v3131
    %v3426 = vpack.c.b16 %v3139, %v3132
    %v3427 = vpack.c.b16 %v3140, %v3133
    %v3428 = vpack.c.b16 %v3141, %v3134
    %v3429 = vpack.c.b16 %v3149, %v3142
    %v3430 = vpack.c.b16 %v3150, %v3143
    %v3431 = vpack.c.b16 %v3151, %v3144
    %v3432 = vpack.c.b16 %v3152, %v3145
    %v3433 = vpack.c.b16 %v3153, %v3146
    %v3434 = vpack.c.b16 %v3154, %v3147
    %v3435 = vpack.c.b16 %v3155, %v3148
    %v3436 = vpack.c.b16 %v3163, %v3156
    %v3437 = vpack.c.b16 %v3164, %v3157
    %v3438 = vpack.c.b16 %v3165, %v3158
    %v3439 = vpack.c.b16 %v3166, %v3159
    %v3440 = vpack.c.b16 %v3167, %v3160
    %v3441 = vpack.c.b16 %v3168, %v3161
    %v3442 = vpack.c.b16 %v3169, %v3162
    %v3443 = vpack.c.b16 %v3177, %v3170
    %v3444 = vpack.c.b16 %v3178, %v3171
    %v3445 = vpack.c.b16 %v3179, %v3172
    %v3446 = vpack.c.b16 %v3180, %v3173
    %v3447 = vpack.c.b16 %v3181, %v3174
    %v3448 = vpack.c.b16 %v3182, %v3175
    %v3449 = vpack.c.b16 %v3183, %v3176
    %v3450 = vpack.c.b16 %v3191, %v3184
    %v3451 = vpack.c.b16 %v3192, %v3185
    %v3452 = vpack.c.b16 %v3193, %v3186
    %v3453 = vpack.c.b16 %v3194, %v3187
    %v3454 = vpack.c.b16 %v3195, %v3188
    %v3455 = vpack.c.b16 %v3196, %v3189
    %v3456 = vpack.c.b16 %v3197, %v3190
    %v3457 = vpack.c.b16 %v3205, %v3198
    %v3458 = vpack.c.b16 %v3206, %v3199
    %v3459 = vpack.c.b16 %v3207, %v3200
    %v3460 = vpack.c.b16 %v3208, %v3201
    %v3461 = vpack.c.b16 %v3209, %v3202
    %v3462 = vpack.c.b16 %v3210, %v3203
    %v3463 = vpack.c.b16 %v3211, %v3204
    %v3464 = vpack.c.b16 %v3219, %v3212
    %v3465 = vpack.c.b16 %v3220, %v3213
    %v3466 = vpack.c.b16 %v3221, %v3214
    %v3467 = vpack.c.b16 %v3222, %v3215
    %v3468 = vpack.c.b16 %v3223, %v3216
    %v3469 = vpack.c.b16 %v3224, %v3217
    %v3470 = vpack.c.b16 %v3225, %v3218
    %v3471 = vpack.c.b16 %v3233, %v3226
    %v3472 = vpack.c.b16 %v3234, %v3227
    %v3473 = vpack.c.b16 %v3235, %v3228
    %v3474 = vpack.c.b16 %v3236, %v3229
    %v3475 = vpack.c.b16 %v3237, %v3230
    %v3476 = vpack.c.b16 %v3238, %v3231
    %v3477 = vpack.c.b16 %v3239, %v3232
    %v3478 = vpack.c.b16 %v3247, %v3240
    %v3479 = vpack.c.b16 %v3248, %v3241
    %v3480 = vpack.c.b16 %v3249, %v3242
    %v3481 = vpack.c.b16 %v3250, %v3243
    %v3482 = vpack.c.b16 %v3251, %v3244
    %v3483 = vpack.c.b16 %v3252, %v3245
    %v3484 = vpack.c.b16 %v3253, %v3246
    %v3485 = vpack.c.b16 %v3261, %v3254
    %v3486 = vpack.c.b16 %v3262, %v3255
    %v3487 = vpack.c.b16 %v3263, %v3256
    %v3488 = vpack.c.b16 %v3264, %v3257
    %v3489 = vpack.c.b16 %v3265, %v3258
    %v3490 = vpack.c.b16 %v3266, %v3259
    %v3491 = vpack.c.b16 %v3267, %v3260
    %3716 = vmatprep.subr.bf16.mxu0 %v3269
    %3717 = vmatpush1.bf16.msra.mxu0 %v3268
    %3718 = vmatprep.subr.bf16.mxu0 %v3276
    %3719 = vmatpush1.bf16.msra.mxu0 %v3275
    %3720 = vmatprep.subr.bf16.mxu0 %v3283
    %3721 = vmatpush1.bf16.msra.mxu0 %v3282
    %3722 = vmatprep.subr.bf16.mxu0 %v3290
    %3723 = vmatpush1.bf16.msra.mxu0 %v3289
    %3724 = vmatprep.subr.bf16.mxu0 %v3297
    %3725 = vmatpush1.bf16.msra.mxu0 %v3296
    %3726 = vmatprep.subr.bf16.mxu0 %v3304
    %3727 = vmatpush1.bf16.msra.mxu0 %v3303
    %3728 = vmatprep.subr.bf16.mxu0 %v3311
    %3729 = vmatpush1.bf16.msra.mxu0 %v3310
    %3730 = vmatprep.subr.bf16.mxu0 %v3318
    %3731 = vmatpush1.bf16.msra.mxu0 %v3317
    %3732 = vmatprep.subr.bf16.mxu0 %v3325
    %3733 = vmatpush1.bf16.msra.mxu0 %v3324
    %3734 = vmatprep.subr.bf16.mxu0 %v3332
    %3735 = vmatpush1.bf16.msra.mxu0 %v3331
    %3736 = vmatprep.subr.bf16.mxu0 %v3339
    %3737 = vmatpush1.bf16.msra.mxu0 %v3338
    %3738 = vmatprep.subr.bf16.mxu0 %v3346
    %3739 = vmatpush1.bf16.msra.mxu0 %v3345
    %3740 = vmatprep.subr.bf16.mxu0 %v3353
    %3741 = vmatpush1.bf16.msra.mxu0 %v3352
    %3742 = vmatprep.subr.bf16.mxu0 %v3360
    %3743 = vmatpush1.bf16.msra.mxu0 %v3359
    %3744 = vmatprep.subr.bf16.mxu0 %v3367
    %3745 = vmatpush1.bf16.msra.mxu0 %v3366
    %3746 = vmatprep.subr.bf16.mxu0 %v3374
    %3747 = vmatpush1.bf16.msra.mxu0 %v3373
    %3748 = vmatprep.mubr.bf16.mxu0 %v2268
    %3749 = vmatmul.mubr.bf16.gmra.mrb[0].mxu0 %v2267
    %v3750 = vpop.f32.mrb[0].mxu0
    %v3751 = vadd.f32 %v2532, %v3750
    %v3752 = vpop.f32.mrb[0].mxu0
    %v3753 = vadd.f32 %v2536, %v3752
    %v3754 = vpop.f32.mrb[0].mxu0
    %v3755 = vadd.f32 %v2532, %v3754
    %v3756 = vpop.f32.mrb[0].mxu0
    %v3757 = vadd.f32 %v2536, %v3756
    %3758 = vdwg.mxu0
    %3759 = vmatprep.subr.bf16.mxu0 %v3381
    %3760 = vmatpush1.bf16.msra.mxu0 %v3380
    %3761 = vmatprep.subr.bf16.mxu0 %v3388
    %3762 = vmatpush1.bf16.msra.mxu0 %v3387
    %3763 = vmatprep.subr.bf16.mxu0 %v3395
    %3764 = vmatpush1.bf16.msra.mxu0 %v3394
    %3765 = vmatprep.subr.bf16.mxu0 %v3402
    %3766 = vmatpush1.bf16.msra.mxu0 %v3401
    %3767 = vmatprep.subr.bf16.mxu0 %v3409
    %3768 = vmatpush1.bf16.msra.mxu0 %v3408
    %3769 = vmatprep.subr.bf16.mxu0 %v3416
    %3770 = vmatpush1.bf16.msra.mxu0 %v3415
    %3771 = vmatprep.subr.bf16.mxu0 %v3423
    %3772 = vmatpush1.bf16.msra.mxu0 %v3422
    %3773 = vmatprep.subr.bf16.mxu0 %v3430
    %3774 = vmatpush1.bf16.msra.mxu0 %v3429
    %3775 = vmatprep.subr.bf16.mxu0 %v3437
    %3776 = vmatpush1.bf16.msra.mxu0 %v3436
    %3777 = vmatprep.subr.bf16.mxu0 %v3444
    %3778 = vmatpush1.bf16.msra.mxu0 %v3443
    %3779 = vmatprep.subr.bf16.mxu0 %v3451
    %3780 = vmatpush1.bf16.msra.mxu0 %v3450
    %3781 = vmatprep.subr.bf16.mxu0 %v3458
    %3782 = vmatpush1.bf16.msra.mxu0 %v3457
    %3783 = vmatprep.subr.bf16.mxu0 %v3465
    %3784 = vmatpush1.bf16.msra.mxu0 %v3464
    %3785 = vmatprep.subr.bf16.mxu0 %v3472
    %3786 = vmatpush1.bf16.msra.mxu0 %v3471
    %3787 = vmatprep.subr.bf16.mxu0 %v3479
    %3788 = vmatpush1.bf16.msra.mxu0 %v3478
    %3789 = vmatprep.subr.bf16.mxu0 %v3486
    %3790 = vmatpush1.bf16.msra.mxu0 %v3485
    %3791 = vmatprep.mubr.bf16.mxu0 %v2270
    %3792 = vmatmul.mubr.bf16.gmra.mrb[0].mxu0 %v2269
    %v3793 = vpop.f32.mrb[0].mxu0
    %v3794 = vadd.f32 %v3751, %v3793
    %v3795 = vpop.f32.mrb[0].mxu0
    %v3796 = vadd.f32 %v3753, %v3795
    %v3797 = vpop.f32.mrb[0].mxu0
    %v3798 = vadd.f32 %v3755, %v3797
    %v3799 = vpop.f32.mrb[0].mxu0
    %v3800 = vadd.f32 %v3757, %v3799
    %3801 = vdwg.mxu0
    %3802 = vmatprep.subr.bf16.mxu0 %v3271
    %3803 = vmatpush1.bf16.msra.mxu0 %v3270
    %3804 = vmatprep.subr.bf16.mxu0 %v3278
    %3805 = vmatpush1.bf16.msra.mxu0 %v3277
    %3806 = vmatprep.subr.bf16.mxu0 %v3285
    %3807 = vmatpush1.bf16.msra.mxu0 %v3284
    %3808 = vmatprep.subr.bf16.mxu0 %v3292
    %3809 = vmatpush1.bf16.msra.mxu0 %v3291
    %3810 = vmatprep.subr.bf16.mxu0 %v3299
    %3811 = vmatpush1.bf16.msra.mxu0 %v3298
    %3812 = vmatprep.subr.bf16.mxu0 %v3306
    %3813 = vmatpush1.bf16.msra.mxu0 %v3305
    %3814 = vmatprep.subr.bf16.mxu0 %v3313
    %3815 = vmatpush1.bf16.msra.mxu0 %v3312
    %3816 = vmatprep.subr.bf16.mxu0 %v3320
    %3817 = vmatpush1.bf16.msra.mxu0 %v3319
    %3818 = vmatprep.subr.bf16.mxu0 %v3327
    %3819 = vmatpush1.bf16.msra.mxu0 %v3326
    %3820 = vmatprep.subr.bf16.mxu0 %v3334
    %3821 = vmatpush1.bf16.msra.mxu0 %v3333
    %3822 = vmatprep.subr.bf16.mxu0 %v3341
    %3823 = vmatpush1.bf16.msra.mxu0 %v3340
    %3824 = vmatprep.subr.bf16.mxu0 %v3348
    %3825 = vmatpush1.bf16.msra.mxu0 %v3347
    %3826 = vmatprep.subr.bf16.mxu0 %v3355
    %3827 = vmatpush1.bf16.msra.mxu0 %v3354
    %3828 = vmatprep.subr.bf16.mxu0 %v3362
    %3829 = vmatpush1.bf16.msra.mxu0 %v3361
    %3830 = vmatprep.subr.bf16.mxu0 %v3369
    %3831 = vmatpush1.bf16.msra.mxu0 %v3368
    %3832 = vmatprep.subr.bf16.mxu0 %v3376
    %3833 = vmatpush1.bf16.msra.mxu0 %v3375
    %3834 = vmatprep.mubr.bf16.mxu0 %v2268
    %3835 = vmatmul.mubr.bf16.gmra.mrb[0].mxu0 %v2267
    %v3836 = vpop.f32.mrb[0].mxu0
    %v3837 = vadd.f32 %v2540, %v3836
    %v3838 = vpop.f32.mrb[0].mxu0
    %v3839 = vadd.f32 %v2544, %v3838
    %v3840 = vpop.f32.mrb[0].mxu0
    %v3841 = vadd.f32 %v2540, %v3840
    %v3842 = vpop.f32.mrb[0].mxu0
    %v3843 = vadd.f32 %v2544, %v3842
    %3844 = vdwg.mxu0
    %3845 = vmatprep.subr.bf16.mxu0 %v3383
    %3846 = vmatpush1.bf16.msra.mxu0 %v3382
    %3847 = vmatprep.subr.bf16.mxu0 %v3390
    %3848 = vmatpush1.bf16.msra.mxu0 %v3389
    %3849 = vmatprep.subr.bf16.mxu0 %v3397
    %3850 = vmatpush1.bf16.msra.mxu0 %v3396
    %3851 = vmatprep.subr.bf16.mxu0 %v3404
    %3852 = vmatpush1.bf16.msra.mxu0 %v3403
    %3853 = vmatprep.subr.bf16.mxu0 %v3411
    %3854 = vmatpush1.bf16.msra.mxu0 %v3410
    %3855 = vmatprep.subr.bf16.mxu0 %v3418
    %3856 = vmatpush1.bf16.msra.mxu0 %v3417
    %3857 = vmatprep.subr.bf16.mxu0 %v3425
    %3858 = vmatpush1.bf16.msra.mxu0 %v3424
    %3859 = vmatprep.subr.bf16.mxu0 %v3432
    %3860 = vmatpush1.bf16.msra.mxu0 %v3431
    %3861 = vmatprep.subr.bf16.mxu0 %v3439
    %3862 = vmatpush1.bf16.msra.mxu0 %v3438
    %3863 = vmatprep.subr.bf16.mxu0 %v3446
    %3864 = vmatpush1.bf16.msra.mxu0 %v3445
    %3865 = vmatprep.subr.bf16.mxu0 %v3453
    %3866 = vmatpush1.bf16.msra.mxu0 %v3452
    %3867 = vmatprep.subr.bf16.mxu0 %v3460
    %3868 = vmatpush1.bf16.msra.mxu0 %v3459
    %3869 = vmatprep.subr.bf16.mxu0 %v3467
    %3870 = vmatpush1.bf16.msra.mxu0 %v3466
    %3871 = vmatprep.subr.bf16.mxu0 %v3474
    %3872 = vmatpush1.bf16.msra.mxu0 %v3473
    %3873 = vmatprep.subr.bf16.mxu0 %v3481
    %3874 = vmatpush1.bf16.msra.mxu0 %v3480
    %3875 = vmatprep.subr.bf16.mxu0 %v3488
    %3876 = vmatpush1.bf16.msra.mxu0 %v3487
    %3877 = vmatprep.mubr.bf16.mxu0 %v2270
    %3878 = vmatmul.mubr.bf16.gmra.mrb[0].mxu0 %v2269
    %v3879 = vpop.f32.mrb[0].mxu0
    %v3880 = vadd.f32 %v3837, %v3879
    %v3881 = vpop.f32.mrb[0].mxu0
    %v3882 = vadd.f32 %v3839, %v3881
    %v3883 = vpop.f32.mrb[0].mxu0
    %v3884 = vadd.f32 %v3841, %v3883
    %v3885 = vpop.f32.mrb[0].mxu0
    %v3886 = vadd.f32 %v3843, %v3885
    %3887 = vdwg.mxu0
    %3888 = vmatprep.subr.bf16.mxu0 %v3273
    %3889 = vmatpush1.bf16.msra.mxu0 %v3272
    %3890 = vmatprep.subr.bf16.mxu0 %v3280
    %3891 = vmatpush1.bf16.msra.mxu0 %v3279
    %3892 = vmatprep.subr.bf16.mxu0 %v3287
    %3893 = vmatpush1.bf16.msra.mxu0 %v3286
    %3894 = vmatprep.subr.bf16.mxu0 %v3294
    %3895 = vmatpush1.bf16.msra.mxu0 %v3293
    %3896 = vmatprep.subr.bf16.mxu0 %v3301
    %3897 = vmatpush1.bf16.msra.mxu0 %v3300
    %3898 = vmatprep.subr.bf16.mxu0 %v3308
    %3899 = vmatpush1.bf16.msra.mxu0 %v3307
    %3900 = vmatprep.subr.bf16.mxu0 %v3315
    %3901 = vmatpush1.bf16.msra.mxu0 %v3314
    %3902 = vmatprep.subr.bf16.mxu0 %v3322
    %3903 = vmatpush1.bf16.msra.mxu0 %v3321
    %3904 = vmatprep.subr.bf16.mxu0 %v3329
    %3905 = vmatpush1.bf16.msra.mxu0 %v3328
    %3906 = vmatprep.subr.bf16.mxu0 %v3336
    %3907 = vmatpush1.bf16.msra.mxu0 %v3335
    %3908 = vmatprep.subr.bf16.mxu0 %v3343
    %3909 = vmatpush1.bf16.msra.mxu0 %v3342
    %3910 = vmatprep.subr.bf16.mxu0 %v3350
    %3911 = vmatpush1.bf16.msra.mxu0 %v3349
    %3912 = vmatprep.subr.bf16.mxu0 %v3357
    %3913 = vmatpush1.bf16.msra.mxu0 %v3356
    %3914 = vmatprep.subr.bf16.mxu0 %v3364
    %3915 = vmatpush1.bf16.msra.mxu0 %v3363
    %3916 = vmatprep.subr.bf16.mxu0 %v3371
    %3917 = vmatpush1.bf16.msra.mxu0 %v3370
    %3918 = vmatprep.subr.bf16.mxu0 %v3378
    %3919 = vmatpush1.bf16.msra.mxu0 %v3377
    %3920 = vmatprep.mubr.bf16.mxu0 %v2268
    %3921 = vmatmul.mubr.bf16.gmra.mrb[0].mxu0 %v2267
    %v3922 = vpop.f32.mrb[0].mxu0
    %v3923 = vadd.f32 %v2548, %v3922
    %v3924 = vpop.f32.mrb[0].mxu0
    %v3925 = vadd.f32 %v2552, %v3924
    %v3926 = vpop.f32.mrb[0].mxu0
    %v3927 = vadd.f32 %v2548, %v3926
    %v3928 = vpop.f32.mrb[0].mxu0
    %v3929 = vadd.f32 %v2552, %v3928
    %3930 = vdwg.mxu0
    %3931 = vmatprep.subr.bf16.mxu0 %v3385
    %3932 = vmatpush1.bf16.msra.mxu0 %v3384
    %3933 = vmatprep.subr.bf16.mxu0 %v3392
    %3934 = vmatpush1.bf16.msra.mxu0 %v3391
    %3935 = vmatprep.subr.bf16.mxu0 %v3399
    %3936 = vmatpush1.bf16.msra.mxu0 %v3398
    %3937 = vmatprep.subr.bf16.mxu0 %v3406
    %3938 = vmatpush1.bf16.msra.mxu0 %v3405
    %3939 = vmatprep.subr.bf16.mxu0 %v3413
    %3940 = vmatpush1.bf16.msra.mxu0 %v3412
    %3941 = vmatprep.subr.bf16.mxu0 %v3420
    %3942 = vmatpush1.bf16.msra.mxu0 %v3419
    %3943 = vmatprep.subr.bf16.mxu0 %v3427
    %3944 = vmatpush1.bf16.msra.mxu0 %v3426
    %3945 = vmatprep.subr.bf16.mxu0 %v3434
    %3946 = vmatpush1.bf16.msra.mxu0 %v3433
    %3947 = vmatprep.subr.bf16.mxu0 %v3441
    %3948 = vmatpush1.bf16.msra.mxu0 %v3440
    %3949 = vmatprep.subr.bf16.mxu0 %v3448
    %3950 = vmatpush1.bf16.msra.mxu0 %v3447
    %3951 = vmatprep.subr.bf16.mxu0 %v3455
    %3952 = vmatpush1.bf16.msra.mxu0 %v3454
    %3953 = vmatprep.subr.bf16.mxu0 %v3462
    %3954 = vmatpush1.bf16.msra.mxu0 %v3461
    %3955 = vmatprep.subr.bf16.mxu0 %v3469
    %3956 = vmatpush1.bf16.msra.mxu0 %v3468
    %3957 = vmatprep.subr.bf16.mxu0 %v3476
    %3958 = vmatpush1.bf16.msra.mxu0 %v3475
    %3959 = vmatprep.subr.bf16.mxu0 %v3483
    %3960 = vmatpush1.bf16.msra.mxu0 %v3482
    %3961 = vmatprep.subr.bf16.mxu0 %v3490
    %3962 = vmatpush1.bf16.msra.mxu0 %v3489
    %3963 = vmatprep.mubr.bf16.mxu0 %v2270
    %3964 = vmatmul.mubr.bf16.gmra.mrb[0].mxu0 %v2269
    %v3965 = vpop.f32.mrb[0].mxu0
    %v3966 = vadd.f32 %v3923, %v3965
    %v3967 = vpop.f32.mrb[0].mxu0
    %v3968 = vadd.f32 %v3925, %v3967
    %v3969 = vpop.f32.mrb[0].mxu0
    %v3970 = vadd.f32 %v3927, %v3969
    %v3971 = vpop.f32.mrb[0].mxu0
    %v3972 = vadd.f32 %v3929, %v3971
    %3973 = vdwg.mxu0
    %3974 = vmatprep.subr.bf16.mxu0 0
    %3975 = vmatpush1.bf16.msra.mxu0 %v3274
    %3976 = vmatprep.subr.bf16.mxu0 0
    %3977 = vmatpush1.bf16.msra.mxu0 %v3281
    %3978 = vmatprep.subr.bf16.mxu0 0
    %3979 = vmatpush1.bf16.msra.mxu0 %v3288
    %3980 = vmatprep.subr.bf16.mxu0 0
    %3981 = vmatpush1.bf16.msra.mxu0 %v3295
    %3982 = vmatprep.subr.bf16.mxu0 0
    %3983 = vmatpush1.bf16.msra.mxu0 %v3302
    %3984 = vmatprep.subr.bf16.mxu0 0
    %3985 = vmatpush1.bf16.msra.mxu0 %v3309
    %3986 = vmatprep.subr.bf16.mxu0 0
    %3987 = vmatpush1.bf16.msra.mxu0 %v3316
    %3988 = vmatprep.subr.bf16.mxu0 0
    %3989 = vmatpush1.bf16.msra.mxu0 %v3323
    %3990 = vmatprep.subr.bf16.mxu0 0
    %3991 = vmatpush1.bf16.msra.mxu0 %v3330
    %3992 = vmatprep.subr.bf16.mxu0 0
    %3993 = vmatpush1.bf16.msra.mxu0 %v3337
    %3994 = vmatprep.subr.bf16.mxu0 0
    %3995 = vmatpush1.bf16.msra.mxu0 %v3344
    %3996 = vmatprep.subr.bf16.mxu0 0
    %3997 = vmatpush1.bf16.msra.mxu0 %v3351
    %3998 = vmatprep.subr.bf16.mxu0 0
    %3999 = vmatpush1.bf16.msra.mxu0 %v3358
    %4000 = vmatprep.subr.bf16.mxu0 0
    %4001 = vmatpush1.bf16.msra.mxu0 %v3365
    %4002 = vmatprep.subr.bf16.mxu0 0
    %4003 = vmatpush1.bf16.msra.mxu0 %v3372
    %4004 = vmatprep.subr.bf16.mxu0 0
    %4005 = vmatpush1.bf16.msra.mxu0 %v3379
    %4006 = vmatprep.mubr.bf16.mxu0 %v2268
    %4007 = vmatmul.mubr.bf16.gmra.mrb[0].mxu0 %v2267
    %v4008 = vpop.f32.mrb[0].mxu0
    %v4009 = vadd.f32 %v2556, %v4008
    %v4010 = vpop.f32.mrb[0].mxu0
    %v4011 = vpop.f32.mrb[0].mxu0
    %v4012 = vadd.f32 %v2556, %v4011
    %v4013 = vpop.f32.mrb[0].mxu0
    %4014 = vdwg.mxu0
    %4015 = vmatprep.subr.bf16.mxu0 0
    %4016 = vmatpush1.bf16.msra.mxu0 %v3386
    %4017 = vmatprep.subr.bf16.mxu0 0
    %4018 = vmatpush1.bf16.msra.mxu0 %v3393
    %4019 = vmatprep.subr.bf16.mxu0 0
    %4020 = vmatpush1.bf16.msra.mxu0 %v3400
    %4021 = vmatprep.subr.bf16.mxu0 0
    %4022 = vmatpush1.bf16.msra.mxu0 %v3407
    %4023 = vmatprep.subr.bf16.mxu0 0
    %4024 = vmatpush1.bf16.msra.mxu0 %v3414
    %4025 = vmatprep.subr.bf16.mxu0 0
    %4026 = vmatpush1.bf16.msra.mxu0 %v3421
    %4027 = vmatprep.subr.bf16.mxu0 0
    %4028 = vmatpush1.bf16.msra.mxu0 %v3428
    %4029 = vmatprep.subr.bf16.mxu0 0
    %4030 = vmatpush1.bf16.msra.mxu0 %v3435
    %4031 = vmatprep.subr.bf16.mxu0 0
    %4032 = vmatpush1.bf16.msra.mxu0 %v3442
    %4033 = vmatprep.subr.bf16.mxu0 0
    %4034 = vmatpush1.bf16.msra.mxu0 %v3449
    %4035 = vmatprep.subr.bf16.mxu0 0
    %4036 = vmatpush1.bf16.msra.mxu0 %v3456
    %4037 = vmatprep.subr.bf16.mxu0 0
    %4038 = vmatpush1.bf16.msra.mxu0 %v3463
    %4039 = vmatprep.subr.bf16.mxu0 0
    %4040 = vmatpush1.bf16.msra.mxu0 %v3470
    %4041 = vmatprep.subr.bf16.mxu0 0
    %4042 = vmatpush1.bf16.msra.mxu0 %v3477
    %4043 = vmatprep.subr.bf16.mxu0 0
    %4044 = vmatpush1.bf16.msra.mxu0 %v3484
    %4045 = vmatprep.subr.bf16.mxu0 0
    %4046 = vmatpush1.bf16.msra.mxu0 %v3491
    %4047 = vmatprep.mubr.bf16.mxu0 %v2270
    %4048 = vmatmul.mubr.bf16.gmra.mrb[0].mxu0 %v2269
    %v4049 = vpop.f32.mrb[0].mxu0
    %v4050 = vadd.f32 %v4009, %v4049
    %v4051 = vpop.f32.mrb[0].mxu0
    %v4052 = vpop.f32.mrb[0].mxu0
    %v4053 = vadd.f32 %v4012, %v4052
    %v4054 = vpop.f32.mrb[0].mxu0
    %4055 = vdwg.mxu0
    %v4056 = vxor.u32 %v3794, 2147483648
    %v4057 = vxor.u32 %v3796, 2147483648
    %v4058 = vxor.u32 %v3880, 2147483648
    %v4059 = vxor.u32 %v3882, 2147483648
    %v4060 = vxor.u32 %v3966, 2147483648
    %v4061 = vxor.u32 %v3968, 2147483648
    %v4062 = vxor.u32 %v4050, 2147483648
    %v4063 = vxor.u32 %v3798, 2147483648
    %v4064 = vxor.u32 %v3800, 2147483648
    %v4065 = vxor.u32 %v3884, 2147483648
    %v4066 = vxor.u32 %v3886, 2147483648
    %v4067 = vxor.u32 %v3970, 2147483648
    %v4068 = vxor.u32 %v3972, 2147483648
    %v4069 = vxor.u32 %v4053, 2147483648
    %v4070 = vmul.f32 %v4056, 1.442695
    %v4071 = vpow.pop %v4070
    %v4072 = vmul.f32 %v4057, 1.442695
    %v4073 = vpow.pop %v4072
    %v4074 = vmul.f32 %v4058, 1.442695
    %v4075 = vpow.pop %v4074
    %v4076 = vmul.f32 %v4059, 1.442695
    %v4077 = vpow.pop %v4076
    %v4078 = vmul.f32 %v4060, 1.442695
    %v4079 = vpow.pop %v4078
    %v4080 = vmul.f32 %v4061, 1.442695
    %v4081 = vpow.pop %v4080
    %v4082 = vmul.f32 %v4062, 1.442695
    %v4083 = vpow.pop %v4082
    %v4084 = vmul.f32 %v4063, 1.442695
    %v4085 = vpow.pop %v4084
    %v4086 = vmul.f32 %v4064, 1.442695
    %v4087 = vpow.pop %v4086
    %v4088 = vmul.f32 %v4065, 1.442695
    %v4089 = vpow.pop %v4088
    %v4090 = vmul.f32 %v4066, 1.442695
    %v4091 = vpow.pop %v4090
    %v4092 = vmul.f32 %v4067, 1.442695
    %v4093 = vpow.pop %v4092
    %v4094 = vmul.f32 %v4068, 1.442695
    %v4095 = vpow.pop %v4094
    %v4096 = vmul.f32 %v4069, 1.442695
    %v4097 = vpow.pop %v4096
    %v4098 = vadd.f32 %v4071, 1.0
    %v4099 = vadd.f32 %v4073, 1.0
    %v4100 = vadd.f32 %v4075, 1.0
    %v4101 = vadd.f32 %v4077, 1.0
    %v4102 = vadd.f32 %v4079, 1.0
    %v4103 = vadd.f32 %v4081, 1.0
    %v4104 = vadd.f32 %v4083, 1.0
    %v4105 = vadd.f32 %v4085, 1.0
    %v4106 = vadd.f32 %v4087, 1.0
    %v4107 = vadd.f32 %v4089, 1.0
    %v4108 = vadd.f32 %v4091, 1.0
    %v4109 = vadd.f32 %v4093, 1.0
    %v4110 = vadd.f32 %v4095, 1.0
    %v4111 = vadd.f32 %v4097, 1.0
    %v4112 = vrcp.pop %v4098
    %v4113 = vmul.f32 1.0, %v4112
    %v4114 = vrcp.pop %v4099
    %v4115 = vmul.f32 1.0, %v4114
    %v4116 = vrcp.pop %v4100
    %v4117 = vmul.f32 1.0, %v4116
    %v4118 = vrcp.pop %v4101
    %v4119 = vmul.f32 1.0, %v4118
    %v4120 = vrcp.pop %v4102
    %v4121 = vmul.f32 1.0, %v4120
    %v4122 = vrcp.pop %v4103
    %v4123 = vmul.f32 1.0, %v4122
    %v4124 = vrcp.pop %v4104
    %v4125 = vmul.f32 1.0, %v4124
    %v4126 = vrcp.pop %v4105
    %v4127 = vmul.f32 1.0, %v4126
    %v4128 = vrcp.pop %v4106
    %v4129 = vmul.f32 1.0, %v4128
    %v4130 = vrcp.pop %v4107
    %v4131 = vmul.f32 1.0, %v4130
    %v4132 = vrcp.pop %v4108
    %v4133 = vmul.f32 1.0, %v4132
    %v4134 = vrcp.pop %v4109
    %v4135 = vmul.f32 1.0, %v4134
    %v4136 = vrcp.pop %v4110
    %v4137 = vmul.f32 1.0, %v4136
    %v4138 = vrcp.pop %v4111
    %v4139 = vmul.f32 1.0, %v4138
    %4140 = vst [vmem:[#allocation2] sm:$0xff] %v4113
    %4141 = vst [vmem:[#allocation2 + $0x8] sm:$0xff] %v4115
    %4142 = vst [vmem:[#allocation2 + $0x10] sm:$0xff] %v4117
    %4143 = vst [vmem:[#allocation2 + $0x18] sm:$0xff] %v4119
    %4144 = vst [vmem:[#allocation2 + $0x20] sm:$0xff] %v4121
    %4145 = vst [vmem:[#allocation2 + $0x28] sm:$0xff] %v4123
    %4146 = vst.msk [vmem:[#allocation2 + $0x30] sm:$0xff] %vm1253, %v4125
    %4147 = vst [vmem:[#allocation2 + $0x38] sm:$0xff] %v4127
    %4148 = vst [vmem:[#allocation2 + $0x40] sm:$0xff] %v4129
    %4149 = vst [vmem:[#allocation2 + $0x48] sm:$0xff] %v4131
    %4150 = vst [vmem:[#allocation2 + $0x50] sm:$0xff] %v4133
    %4151 = vst [vmem:[#allocation2 + $0x58] sm:$0xff] %v4135
    %4152 = vst [vmem:[#allocation2 + $0x60] sm:$0xff] %v4137
    %4153 = vst.msk [vmem:[#allocation2 + $0x68] sm:$0xff] %vm1253, %v4139
    // Predicated region
    $region38: #{tpu_custom_call.1} parent=1 // pred_check
      _
    $region39: #{tpu_custom_call.1} parent=1 // pred_check_branch
      %4155 = sbr.rel (0) target = $region41
    $region40: #{tpu_custom_call.1} parent=1 // pred_region
      %s4157 = ssub.s32 1792, 1792
      %4158 = vsyncadd [#allocation3], %s4157
      %s4159 = sshll.u32 [#allocation2], 4
      %s4160 = int_to_ptr.vmem [resolvable:$true] %s4159
      %4165 = dma.vmem_to_hbm [thread:$0]  %s4160, 1792, %s9, [#allocation3], 896, 896, 56
    $region41: #{tpu_custom_call.1} parent=1 // pred_fallthru
      _
    // Predicated region
    $region42: #{tpu_custom_call.1} parent=1 // pred_check
      _
    $region43: #{tpu_custom_call.1} parent=1 // pred_check_branch
      %4167 = sbr.rel (0) target = $region45
    $region44: #{tpu_custom_call.1} parent=1 // pred_region
      %4168 = dma.done [#allocation3], 1792
    $region45: #{tpu_custom_call.1} parent=1 // pred_fallthru
      _
    %4169 = vsyncpa [#allocation3], 1

</llo_original>
